<compile_context>
chip_gen: v5e
topology: v5e:2x2
jax: 0.10.0
libtpu: 0.0.40
codegen_flags: <defaults>
</compile_context>

<pallas_src>
import functools
import math
from dataclasses import dataclass

import numpy as np
import jax
import jax.numpy as jnp
from jax.experimental import pallas as pl
from jax.experimental.pallas import tpu as pltpu


# ----------------------------------------------------------------------------- config
@dataclass
class Swinv2Config:
    embed_dim: int = 32
    window_size: int = 4
    mlp_ratio: float = 2.0
    qkv_bias: bool = True
    hidden_act: str = "gelu"
    layer_norm_eps: float = 1e-5
    drop_path_rate: float = 0.0            # -> DropPath is identity
    hidden_dropout_prob: float = 0.0       # -> dropout is identity (eval semantics)
    attention_probs_dropout_prob: float = 0.0


# ----------------------------------------------------------------------------- in-kernel math
def _erf(x):
    # float32-accurate erf (Abramowitz & Stegun 7.1.26, max abs err ~1.5e-7);
    # built from exp only so it lowers cleanly in Mosaic.
    a1, a2, a3, a4, a5 = 0.254829592, -0.284496736, 1.421413741, -1.453152027, 1.061405429
    p = 0.3275911
    s = jnp.where(x >= 0.0, 1.0, -1.0)
    ax = jnp.abs(x)
    t = 1.0 / (1.0 + p * ax)
    poly = ((((a5 * t + a4) * t + a3) * t + a2) * t + a1) * t
    return s * (1.0 - poly * jnp.exp(-ax * ax))


def _gelu(x):
    # exact-erf GELU (matches torch.nn.functional.gelu up to the erf approx above)
    return 0.5 * x * (1.0 + _erf(x * (1.0 / math.sqrt(2.0))))


def _ln(x, g, b, eps):
    mu = jnp.mean(x, axis=-1, keepdims=True)
    xc = x - mu
    var = jnp.mean(xc * xc, axis=-1, keepdims=True)
    return xc * jax.lax.rsqrt(var + eps) * g + b


# ----------------------------------------------------------------------------- kernel A: fused window attention
def _fused_window_attn_kernel(x_ref, wqkv_ref, bqkv_ref, scale_ref, bias_ref,
                              *rest, num_heads, use_mask):
    if use_mask:
        mask_ref, wo_ref, bo_ref, o_ref = rest
    else:
        wo_ref, bo_ref, o_ref = rest

    Wc, N, C = x_ref.shape
    D = C // num_heads

    # fused QKV projection: (Wc*N, C) @ (C, 3C) + b
    x = x_ref[...].astype(jnp.float32).reshape(Wc * N, C)
    qkv = jnp.dot(x, wqkv_ref[...], preferred_element_type=jnp.float32) + bqkv_ref[...]
    qkv = qkv.reshape(Wc, N, 3 * C)

    if use_mask:
        mask = mask_ref[...].astype(jnp.float32)                        # (Wc, N, N)

    wo = wo_ref[...]                                                    # (C, C)
    acc = jnp.zeros((Wc * N, C), jnp.float32)

    # static unroll over heads; matmuls stay batched over the window chunk.
    for h in range(num_heads):
        qh = qkv[:, :, h * D:(h + 1) * D]                               # (Wc, N, D)
        kh = qkv[:, :, C + h * D:C + (h + 1) * D]
        vh = qkv[:, :, 2 * C + h * D:2 * C + (h + 1) * D]

        # F.normalize(x, dim=-1): x / max(||x||, 1e-12) == x * rsqrt(max(||x||^2, 1e-24))
        qn = qh * jax.lax.rsqrt(jnp.maximum(jnp.sum(qh * qh, -1, keepdims=True), 1e-24))
        kn = kh * jax.lax.rsqrt(jnp.maximum(jnp.sum(kh * kh, -1, keepdims=True), 1e-24))

        s = jnp.einsum('wqd,wkd->wqk', qn, kn,
                       preferred_element_type=jnp.float32)              # (Wc, N, N)
        s = s * scale_ref[h] + bias_ref[h]                              # per-head scale + CPB bias
        if use_mask:
            s = s + mask                                                # shift mask per window
        s = s - jnp.max(s, axis=-1, keepdims=True)
        p = jnp.exp(s)
        p = p * pl.reciprocal(jnp.sum(p, axis=-1, keepdims=True), approx=True)

        ctx_h = jnp.einsum('wqk,wkd->wqd', p, vh,
                           preferred_element_type=jnp.float32)          # (Wc, N, D)
        # head-merge + output projection fused: out = sum_h ctx_h @ Wo[hD:(h+1)D, :]
        acc = acc + jnp.dot(ctx_h.reshape(Wc * N, D), wo[h * D:(h + 1) * D, :],
                            preferred_element_type=jnp.float32)

    out = acc + bo_ref[...]
    o_ref[...] = out.astype(o_ref.dtype)


def _pick_window_chunk(nW, nW_img):
    """Largest chunk that divides nW_img (simple mask index_map) while still
    giving >=2 grid steps (v7x has 2 TensorCores per chip)."""
    best = 1
    for d in range(1, nW_img + 1):
        if nW_img % d == 0 and nW % d == 0 and nW // d >= 2:
            best = d
    return best


def fused_window_attention(windows, wqkv, bqkv, wo, bo, logit_scale, rel_bias,
                           attn_mask, num_heads, nW_img):
    """windows: (nW, N, C); returns attention output (Swinv2SelfOutput applied) as (nW*N, C)."""
    nW, N, C = windows.shape
    wchunk = _pick_window_chunk(nW, nW_img)
    grid = (nW // wchunk,)
    use_mask = attn_mask is not None
    chunks_per_img = nW_img // wchunk

    in_specs = [
        pl.BlockSpec((wchunk, N, C), lambda c: (c, 0, 0)),          # window tokens
        pl.BlockSpec((C, 3 * C), lambda c: (0, 0)),                 # fused [Wq|Wk|Wv]
        pl.BlockSpec((1, 3 * C), lambda c: (0, 0)),                 # fused bias (zeros for K)
        pl.BlockSpec(memory_space=pltpu.MemorySpace.SMEM),          # per-head logit scale
        pl.BlockSpec((num_heads, N, N), lambda c: (0, 0, 0)),       # relative position bias
    ]
    args = [windows, wqkv, bqkv.reshape(1, 3 * C), logit_scale, rel_bias]
    if use_mask:
        # mask stays (nW_img, N, N); no (nW, H, N, N) tile/broadcast is materialized.
        in_specs.append(pl.BlockSpec((wchunk, N, N),
                                     lambda c: (c % chunks_per_img, 0, 0)))
        args.append(attn_mask)
    in_specs += [pl.BlockSpec((C, C), lambda c: (0, 0)),            # output projection
                 pl.BlockSpec((1, C), lambda c: (0, 0))]
    args += [wo, bo.reshape(1, C)]

    out = pl.pallas_call(
        functools.partial(_fused_window_attn_kernel,
                          num_heads=num_heads, use_mask=use_mask),
        out_shape=jax.ShapeDtypeStruct((nW * N, C), jnp.float32),
        grid=grid,
        in_specs=in_specs,
        out_specs=pl.BlockSpec((wchunk * N, C), lambda c: (c, 0)),
        compiler_params=pltpu.CompilerParams(dimension_semantics=("parallel",)),
    )(*args)
    return out


# ----------------------------------------------------------------------------- kernel B: LN + residual + MLP + LN + residual
def _block_tail_kernel(attn_ref, sc_ref, g1_ref, b1_ref, wi_ref, bi_ref,
                       wo_ref, bo_ref, g2_ref, b2_ref, o_ref, *, eps):
    a = attn_ref[...].astype(jnp.float32)
    hs = _ln(a, g1_ref[...], b1_ref[...], eps) + sc_ref[...].astype(jnp.float32)
    inter = jnp.dot(hs, wi_ref[...], preferred_element_type=jnp.float32) + bi_ref[...]
    inter = _gelu(inter)
    mlp = jnp.dot(inter, wo_ref[...], preferred_element_type=jnp.float32) + bo_ref[...]
    mlp = _ln(mlp, g2_ref[...], b2_ref[...], eps)
    o_ref[...] = (hs + mlp).astype(o_ref.dtype)


def _row_blocks(M, max_tile=512):
    """Large row tiles (per-step overhead dominated regime), but >=2 grid steps
    when possible so both v7x TensorCores get work."""
    tile = min(max_tile, M)
    if tile == M and M >= 16:
        tile = -(-M // 2)
    tile = max(8, -(-tile // 8) * 8)
    Mp = -(-M // tile) * tile
    return tile, Mp


def fused_block_tail(attn2, shortcut2, p, eps):
    M, C = attn2.shape
    Cm = p["inter_w"].shape[1]
    tile, Mp = _row_blocks(M)
    if Mp != M:
        attn2 = jnp.pad(attn2, ((0, Mp - M), (0, 0)))
        shortcut2 = jnp.pad(shortcut2, ((0, Mp - M), (0, 0)))

    def row_spec(n):
        return pl.BlockSpec((tile, n), lambda i: (i, 0))

    def full2(a, b):
        return pl.BlockSpec((a, b), lambda i: (0, 0))

    out = pl.pallas_call(
        functools.partial(_block_tail_kernel, eps=eps),
        out_shape=jax.ShapeDtypeStruct((Mp, C), jnp.float32),
        grid=(Mp // tile,),
        in_specs=[row_spec(C), row_spec(C),
                  full2(1, C), full2(1, C),
                  full2(C, Cm), full2(1, Cm),
                  full2(Cm, C), full2(1, C),
                  full2(1, C), full2(1, C)],
        out_specs=row_spec(C),
        compiler_params=pltpu.CompilerParams(dimension_semantics=("parallel",)),
    )(attn2, shortcut2,
      p["ln_before_g"].reshape(1, C), p["ln_before_b"].reshape(1, C),
      p["inter_w"], p["inter_b"].reshape(1, Cm),
      p["out_w"], p["out_b"].reshape(1, C),
      p["ln_after_g"].reshape(1, C), p["ln_after_b"].reshape(1, C))
    return out[:M]


# ----------------------------------------------------------------------------- static precomputes
def compute_window_shift(input_resolution, target_ws, target_shift):
    ws = [r if r <= w else w for r, w in zip(input_resolution, (target_ws, target_ws))]
    ss = [0 if r <= w else s for r, w, s in zip(input_resolution, ws, (target_shift, target_shift))]
    return ws[0], ss[0]


def make_relative_tables(ws, pretrained_ws):
    rel = np.arange(-(ws - 1), ws, dtype=np.float32)
    table = np.stack(np.meshgrid(rel, rel, indexing="ij"), axis=-1)        # (2w-1, 2w-1, 2)
    if pretrained_ws > 0:
        table = table / (pretrained_ws - 1)
    elif ws > 1:
        table = table / (ws - 1)
    table = table * 8.0
    table = np.sign(table) * np.log2(np.abs(table) + 1.0) / np.log2(8.0)
    table = table.reshape(-1, 2).astype(np.float32)

    coords = np.stack(np.meshgrid(np.arange(ws), np.arange(ws), indexing="ij"))
    cf = coords.reshape(2, -1)
    rc = (cf[:, :, None] - cf[:, None, :]).transpose(1, 2, 0)
    rc[:, :, 0] += ws - 1
    rc[:, :, 1] += ws - 1
    rc[:, :, 0] *= 2 * ws - 1
    index = rc.sum(-1).astype(np.int32)                                    # (ws*ws, ws*ws)
    return jnp.asarray(table), index


def build_attn_mask(Hp, Wp, ws, shift):
    img_mask = np.zeros((1, Hp, Wp, 1), np.float32)
    slices = (slice(0, -ws), slice(-ws, -shift), slice(-shift, None))
    cnt = 0
    for hs in slices:
        for wsl in slices:
            img_mask[:, hs, wsl, :] = cnt
            cnt += 1
    mw = img_mask.reshape(1, Hp // ws, ws, Wp // ws, ws, 1)
    mw = mw.transpose(0, 1, 3, 2, 4, 5).reshape(-1, ws * ws)
    am = mw[:, None, :] - mw[:, :, None]
    am = np.where(am != 0, -100.0, 0.0).astype(np.float32)
    return jnp.asarray(am)                                                  # (nW_img, N, N)


# ----------------------------------------------------------------------------- layer forward
def swinv2_layer_reverse(x, input_dimensions, params, config, num_heads,
                         input_resolution, shift_size, pretrained_window_size=0):
    H, W = input_dimensions
    B, L, C = x.shape
    ws, shift = compute_window_shift(input_resolution, config.window_size, shift_size)
    N = ws * ws
    shortcut = x

    h = x.reshape(B, H, W, C)
    pad_r = (ws - W % ws) % ws
    pad_b = (ws - H % ws) % ws
    if pad_r or pad_b:
        h = jnp.pad(h, ((0, 0), (0, pad_b), (0, pad_r), (0, 0)))
    Hp, Wp = H + pad_b, W + pad_r
    if shift > 0:
        h = jnp.roll(h, shift=(-shift, -shift), axis=(1, 2))

    # window partition (plain XLA glue; tiny at these sizes)
    windows = (h.reshape(B, Hp // ws, ws, Wp // ws, ws, C)
                 .transpose(0, 1, 3, 2, 4, 5).reshape(-1, N, C))
    nW_img = (Hp // ws) * (Wp // ws)

    # --- data-independent precomputes (plain jnp; a K=2 matmul is a pathological MXU shape) ---
    rel_table, rel_index = make_relative_tables(ws, pretrained_window_size)
    t = jnp.maximum(rel_table @ params["cpb_w1"] + params["cpb_b1"], 0.0)
    t = t @ params["cpb_w2"]                                              # ((2w-1)^2, H)
    rel_bias = t[rel_index.reshape(-1)].reshape(N, N, num_heads).transpose(2, 0, 1)
    rel_bias = 16.0 * jax.nn.sigmoid(rel_bias)                            # (H, N, N)
    logit_scale = jnp.exp(jnp.minimum(params["logit_scale"], math.log(1.0 / 0.01)))  # (H,)
    attn_mask = build_attn_mask(Hp, Wp, ws, shift) if shift > 0 else None

    # fused QKV weights/bias (key has no bias in Swin-v2)
    wqkv = jnp.concatenate([params["query_w"], params["key_w"], params["value_w"]], axis=1)
    bqkv = jnp.concatenate([params["query_b"], jnp.zeros((C,), jnp.float32), params["value_b"]])

    attn = fused_window_attention(windows, wqkv, bqkv,
                                  params["attn_out_w"], params["attn_out_b"],
                                  logit_scale, rel_bias, attn_mask, num_heads, nW_img)

    # window reverse (plain XLA glue)
    aw = (attn.reshape(B, Hp // ws, Wp // ws, ws, ws, C)
              .transpose(0, 1, 3, 2, 4, 5).reshape(B, Hp, Wp, C))
    if shift > 0:
        aw = jnp.roll(aw, shift=(shift, shift), axis=(1, 2))
    if pad_r or pad_b:
        aw = aw[:, :H, :W, :]

    out = fused_block_tail(aw.reshape(B * H * W, C), shortcut.reshape(B * L, C),
                           params, config.layer_norm_eps)
    return out.reshape(B, L, C)


# ----------------------------------------------------------------------------- params
def init_layer_params(key, config, dim, num_heads):
    keys = iter(jax.random.split(key, 32))
    nk = lambda: next(keys)
    dense = lambda fi, fo: jax.random.normal(nk(), (fi, fo), jnp.float32) * 0.02
    vec = lambda n: jax.random.normal(nk(), (n,), jnp.float32) * 0.02
    mlp_dim = int(dim * config.mlp_ratio)
    return dict(
        query_w=dense(dim, dim),
        query_b=vec(dim) if config.qkv_bias else jnp.zeros((dim,), jnp.float32),
        key_w=dense(dim, dim),                                  # key has no bias
        value_w=dense(dim, dim),
        value_b=vec(dim) if config.qkv_bias else jnp.zeros((dim,), jnp.float32),
        logit_scale=jnp.full((num_heads,), math.log(10.0), jnp.float32),
        cpb_w1=dense(2, 512), cpb_b1=vec(512),
        cpb_w2=dense(512, num_heads),
        attn_out_w=dense(dim, dim), attn_out_b=vec(dim),
        ln_before_g=jnp.ones((dim,), jnp.float32),
        ln_before_b=jnp.zeros((dim,), jnp.float32),
        inter_w=dense(dim, mlp_dim), inter_b=vec(mlp_dim),
        out_w=dense(mlp_dim, dim), out_b=vec(dim),
        ln_after_g=jnp.ones((dim,), jnp.float32),
        ln_after_b=jnp.zeros((dim,), jnp.float32),
    )


# ----------------------------------------------------------------------------- main
if __name__ == "__main__":
    config = Swinv2Config()
    H = W = 8
    B = 2
    C = config.embed_dim
    num_heads = 2

    key = jax.random.PRNGKey(0)
    pkey, xkey = jax.random.split(key)
    params = init_layer_params(pkey, config, C, num_heads)
    x = jax.random.normal(xkey, (B, H * W, C), jnp.float32)

    def fwd(params, x):
        # exercise the layer as in a Swin stage: regular window, then shifted window
        y = swinv2_layer_reverse(x, (H, W), params, config, num_heads,
                                 input_resolution=(H, W), shift_size=0)
        y = swinv2_layer_reverse(y, (H, W), params, config, num_heads,
                                 input_resolution=(H, W),
                                 shift_size=config.window_size // 2)
        return y

    out = jax.jit(fwd)(params, x)
    jax.block_until_ready(out)
    assert out.shape == (B, H * W, C), out.shape
    assert bool(jnp.all(jnp.isfinite(out)))
    print("KERNEL_OK")
</pallas_src>

<mosaic_0001>
module attributes {stable_mosaic.version = 11 : i64} {
  func.func @_fused_window_attn_kernel(%arg0: i32, %arg1: memref<4x16x32xf32, #tpu.memory_space<vmem>>, %arg2: memref<32x96xf32, #tpu.memory_space<vmem>>, %arg3: memref<1x96xf32, #tpu.memory_space<vmem>>, %arg4: memref<2xf32, #tpu.memory_space<smem>>, %arg5: memref<2x16x16xf32, #tpu.memory_space<vmem>>, %arg6: memref<32x32xf32, #tpu.memory_space<vmem>>, %arg7: memref<1x32xf32, #tpu.memory_space<vmem>>, %arg8: memref<64x32xf32, #tpu.memory_space<vmem>>) attributes {dimension_semantics = [#tpu.dimension_semantics<parallel>], iteration_bounds = array<i64: 2>, scalar_prefetch = 0 : i64, scratch_operands = 0 : i64, tpu.core_type = #tpu.core_type<tc>, window_params = [{transform_indices = @transform_0, window_bounds = array<i64: 4, 16, 32>}, {pipeline_mode = #tpu.pipeline_mode<synchronous>, transform_indices = @transform_1, window_bounds = array<i64: 32, 96>}, {pipeline_mode = #tpu.pipeline_mode<synchronous>, transform_indices = @transform_2, window_bounds = array<i64: 1, 96>}, {transform_indices = @transform_3, window_bounds = array<i64: 2>}, {pipeline_mode = #tpu.pipeline_mode<synchronous>, transform_indices = @transform_4, window_bounds = array<i64: 2, 16, 16>}, {pipeline_mode = #tpu.pipeline_mode<synchronous>, transform_indices = @transform_5, window_bounds = array<i64: 32, 32>}, {pipeline_mode = #tpu.pipeline_mode<synchronous>, transform_indices = @transform_6, window_bounds = array<i64: 1, 32>}, {transform_indices = @transform_7, window_bounds = array<i64: 64, 32>}]} {
    %c0 = arith.constant 0 : index
    %c0_0 = arith.constant 0 : index
    %c0_1 = arith.constant 0 : index
    %0 = vector.load %arg1[%c0, %c0_0, %c0_1] : memref<4x16x32xf32, #tpu.memory_space<vmem>>, vector<4x16x32xf32>
    %1 = vector.shape_cast %0 : vector<4x16x32xf32> to vector<64x32xf32>
    %c0_2 = arith.constant 0 : index
    %c0_3 = arith.constant 0 : index
    %2 = vector.load %arg2[%c0_2, %c0_3] : memref<32x96xf32, #tpu.memory_space<vmem>>, vector<32x96xf32>
    %cst = arith.constant dense<0.000000e+00> : vector<64x96xf32>
    %3 = tpu.matmul %1, %2, %cst {dimension_numbers = #tpu.dot_dimension_numbers<[1], [0], [0], [1], [0, 0, 1, 1], [], []>} : vector<64x32xf32>, vector<32x96xf32>, vector<64x96xf32> -> vector<64x96xf32>
    %c0_4 = arith.constant 0 : index
    %c0_5 = arith.constant 0 : index
    %4 = vector.load %arg3[%c0_4, %c0_5] : memref<1x96xf32, #tpu.memory_space<vmem>>, vector<1x96xf32>
    %5 = vector.broadcast %4 : vector<1x96xf32> to vector<64x96xf32>
    %6 = arith.addf %3, %5 : vector<64x96xf32>
    %7 = vector.shape_cast %6 : vector<64x96xf32> to vector<4x16x96xf32>
    %c0_6 = arith.constant 0 : index
    %c0_7 = arith.constant 0 : index
    %8 = vector.load %arg6[%c0_6, %c0_7] : memref<32x32xf32, #tpu.memory_space<vmem>>, vector<32x32xf32>
    %cst_8 = arith.constant 0.000000e+00 : f32
    %9 = vector.broadcast %cst_8 : f32 to vector<64x32xf32>
    %10 = vector.extract_strided_slice %7 {offsets = [0, 0, 0], sizes = [4, 16, 16], strides = [1, 1, 1]} : vector<4x16x96xf32> to vector<4x16x16xf32>
    %11 = vector.extract_strided_slice %7 {offsets = [0, 0, 32], sizes = [4, 16, 16], strides = [1, 1, 1]} : vector<4x16x96xf32> to vector<4x16x16xf32>
    %12 = vector.extract_strided_slice %7 {offsets = [0, 0, 64], sizes = [4, 16, 16], strides = [1, 1, 1]} : vector<4x16x96xf32> to vector<4x16x16xf32>
    %13 = arith.mulf %10, %10 : vector<4x16x16xf32>
    %cst_9 = arith.constant dense<0.000000e+00> : vector<4x16xf32>
    %14 = vector.multi_reduction <add>, %13, %cst_9 [2] : vector<4x16x16xf32> to vector<4x16xf32>
    %15 = vector.shape_cast %14 : vector<4x16xf32> to vector<4x16x1xf32>
    %cst_10 = arith.constant 1.000000e-24 : f32
    %16 = vector.broadcast %cst_10 : f32 to vector<4x16x1xf32>
    %17 = arith.maximumf %15, %16 : vector<4x16x1xf32>
    %18 = math.rsqrt %17 : vector<4x16x1xf32>
    %19 = vector.broadcast %18 : vector<4x16x1xf32> to vector<4x16x16xf32>
    %20 = arith.mulf %10, %19 : vector<4x16x16xf32>
    %21 = arith.mulf %11, %11 : vector<4x16x16xf32>
    %cst_11 = arith.constant dense<0.000000e+00> : vector<4x16xf32>
    %22 = vector.multi_reduction <add>, %21, %cst_11 [2] : vector<4x16x16xf32> to vector<4x16xf32>
    %23 = vector.shape_cast %22 : vector<4x16xf32> to vector<4x16x1xf32>
    %cst_12 = arith.constant 1.000000e-24 : f32
    %24 = vector.broadcast %cst_12 : f32 to vector<4x16x1xf32>
    %25 = arith.maximumf %23, %24 : vector<4x16x1xf32>
    %26 = math.rsqrt %25 : vector<4x16x1xf32>
    %27 = vector.broadcast %26 : vector<4x16x1xf32> to vector<4x16x16xf32>
    %28 = arith.mulf %11, %27 : vector<4x16x16xf32>
    "tpu.trace_start"() <{level = 10 : i32, message = "wqd,wkd->wqk"}> : () -> ()
    %cst_13 = arith.constant dense<0.000000e+00> : vector<4x16x16xf32>
    %29 = tpu.matmul %20, %28, %cst_13 {dimension_numbers = #tpu.dot_dimension_numbers<[2], [2], [1], [1], [0, 0, 0, 1, 1, 1], [0], [0]>} : vector<4x16x16xf32>, vector<4x16x16xf32>, vector<4x16x16xf32> -> vector<4x16x16xf32>
    "tpu.trace_stop"() : () -> ()
    %c0_14 = arith.constant 0 : index
    %30 = memref.load %arg4[%c0_14] : memref<2xf32, #tpu.memory_space<smem>>
    %31 = vector.broadcast %30 : f32 to vector<4x16x16xf32>
    %32 = arith.mulf %29, %31 : vector<4x16x16xf32>
    %c0_15 = arith.constant 0 : index
    %c0_16 = arith.constant 0 : index
    %c0_17 = arith.constant 0 : index
    %33 = vector.load %arg5[%c0_15, %c0_16, %c0_17] : memref<2x16x16xf32, #tpu.memory_space<vmem>>, vector<1x16x16xf32>
    %34 = vector.shape_cast %33 : vector<1x16x16xf32> to vector<16x16xf32>
    %35 = vector.shape_cast %34 : vector<16x16xf32> to vector<1x16x16xf32>
    %36 = vector.broadcast %35 : vector<1x16x16xf32> to vector<4x16x16xf32>
    %37 = arith.addf %32, %36 : vector<4x16x16xf32>
    %cst_18 = arith.constant dense<0xFF800000> : vector<4x16xf32>
    %38 = vector.multi_reduction <maximumf>, %37, %cst_18 [2] : vector<4x16x16xf32> to vector<4x16xf32>
    %39 = vector.shape_cast %38 : vector<4x16xf32> to vector<4x16x1xf32>
    %40 = vector.broadcast %39 : vector<4x16x1xf32> to vector<4x16x16xf32>
    %41 = arith.subf %37, %40 : vector<4x16x16xf32>
    %42 = math.exp %41 : vector<4x16x16xf32>
    %cst_19 = arith.constant dense<0.000000e+00> : vector<4x16xf32>
    %43 = vector.multi_reduction <add>, %42, %cst_19 [2] : vector<4x16x16xf32> to vector<4x16xf32>
    %44 = vector.shape_cast %43 : vector<4x16xf32> to vector<4x16x1xf32>
    %45 = tpu.reciprocal %44 {approx = true} : vector<4x16x1xf32> -> vector<4x16x1xf32>
    %46 = vector.broadcast %45 : vector<4x16x1xf32> to vector<4x16x16xf32>
    %47 = arith.mulf %42, %46 : vector<4x16x16xf32>
    "tpu.trace_start"() <{level = 10 : i32, message = "wqk,wkd->wqd"}> : () -> ()
    %cst_20 = arith.constant dense<0.000000e+00> : vector<4x16x16xf32>
    %48 = tpu.matmul %47, %12, %cst_20 {dimension_numbers = #tpu.dot_dimension_numbers<[2], [1], [1], [2], [0, 0, 0, 1, 1, 2], [0], [0]>} : vector<4x16x16xf32>, vector<4x16x16xf32>, vector<4x16x16xf32> -> vector<4x16x16xf32>
    "tpu.trace_stop"() : () -> ()
    %49 = vector.shape_cast %48 : vector<4x16x16xf32> to vector<64x16xf32>
    %50 = vector.extract_strided_slice %8 {offsets = [0, 0], sizes = [16, 32], strides = [1, 1]} : vector<32x32xf32> to vector<16x32xf32>
    %cst_21 = arith.constant dense<0.000000e+00> : vector<64x32xf32>
    %51 = tpu.matmul %49, %50, %cst_21 {dimension_numbers = #tpu.dot_dimension_numbers<[1], [0], [0], [1], [0, 0, 1, 1], [], []>} : vector<64x16xf32>, vector<16x32xf32>, vector<64x32xf32> -> vector<64x32xf32>
    %52 = arith.addf %9, %51 : vector<64x32xf32>
    %53 = vector.extract_strided_slice %7 {offsets = [0, 0, 16], sizes = [4, 16, 16], strides = [1, 1, 1]} : vector<4x16x96xf32> to vector<4x16x16xf32>
    %54 = vector.extract_strided_slice %7 {offsets = [0, 0, 48], sizes = [4, 16, 16], strides = [1, 1, 1]} : vector<4x16x96xf32> to vector<4x16x16xf32>
    %55 = vector.extract_strided_slice %7 {offsets = [0, 0, 80], sizes = [4, 16, 16], strides = [1, 1, 1]} : vector<4x16x96xf32> to vector<4x16x16xf32>
    %56 = arith.mulf %53, %53 : vector<4x16x16xf32>
    %cst_22 = arith.constant dense<0.000000e+00> : vector<4x16xf32>
    %57 = vector.multi_reduction <add>, %56, %cst_22 [2] : vector<4x16x16xf32> to vector<4x16xf32>
    %58 = vector.shape_cast %57 : vector<4x16xf32> to vector<4x16x1xf32>
    %cst_23 = arith.constant 1.000000e-24 : f32
    %59 = vector.broadcast %cst_23 : f32 to vector<4x16x1xf32>
    %60 = arith.maximumf %58, %59 : vector<4x16x1xf32>
    %61 = math.rsqrt %60 : vector<4x16x1xf32>
    %62 = vector.broadcast %61 : vector<4x16x1xf32> to vector<4x16x16xf32>
    %63 = arith.mulf %53, %62 : vector<4x16x16xf32>
    %64 = arith.mulf %54, %54 : vector<4x16x16xf32>
    %cst_24 = arith.constant dense<0.000000e+00> : vector<4x16xf32>
    %65 = vector.multi_reduction <add>, %64, %cst_24 [2] : vector<4x16x16xf32> to vector<4x16xf32>
    %66 = vector.shape_cast %65 : vector<4x16xf32> to vector<4x16x1xf32>
    %cst_25 = arith.constant 1.000000e-24 : f32
    %67 = vector.broadcast %cst_25 : f32 to vector<4x16x1xf32>
    %68 = arith.maximumf %66, %67 : vector<4x16x1xf32>
    %69 = math.rsqrt %68 : vector<4x16x1xf32>
    %70 = vector.broadcast %69 : vector<4x16x1xf32> to vector<4x16x16xf32>
    %71 = arith.mulf %54, %70 : vector<4x16x16xf32>
    "tpu.trace_start"() <{level = 10 : i32, message = "wqd,wkd->wqk"}> : () -> ()
    %cst_26 = arith.constant dense<0.000000e+00> : vector<4x16x16xf32>
    %72 = tpu.matmul %63, %71, %cst_26 {dimension_numbers = #tpu.dot_dimension_numbers<[2], [2], [1], [1], [0, 0, 0, 1, 1, 1], [0], [0]>} : vector<4x16x16xf32>, vector<4x16x16xf32>, vector<4x16x16xf32> -> vector<4x16x16xf32>
    "tpu.trace_stop"() : () -> ()
    %c1 = arith.constant 1 : index
    %73 = memref.load %arg4[%c1] : memref<2xf32, #tpu.memory_space<smem>>
    %74 = vector.broadcast %73 : f32 to vector<4x16x16xf32>
    %75 = arith.mulf %72, %74 : vector<4x16x16xf32>
    %c1_27 = arith.constant 1 : index
    %c0_28 = arith.constant 0 : index
    %c0_29 = arith.constant 0 : index
    %76 = vector.load %arg5[%c1_27, %c0_28, %c0_29] : memref<2x16x16xf32, #tpu.memory_space<vmem>>, vector<1x16x16xf32>
    %77 = vector.shape_cast %76 : vector<1x16x16xf32> to vector<16x16xf32>
    %78 = vector.shape_cast %77 : vector<16x16xf32> to vector<1x16x16xf32>
    %79 = vector.broadcast %78 : vector<1x16x16xf32> to vector<4x16x16xf32>
    %80 = arith.addf %75, %79 : vector<4x16x16xf32>
    %cst_30 = arith.constant dense<0xFF800000> : vector<4x16xf32>
    %81 = vector.multi_reduction <maximumf>, %80, %cst_30 [2] : vector<4x16x16xf32> to vector<4x16xf32>
    %82 = vector.shape_cast %81 : vector<4x16xf32> to vector<4x16x1xf32>
    %83 = vector.broadcast %82 : vector<4x16x1xf32> to vector<4x16x16xf32>
    %84 = arith.subf %80, %83 : vector<4x16x16xf32>
    %85 = math.exp %84 : vector<4x16x16xf32>
    %cst_31 = arith.constant dense<0.000000e+00> : vector<4x16xf32>
    %86 = vector.multi_reduction <add>, %85, %cst_31 [2] : vector<4x16x16xf32> to vector<4x16xf32>
    %87 = vector.shape_cast %86 : vector<4x16xf32> to vector<4x16x1xf32>
    %88 = tpu.reciprocal %87 {approx = true} : vector<4x16x1xf32> -> vector<4x16x1xf32>
    %89 = vector.broadcast %88 : vector<4x16x1xf32> to vector<4x16x16xf32>
    %90 = arith.mulf %85, %89 : vector<4x16x16xf32>
    "tpu.trace_start"() <{level = 10 : i32, message = "wqk,wkd->wqd"}> : () -> ()
    %cst_32 = arith.constant dense<0.000000e+00> : vector<4x16x16xf32>
    %91 = tpu.matmul %90, %55, %cst_32 {dimension_numbers = #tpu.dot_dimension_numbers<[2], [1], [1], [2], [0, 0, 0, 1, 1, 2], [0], [0]>} : vector<4x16x16xf32>, vector<4x16x16xf32>, vector<4x16x16xf32> -> vector<4x16x16xf32>
    "tpu.trace_stop"() : () -> ()
    %92 = vector.shape_cast %91 : vector<4x16x16xf32> to vector<64x16xf32>
    %93 = vector.extract_strided_slice %8 {offsets = [16, 0], sizes = [16, 32], strides = [1, 1]} : vector<32x32xf32> to vector<16x32xf32>
    %cst_33 = arith.constant dense<0.000000e+00> : vector<64x32xf32>
    %94 = tpu.matmul %92, %93, %cst_33 {dimension_numbers = #tpu.dot_dimension_numbers<[1], [0], [0], [1], [0, 0, 1, 1], [], []>} : vector<64x16xf32>, vector<16x32xf32>, vector<64x32xf32> -> vector<64x32xf32>
    %95 = arith.addf %52, %94 : vector<64x32xf32>
    %c0_34 = arith.constant 0 : index
    %c0_35 = arith.constant 0 : index
    %96 = vector.load %arg7[%c0_34, %c0_35] : memref<1x32xf32, #tpu.memory_space<vmem>>, vector<1x32xf32>
    %97 = vector.broadcast %96 : vector<1x32xf32> to vector<64x32xf32>
    %98 = arith.addf %95, %97 : vector<64x32xf32>
    %c0_36 = arith.constant 0 : index
    %c0_37 = arith.constant 0 : index
    %99 = vector.load %arg8[%c0_36, %c0_37] : memref<64x32xf32, #tpu.memory_space<vmem>>, vector<64x32xf32>
    tpu.vector_store %arg8[%c0_36, %c0_37], %98 {strides = array<i32>} : memref<64x32xf32, #tpu.memory_space<vmem>>, vector<64x32xf32>,
    return
  }
  func.func @transform_0(%arg0: i32) -> (i32, i32, i32) {
    %c0_i32 = arith.constant 0 : i32
    %c0_i32_0 = arith.constant 0 : i32
    %c0_i32_1 = arith.constant 0 : i32
    return %arg0, %c0_i32, %c0_i32_0 : i32, i32, i32
  }
  func.func @transform_1(%arg0: i32) -> (i32, i32) {
    %c0_i32 = arith.constant 0 : i32
    %c0_i32_0 = arith.constant 0 : i32
    %c0_i32_1 = arith.constant 0 : i32
    return %c0_i32, %c0_i32_0 : i32, i32
  }
  func.func @transform_2(%arg0: i32) -> (i32, i32) {
    %c0_i32 = arith.constant 0 : i32
    %c0_i32_0 = arith.constant 0 : i32
    %c0_i32_1 = arith.constant 0 : i32
    return %c0_i32, %c0_i32_0 : i32, i32
  }
  func.func @transform_3(%arg0: i32) -> i32 {
    %c0_i32 = arith.constant 0 : i32
    %c0_i32_0 = arith.constant 0 : i32
    return %c0_i32 : i32
  }
  func.func @transform_4(%arg0: i32) -> (i32, i32, i32) {
    %c0_i32 = arith.constant 0 : i32
    %c0_i32_0 = arith.constant 0 : i32
    %c0_i32_1 = arith.constant 0 : i32
    %c0_i32_2 = arith.constant 0 : i32
    return %c0_i32, %c0_i32_0, %c0_i32_1 : i32, i32, i32
  }
  func.func @transform_5(%arg0: i32) -> (i32, i32) {
    %c0_i32 = arith.constant 0 : i32
    %c0_i32_0 = arith.constant 0 : i32
    %c0_i32_1 = arith.constant 0 : i32
    return %c0_i32, %c0_i32_0 : i32, i32
  }
  func.func @transform_6(%arg0: i32) -> (i32, i32) {
    %c0_i32 = arith.constant 0 : i32
    %c0_i32_0 = arith.constant 0 : i32
    %c0_i32_1 = arith.constant 0 : i32
    return %c0_i32, %c0_i32_0 : i32, i32
  }
  func.func @transform_7(%arg0: i32) -> (i32, i32) {
    %c0_i32 = arith.constant 0 : i32
    %c0_i32_0 = arith.constant 0 : i32
    return %arg0, %c0_i32 : i32, i32
  }
}

module attributes {stable_mosaic.version = 11 : i64} {
  func.func @_block_tail_kernel(%arg0: i32, %arg1: memref<64x32xf32, #tpu.memory_space<vmem>>, %arg2: memref<64x32xf32, #tpu.memory_space<vmem>>, %arg3: memref<1x32xf32, #tpu.memory_space<vmem>>, %arg4: memref<1x32xf32, #tpu.memory_space<vmem>>, %arg5: memref<32x64xf32, #tpu.memory_space<vmem>>, %arg6: memref<1x64xf32, #tpu.memory_space<vmem>>, %arg7: memref<64x32xf32, #tpu.memory_space<vmem>>, %arg8: memref<1x32xf32, #tpu.memory_space<vmem>>, %arg9: memref<1x32xf32, #tpu.memory_space<vmem>>, %arg10: memref<1x32xf32, #tpu.memory_space<vmem>>, %arg11: memref<64x32xf32, #tpu.memory_space<vmem>>) attributes {dimension_semantics = [#tpu.dimension_semantics<parallel>], iteration_bounds = array<i64: 2>, scalar_prefetch = 0 : i64, scratch_operands = 0 : i64, tpu.core_type = #tpu.core_type<tc>, window_params = [{transform_indices = @transform_0, window_bounds = array<i64: 64, 32>}, {transform_indices = @transform_1, window_bounds = array<i64: 64, 32>}, {pipeline_mode = #tpu.pipeline_mode<synchronous>, transform_indices = @transform_2, window_bounds = array<i64: 1, 32>}, {pipeline_mode = #tpu.pipeline_mode<synchronous>, transform_indices = @transform_3, window_bounds = array<i64: 1, 32>}, {pipeline_mode = #tpu.pipeline_mode<synchronous>, transform_indices = @transform_4, window_bounds = array<i64: 32, 64>}, {pipeline_mode = #tpu.pipeline_mode<synchronous>, transform_indices = @transform_5, window_bounds = array<i64: 1, 64>}, {pipeline_mode = #tpu.pipeline_mode<synchronous>, transform_indices = @transform_6, window_bounds = array<i64: 64, 32>}, {pipeline_mode = #tpu.pipeline_mode<synchronous>, transform_indices = @transform_7, window_bounds = array<i64: 1, 32>}, {pipeline_mode = #tpu.pipeline_mode<synchronous>, transform_indices = @transform_8, window_bounds = array<i64: 1, 32>}, {pipeline_mode = #tpu.pipeline_mode<synchronous>, transform_indices = @transform_9, window_bounds = array<i64: 1, 32>}, {transform_indices = @transform_10, window_bounds = array<i64: 64, 32>}]} {
    %c0 = arith.constant 0 : index
    %c0_0 = arith.constant 0 : index
    %0 = vector.load %arg1[%c0, %c0_0] : memref<64x32xf32, #tpu.memory_space<vmem>>, vector<64x32xf32>
    %c0_1 = arith.constant 0 : index
    %c0_2 = arith.constant 0 : index
    %1 = vector.load %arg3[%c0_1, %c0_2] : memref<1x32xf32, #tpu.memory_space<vmem>>, vector<1x32xf32>
    %c0_3 = arith.constant 0 : index
    %c0_4 = arith.constant 0 : index
    %2 = vector.load %arg4[%c0_3, %c0_4] : memref<1x32xf32, #tpu.memory_space<vmem>>, vector<1x32xf32>
    %cst = arith.constant dense<0.000000e+00> : vector<64xf32>
    %3 = vector.multi_reduction <add>, %0, %cst [1] : vector<64x32xf32> to vector<64xf32>
    %4 = vector.shape_cast %3 : vector<64xf32> to vector<64x1xf32>
    %cst_5 = arith.constant 3.200000e+01 : f32
    %5 = vector.broadcast %cst_5 : f32 to vector<64x1xf32>
    %6 = arith.divf %4, %5 : vector<64x1xf32>
    %7 = vector.broadcast %6 : vector<64x1xf32> to vector<64x32xf32>
    %8 = arith.subf %0, %7 : vector<64x32xf32>
    %9 = arith.mulf %8, %8 : vector<64x32xf32>
    %cst_6 = arith.constant dense<0.000000e+00> : vector<64xf32>
    %10 = vector.multi_reduction <add>, %9, %cst_6 [1] : vector<64x32xf32> to vector<64xf32>
    %11 = vector.shape_cast %10 : vector<64xf32> to vector<64x1xf32>
    %cst_7 = arith.constant 3.200000e+01 : f32
    %12 = vector.broadcast %cst_7 : f32 to vector<64x1xf32>
    %13 = arith.divf %11, %12 : vector<64x1xf32>
    %cst_8 = arith.constant 9.99999974E-6 : f32
    %14 = vector.broadcast %cst_8 : f32 to vector<64x1xf32>
    %15 = arith.addf %13, %14 : vector<64x1xf32>
    %16 = math.rsqrt %15 : vector<64x1xf32>
    %17 = vector.broadcast %16 : vector<64x1xf32> to vector<64x32xf32>
    %18 = arith.mulf %8, %17 : vector<64x32xf32>
    %19 = vector.broadcast %1 : vector<1x32xf32> to vector<64x32xf32>
    %20 = arith.mulf %18, %19 : vector<64x32xf32>
    %21 = vector.broadcast %2 : vector<1x32xf32> to vector<64x32xf32>
    %22 = arith.addf %20, %21 : vector<64x32xf32>
    %c0_9 = arith.constant 0 : index
    %c0_10 = arith.constant 0 : index
    %23 = vector.load %arg2[%c0_9, %c0_10] : memref<64x32xf32, #tpu.memory_space<vmem>>, vector<64x32xf32>
    %24 = arith.addf %22, %23 : vector<64x32xf32>
    %c0_11 = arith.constant 0 : index
    %c0_12 = arith.constant 0 : index
    %25 = vector.load %arg5[%c0_11, %c0_12] : memref<32x64xf32, #tpu.memory_space<vmem>>, vector<32x64xf32>
    %cst_13 = arith.constant dense<0.000000e+00> : vector<64x64xf32>
    %26 = tpu.matmul %24, %25, %cst_13 {dimension_numbers = #tpu.dot_dimension_numbers<[1], [0], [0], [1], [0, 0, 1, 1], [], []>} : vector<64x32xf32>, vector<32x64xf32>, vector<64x64xf32> -> vector<64x64xf32>
    %c0_14 = arith.constant 0 : index
    %c0_15 = arith.constant 0 : index
    %27 = vector.load %arg6[%c0_14, %c0_15] : memref<1x64xf32, #tpu.memory_space<vmem>>, vector<1x64xf32>
    %28 = vector.broadcast %27 : vector<1x64xf32> to vector<64x64xf32>
    %29 = arith.addf %26, %28 : vector<64x64xf32>
    %cst_16 = arith.constant 5.000000e-01 : f32
    %30 = vector.broadcast %cst_16 : f32 to vector<64x64xf32>
    %31 = arith.mulf %30, %29 : vector<64x64xf32>
    %cst_17 = arith.constant 0.707106769 : f32
    %32 = vector.broadcast %cst_17 : f32 to vector<64x64xf32>
    %33 = arith.mulf %29, %32 : vector<64x64xf32>
    %cst_18 = arith.constant 0.000000e+00 : f32
    %34 = vector.broadcast %cst_18 : f32 to vector<64x64xf32>
    %35 = arith.cmpf oge, %33, %34 : vector<64x64xf32>
    %cst_19 = arith.constant 1.000000e+00 : f32
    %cst_20 = arith.constant -1.000000e+00 : f32
    %36 = vector.broadcast %cst_19 : f32 to vector<64x64xf32>
    %37 = vector.broadcast %cst_20 : f32 to vector<64x64xf32>
    %38 = arith.select %35, %36, %37 : vector<64x64xi1>, vector<64x64xf32>
    %39 = math.absf %33 : vector<64x64xf32>
    %cst_21 = arith.constant 0.327591091 : f32
    %40 = vector.broadcast %cst_21 : f32 to vector<64x64xf32>
    %41 = arith.mulf %40, %39 : vector<64x64xf32>
    %cst_22 = arith.constant 1.000000e+00 : f32
    %42 = vector.broadcast %cst_22 : f32 to vector<64x64xf32>
    %43 = arith.addf %42, %41 : vector<64x64xf32>
    %cst_23 = arith.constant 1.000000e+00 : f32
    %44 = vector.broadcast %cst_23 : f32 to vector<64x64xf32>
    %45 = arith.divf %44, %43 : vector<64x64xf32>
    %cst_24 = arith.constant 1.06140542 : f32
    %46 = vector.broadcast %cst_24 : f32 to vector<64x64xf32>
    %47 = arith.mulf %46, %45 : vector<64x64xf32>
    %cst_25 = arith.constant -1.45315206 : f32
    %48 = vector.broadcast %cst_25 : f32 to vector<64x64xf32>
    %49 = arith.addf %47, %48 : vector<64x64xf32>
    %50 = arith.mulf %49, %45 : vector<64x64xf32>
    %cst_26 = arith.constant 1.42141378 : f32
    %51 = vector.broadcast %cst_26 : f32 to vector<64x64xf32>
    %52 = arith.addf %50, %51 : vector<64x64xf32>
    %53 = arith.mulf %52, %45 : vector<64x64xf32>
    %cst_27 = arith.constant -0.284496725 : f32
    %54 = vector.broadcast %cst_27 : f32 to vector<64x64xf32>
    %55 = arith.addf %53, %54 : vector<64x64xf32>
    %56 = arith.mulf %55, %45 : vector<64x64xf32>
    %cst_28 = arith.constant 0.254829586 : f32
    %57 = vector.broadcast %cst_28 : f32 to vector<64x64xf32>
    %58 = arith.addf %56, %57 : vector<64x64xf32>
    %59 = arith.mulf %58, %45 : vector<64x64xf32>
    %cst_29 = arith.constant 0.000000e+00 : f32
    %60 = vector.broadcast %cst_29 : f32 to vector<64x64xf32>
    %61 = arith.subf %60, %39 : vector<64x64xf32>
    %62 = arith.mulf %61, %39 : vector<64x64xf32>
    %63 = math.exp %62 : vector<64x64xf32>
    %64 = arith.mulf %59, %63 : vector<64x64xf32>
    %cst_30 = arith.constant 1.000000e+00 : f32
    %65 = vector.broadcast %cst_30 : f32 to vector<64x64xf32>
    %66 = arith.subf %65, %64 : vector<64x64xf32>
    %67 = arith.mulf %38, %66 : vector<64x64xf32>
    %cst_31 = arith.constant 1.000000e+00 : f32
    %68 = vector.broadcast %cst_31 : f32 to vector<64x64xf32>
    %69 = arith.addf %68, %67 : vector<64x64xf32>
    %70 = arith.mulf %31, %69 : vector<64x64xf32>
    %c0_32 = arith.constant 0 : index
    %c0_33 = arith.constant 0 : index
    %71 = vector.load %arg7[%c0_32, %c0_33] : memref<64x32xf32, #tpu.memory_space<vmem>>, vector<64x32xf32>
    %cst_34 = arith.constant dense<0.000000e+00> : vector<64x32xf32>
    %72 = tpu.matmul %70, %71, %cst_34 {dimension_numbers = #tpu.dot_dimension_numbers<[1], [0], [0], [1], [0, 0, 1, 1], [], []>} : vector<64x64xf32>, vector<64x32xf32>, vector<64x32xf32> -> vector<64x32xf32>
    %c0_35 = arith.constant 0 : index
    %c0_36 = arith.constant 0 : index
    %73 = vector.load %arg8[%c0_35, %c0_36] : memref<1x32xf32, #tpu.memory_space<vmem>>, vector<1x32xf32>
    %74 = vector.broadcast %73 : vector<1x32xf32> to vector<64x32xf32>
    %75 = arith.addf %72, %74 : vector<64x32xf32>
    %c0_37 = arith.constant 0 : index
    %c0_38 = arith.constant 0 : index
    %76 = vector.load %arg9[%c0_37, %c0_38] : memref<1x32xf32, #tpu.memory_space<vmem>>, vector<1x32xf32>
    %c0_39 = arith.constant 0 : index
    %c0_40 = arith.constant 0 : index
    %77 = vector.load %arg10[%c0_39, %c0_40] : memref<1x32xf32, #tpu.memory_space<vmem>>, vector<1x32xf32>
    %cst_41 = arith.constant dense<0.000000e+00> : vector<64xf32>
    %78 = vector.multi_reduction <add>, %75, %cst_41 [1] : vector<64x32xf32> to vector<64xf32>
    %79 = vector.shape_cast %78 : vector<64xf32> to vector<64x1xf32>
    %cst_42 = arith.constant 3.200000e+01 : f32
    %80 = vector.broadcast %cst_42 : f32 to vector<64x1xf32>
    %81 = arith.divf %79, %80 : vector<64x1xf32>
    %82 = vector.broadcast %81 : vector<64x1xf32> to vector<64x32xf32>
    %83 = arith.subf %75, %82 : vector<64x32xf32>
    %84 = arith.mulf %83, %83 : vector<64x32xf32>
    %cst_43 = arith.constant dense<0.000000e+00> : vector<64xf32>
    %85 = vector.multi_reduction <add>, %84, %cst_43 [1] : vector<64x32xf32> to vector<64xf32>
    %86 = vector.shape_cast %85 : vector<64xf32> to vector<64x1xf32>
    %cst_44 = arith.constant 3.200000e+01 : f32
    %87 = vector.broadcast %cst_44 : f32 to vector<64x1xf32>
    %88 = arith.divf %86, %87 : vector<64x1xf32>
    %cst_45 = arith.constant 9.99999974E-6 : f32
    %89 = vector.broadcast %cst_45 : f32 to vector<64x1xf32>
    %90 = arith.addf %88, %89 : vector<64x1xf32>
    %91 = math.rsqrt %90 : vector<64x1xf32>
    %92 = vector.broadcast %91 : vector<64x1xf32> to vector<64x32xf32>
    %93 = arith.mulf %83, %92 : vector<64x32xf32>
    %94 = vector.broadcast %76 : vector<1x32xf32> to vector<64x32xf32>
    %95 = arith.mulf %93, %94 : vector<64x32xf32>
    %96 = vector.broadcast %77 : vector<1x32xf32> to vector<64x32xf32>
    %97 = arith.addf %95, %96 : vector<64x32xf32>
    %98 = arith.addf %24, %97 : vector<64x32xf32>
    %c0_46 = arith.constant 0 : index
    %c0_47 = arith.constant 0 : index
    %99 = vector.load %arg11[%c0_46, %c0_47] : memref<64x32xf32, #tpu.memory_space<vmem>>, vector<64x32xf32>
    tpu.vector_store %arg11[%c0_46, %c0_47], %98 {strides = array<i32>} : memref<64x32xf32, #tpu.memory_space<vmem>>, vector<64x32xf32>,
    return
  }
  func.func @transform_0(%arg0: i32) -> (i32, i32) {
    %c0_i32 = arith.constant 0 : i32
    %c0_i32_0 = arith.constant 0 : i32
    return %arg0, %c0_i32 : i32, i32
  }
  func.func @transform_1(%arg0: i32) -> (i32, i32) {
    %c0_i32 = arith.constant 0 : i32
    %c0_i32_0 = arith.constant 0 : i32
    return %arg0, %c0_i32 : i32, i32
  }
  func.func @transform_2(%arg0: i32) -> (i32, i32) {
    %c0_i32 = arith.constant 0 : i32
    %c0_i32_0 = arith.constant 0 : i32
    %c0_i32_1 = arith.constant 0 : i32
    return %c0_i32, %c0_i32_0 : i32, i32
  }
  func.func @transform_3(%arg0: i32) -> (i32, i32) {
    %c0_i32 = arith.constant 0 : i32
    %c0_i32_0 = arith.constant 0 : i32
    %c0_i32_1 = arith.constant 0 : i32
    return %c0_i32, %c0_i32_0 : i32, i32
  }
  func.func @transform_4(%arg0: i32) -> (i32, i32) {
    %c0_i32 = arith.constant 0 : i32
    %c0_i32_0 = arith.constant 0 : i32
    %c0_i32_1 = arith.constant 0 : i32
    return %c0_i32, %c0_i32_0 : i32, i32
  }
  func.func @transform_5(%arg0: i32) -> (i32, i32) {
    %c0_i32 = arith.constant 0 : i32
    %c0_i32_0 = arith.constant 0 : i32
    %c0_i32_1 = arith.constant 0 : i32
    return %c0_i32, %c0_i32_0 : i32, i32
  }
  func.func @transform_6(%arg0: i32) -> (i32, i32) {
    %c0_i32 = arith.constant 0 : i32
    %c0_i32_0 = arith.constant 0 : i32
    %c0_i32_1 = arith.constant 0 : i32
    return %c0_i32, %c0_i32_0 : i32, i32
  }
  func.func @transform_7(%arg0: i32) -> (i32, i32) {
    %c0_i32 = arith.constant 0 : i32
    %c0_i32_0 = arith.constant 0 : i32
    %c0_i32_1 = arith.constant 0 : i32
    return %c0_i32, %c0_i32_0 : i32, i32
  }
  func.func @transform_8(%arg0: i32) -> (i32, i32) {
    %c0_i32 = arith.constant 0 : i32
    %c0_i32_0 = arith.constant 0 : i32
    %c0_i32_1 = arith.constant 0 : i32
    return %c0_i32, %c0_i32_0 : i32, i32
  }
  func.func @transform_9(%arg0: i32) -> (i32, i32) {
    %c0_i32 = arith.constant 0 : i32
    %c0_i32_0 = arith.constant 0 : i32
    %c0_i32_1 = arith.constant 0 : i32
    return %c0_i32, %c0_i32_0 : i32, i32
  }
  func.func @transform_10(%arg0: i32) -> (i32, i32) {
    %c0_i32 = arith.constant 0 : i32
    %c0_i32_0 = arith.constant 0 : i32
    return %arg0, %c0_i32 : i32, i32
  }
}

module attributes {stable_mosaic.version = 11 : i64} {
  func.func @_fused_window_attn_kernel(%arg0: i32, %arg1: memref<4x16x32xf32, #tpu.memory_space<vmem>>, %arg2: memref<32x96xf32, #tpu.memory_space<vmem>>, %arg3: memref<1x96xf32, #tpu.memory_space<vmem>>, %arg4: memref<2xf32, #tpu.memory_space<smem>>, %arg5: memref<2x16x16xf32, #tpu.memory_space<vmem>>, %arg6: memref<4x16x16xf32, #tpu.memory_space<vmem>>, %arg7: memref<32x32xf32, #tpu.memory_space<vmem>>, %arg8: memref<1x32xf32, #tpu.memory_space<vmem>>, %arg9: memref<64x32xf32, #tpu.memory_space<vmem>>) attributes {dimension_semantics = [#tpu.dimension_semantics<parallel>], iteration_bounds = array<i64: 2>, scalar_prefetch = 0 : i64, scratch_operands = 0 : i64, tpu.core_type = #tpu.core_type<tc>, window_params = [{transform_indices = @transform_0, window_bounds = array<i64: 4, 16, 32>}, {pipeline_mode = #tpu.pipeline_mode<synchronous>, transform_indices = @transform_1, window_bounds = array<i64: 32, 96>}, {pipeline_mode = #tpu.pipeline_mode<synchronous>, transform_indices = @transform_2, window_bounds = array<i64: 1, 96>}, {transform_indices = @transform_3, window_bounds = array<i64: 2>}, {pipeline_mode = #tpu.pipeline_mode<synchronous>, transform_indices = @transform_4, window_bounds = array<i64: 2, 16, 16>}, {transform_indices = @transform_5, window_bounds = array<i64: 4, 16, 16>}, {pipeline_mode = #tpu.pipeline_mode<synchronous>, transform_indices = @transform_6, window_bounds = array<i64: 32, 32>}, {pipeline_mode = #tpu.pipeline_mode<synchronous>, transform_indices = @transform_7, window_bounds = array<i64: 1, 32>}, {transform_indices = @transform_8, window_bounds = array<i64: 64, 32>}]} {
    %c0 = arith.constant 0 : index
    %c0_0 = arith.constant 0 : index
    %c0_1 = arith.constant 0 : index
    %0 = vector.load %arg1[%c0, %c0_0, %c0_1] : memref<4x16x32xf32, #tpu.memory_space<vmem>>, vector<4x16x32xf32>
    %1 = vector.shape_cast %0 : vector<4x16x32xf32> to vector<64x32xf32>
    %c0_2 = arith.constant 0 : index
    %c0_3 = arith.constant 0 : index
    %2 = vector.load %arg2[%c0_2, %c0_3] : memref<32x96xf32, #tpu.memory_space<vmem>>, vector<32x96xf32>
    %cst = arith.constant dense<0.000000e+00> : vector<64x96xf32>
    %3 = tpu.matmul %1, %2, %cst {dimension_numbers = #tpu.dot_dimension_numbers<[1], [0], [0], [1], [0, 0, 1, 1], [], []>} : vector<64x32xf32>, vector<32x96xf32>, vector<64x96xf32> -> vector<64x96xf32>
    %c0_4 = arith.constant 0 : index
    %c0_5 = arith.constant 0 : index
    %4 = vector.load %arg3[%c0_4, %c0_5] : memref<1x96xf32, #tpu.memory_space<vmem>>, vector<1x96xf32>
    %5 = vector.broadcast %4 : vector<1x96xf32> to vector<64x96xf32>
    %6 = arith.addf %3, %5 : vector<64x96xf32>
    %7 = vector.shape_cast %6 : vector<64x96xf32> to vector<4x16x96xf32>
    %c0_6 = arith.constant 0 : index
    %c0_7 = arith.constant 0 : index
    %c0_8 = arith.constant 0 : index
    %8 = vector.load %arg6[%c0_6, %c0_7, %c0_8] : memref<4x16x16xf32, #tpu.memory_space<vmem>>, vector<4x16x16xf32>
    %c0_9 = arith.constant 0 : index
    %c0_10 = arith.constant 0 : index
    %9 = vector.load %arg7[%c0_9, %c0_10] : memref<32x32xf32, #tpu.memory_space<vmem>>, vector<32x32xf32>
    %cst_11 = arith.constant 0.000000e+00 : f32
    %10 = vector.broadcast %cst_11 : f32 to vector<64x32xf32>
    %11 = vector.extract_strided_slice %7 {offsets = [0, 0, 0], sizes = [4, 16, 16], strides = [1, 1, 1]} : vector<4x16x96xf32> to vector<4x16x16xf32>
    %12 = vector.extract_strided_slice %7 {offsets = [0, 0, 32], sizes = [4, 16, 16], strides = [1, 1, 1]} : vector<4x16x96xf32> to vector<4x16x16xf32>
    %13 = vector.extract_strided_slice %7 {offsets = [0, 0, 64], sizes = [4, 16, 16], strides = [1, 1, 1]} : vector<4x16x96xf32> to vector<4x16x16xf32>
    %14 = arith.mulf %11, %11 : vector<4x16x16xf32>
    %cst_12 = arith.constant dense<0.000000e+00> : vector<4x16xf32>
    %15 = vector.multi_reduction <add>, %14, %cst_12 [2] : vector<4x16x16xf32> to vector<4x16xf32>
    %16 = vector.shape_cast %15 : vector<4x16xf32> to vector<4x16x1xf32>
    %cst_13 = arith.constant 1.000000e-24 : f32
    %17 = vector.broadcast %cst_13 : f32 to vector<4x16x1xf32>
    %18 = arith.maximumf %16, %17 : vector<4x16x1xf32>
    %19 = math.rsqrt %18 : vector<4x16x1xf32>
    %20 = vector.broadcast %19 : vector<4x16x1xf32> to vector<4x16x16xf32>
    %21 = arith.mulf %11, %20 : vector<4x16x16xf32>
    %22 = arith.mulf %12, %12 : vector<4x16x16xf32>
    %cst_14 = arith.constant dense<0.000000e+00> : vector<4x16xf32>
    %23 = vector.multi_reduction <add>, %22, %cst_14 [2] : vector<4x16x16xf32> to vector<4x16xf32>
    %24 = vector.shape_cast %23 : vector<4x16xf32> to vector<4x16x1xf32>
    %cst_15 = arith.constant 1.000000e-24 : f32
    %25 = vector.broadcast %cst_15 : f32 to vector<4x16x1xf32>
    %26 = arith.maximumf %24, %25 : vector<4x16x1xf32>
    %27 = math.rsqrt %26 : vector<4x16x1xf32>
    %28 = vector.broadcast %27 : vector<4x16x1xf32> to vector<4x16x16xf32>
    %29 = arith.mulf %12, %28 : vector<4x16x16xf32>
    "tpu.trace_start"() <{level = 10 : i32, message = "wqd,wkd->wqk"}> : () -> ()
    %cst_16 = arith.constant dense<0.000000e+00> : vector<4x16x16xf32>
    %30 = tpu.matmul %21, %29, %cst_16 {dimension_numbers = #tpu.dot_dimension_numbers<[2], [2], [1], [1], [0, 0, 0, 1, 1, 1], [0], [0]>} : vector<4x16x16xf32>, vector<4x16x16xf32>, vector<4x16x16xf32> -> vector<4x16x16xf32>
    "tpu.trace_stop"() : () -> ()
    %c0_17 = arith.constant 0 : index
    %31 = memref.load %arg4[%c0_17] : memref<2xf32, #tpu.memory_space<smem>>
    %32 = vector.broadcast %31 : f32 to vector<4x16x16xf32>
    %33 = arith.mulf %30, %32 : vector<4x16x16xf32>
    %c0_18 = arith.constant 0 : index
    %c0_19 = arith.constant 0 : index
    %c0_20 = arith.constant 0 : index
    %34 = vector.load %arg5[%c0_18, %c0_19, %c0_20] : memref<2x16x16xf32, #tpu.memory_space<vmem>>, vector<1x16x16xf32>
    %35 = vector.shape_cast %34 : vector<1x16x16xf32> to vector<16x16xf32>
    %36 = vector.shape_cast %35 : vector<16x16xf32> to vector<1x16x16xf32>
    %37 = vector.broadcast %36 : vector<1x16x16xf32> to vector<4x16x16xf32>
    %38 = arith.addf %33, %37 : vector<4x16x16xf32>
    %39 = arith.addf %38, %8 : vector<4x16x16xf32>
    %cst_21 = arith.constant dense<0xFF800000> : vector<4x16xf32>
    %40 = vector.multi_reduction <maximumf>, %39, %cst_21 [2] : vector<4x16x16xf32> to vector<4x16xf32>
    %41 = vector.shape_cast %40 : vector<4x16xf32> to vector<4x16x1xf32>
    %42 = vector.broadcast %41 : vector<4x16x1xf32> to vector<4x16x16xf32>
    %43 = arith.subf %39, %42 : vector<4x16x16xf32>
    %44 = math.exp %43 : vector<4x16x16xf32>
    %cst_22 = arith.constant dense<0.000000e+00> : vector<4x16xf32>
    %45 = vector.multi_reduction <add>, %44, %cst_22 [2] : vector<4x16x16xf32> to vector<4x16xf32>
    %46 = vector.shape_cast %45 : vector<4x16xf32> to vector<4x16x1xf32>
    %47 = tpu.reciprocal %46 {approx = true} : vector<4x16x1xf32> -> vector<4x16x1xf32>
    %48 = vector.broadcast %47 : vector<4x16x1xf32> to vector<4x16x16xf32>
    %49 = arith.mulf %44, %48 : vector<4x16x16xf32>
    "tpu.trace_start"() <{level = 10 : i32, message = "wqk,wkd->wqd"}> : () -> ()
    %cst_23 = arith.constant dense<0.000000e+00> : vector<4x16x16xf32>
    %50 = tpu.matmul %49, %13, %cst_23 {dimension_numbers = #tpu.dot_dimension_numbers<[2], [1], [1], [2], [0, 0, 0, 1, 1, 2], [0], [0]>} : vector<4x16x16xf32>, vector<4x16x16xf32>, vector<4x16x16xf32> -> vector<4x16x16xf32>
    "tpu.trace_stop"() : () -> ()
    %51 = vector.shape_cast %50 : vector<4x16x16xf32> to vector<64x16xf32>
    %52 = vector.extract_strided_slice %9 {offsets = [0, 0], sizes = [16, 32], strides = [1, 1]} : vector<32x32xf32> to vector<16x32xf32>
    %cst_24 = arith.constant dense<0.000000e+00> : vector<64x32xf32>
    %53 = tpu.matmul %51, %52, %cst_24 {dimension_numbers = #tpu.dot_dimension_numbers<[1], [0], [0], [1], [0, 0, 1, 1], [], []>} : vector<64x16xf32>, vector<16x32xf32>, vector<64x32xf32> -> vector<64x32xf32>
    %54 = arith.addf %10, %53 : vector<64x32xf32>
    %55 = vector.extract_strided_slice %7 {offsets = [0, 0, 16], sizes = [4, 16, 16], strides = [1, 1, 1]} : vector<4x16x96xf32> to vector<4x16x16xf32>
    %56 = vector.extract_strided_slice %7 {offsets = [0, 0, 48], sizes = [4, 16, 16], strides = [1, 1, 1]} : vector<4x16x96xf32> to vector<4x16x16xf32>
    %57 = vector.extract_strided_slice %7 {offsets = [0, 0, 80], sizes = [4, 16, 16], strides = [1, 1, 1]} : vector<4x16x96xf32> to vector<4x16x16xf32>
    %58 = arith.mulf %55, %55 : vector<4x16x16xf32>
    %cst_25 = arith.constant dense<0.000000e+00> : vector<4x16xf32>
    %59 = vector.multi_reduction <add>, %58, %cst_25 [2] : vector<4x16x16xf32> to vector<4x16xf32>
    %60 = vector.shape_cast %59 : vector<4x16xf32> to vector<4x16x1xf32>
    %cst_26 = arith.constant 1.000000e-24 : f32
    %61 = vector.broadcast %cst_26 : f32 to vector<4x16x1xf32>
    %62 = arith.maximumf %60, %61 : vector<4x16x1xf32>
    %63 = math.rsqrt %62 : vector<4x16x1xf32>
    %64 = vector.broadcast %63 : vector<4x16x1xf32> to vector<4x16x16xf32>
    %65 = arith.mulf %55, %64 : vector<4x16x16xf32>
    %66 = arith.mulf %56, %56 : vector<4x16x16xf32>
    %cst_27 = arith.constant dense<0.000000e+00> : vector<4x16xf32>
    %67 = vector.multi_reduction <add>, %66, %cst_27 [2] : vector<4x16x16xf32> to vector<4x16xf32>
    %68 = vector.shape_cast %67 : vector<4x16xf32> to vector<4x16x1xf32>
    %cst_28 = arith.constant 1.000000e-24 : f32
    %69 = vector.broadcast %cst_28 : f32 to vector<4x16x1xf32>
    %70 = arith.maximumf %68, %69 : vector<4x16x1xf32>
    %71 = math.rsqrt %70 : vector<4x16x1xf32>
    %72 = vector.broadcast %71 : vector<4x16x1xf32> to vector<4x16x16xf32>
    %73 = arith.mulf %56, %72 : vector<4x16x16xf32>
    "tpu.trace_start"() <{level = 10 : i32, message = "wqd,wkd->wqk"}> : () -> ()
    %cst_29 = arith.constant dense<0.000000e+00> : vector<4x16x16xf32>
    %74 = tpu.matmul %65, %73, %cst_29 {dimension_numbers = #tpu.dot_dimension_numbers<[2], [2], [1], [1], [0, 0, 0, 1, 1, 1], [0], [0]>} : vector<4x16x16xf32>, vector<4x16x16xf32>, vector<4x16x16xf32> -> vector<4x16x16xf32>
    "tpu.trace_stop"() : () -> ()
    %c1 = arith.constant 1 : index
    %75 = memref.load %arg4[%c1] : memref<2xf32, #tpu.memory_space<smem>>
    %76 = vector.broadcast %75 : f32 to vector<4x16x16xf32>
    %77 = arith.mulf %74, %76 : vector<4x16x16xf32>
    %c1_30 = arith.constant 1 : index
    %c0_31 = arith.constant 0 : index
    %c0_32 = arith.constant 0 : index
    %78 = vector.load %arg5[%c1_30, %c0_31, %c0_32] : memref<2x16x16xf32, #tpu.memory_space<vmem>>, vector<1x16x16xf32>
    %79 = vector.shape_cast %78 : vector<1x16x16xf32> to vector<16x16xf32>
    %80 = vector.shape_cast %79 : vector<16x16xf32> to vector<1x16x16xf32>
    %81 = vector.broadcast %80 : vector<1x16x16xf32> to vector<4x16x16xf32>
    %82 = arith.addf %77, %81 : vector<4x16x16xf32>
    %83 = arith.addf %82, %8 : vector<4x16x16xf32>
    %cst_33 = arith.constant dense<0xFF800000> : vector<4x16xf32>
    %84 = vector.multi_reduction <maximumf>, %83, %cst_33 [2] : vector<4x16x16xf32> to vector<4x16xf32>
    %85 = vector.shape_cast %84 : vector<4x16xf32> to vector<4x16x1xf32>
    %86 = vector.broadcast %85 : vector<4x16x1xf32> to vector<4x16x16xf32>
    %87 = arith.subf %83, %86 : vector<4x16x16xf32>
    %88 = math.exp %87 : vector<4x16x16xf32>
    %cst_34 = arith.constant dense<0.000000e+00> : vector<4x16xf32>
    %89 = vector.multi_reduction <add>, %88, %cst_34 [2] : vector<4x16x16xf32> to vector<4x16xf32>
    %90 = vector.shape_cast %89 : vector<4x16xf32> to vector<4x16x1xf32>
    %91 = tpu.reciprocal %90 {approx = true} : vector<4x16x1xf32> -> vector<4x16x1xf32>
    %92 = vector.broadcast %91 : vector<4x16x1xf32> to vector<4x16x16xf32>
    %93 = arith.mulf %88, %92 : vector<4x16x16xf32>
    "tpu.trace_start"() <{level = 10 : i32, message = "wqk,wkd->wqd"}> : () -> ()
    %cst_35 = arith.constant dense<0.000000e+00> : vector<4x16x16xf32>
    %94 = tpu.matmul %93, %57, %cst_35 {dimension_numbers = #tpu.dot_dimension_numbers<[2], [1], [1], [2], [0, 0, 0, 1, 1, 2], [0], [0]>} : vector<4x16x16xf32>, vector<4x16x16xf32>, vector<4x16x16xf32> -> vector<4x16x16xf32>
    "tpu.trace_stop"() : () -> ()
    %95 = vector.shape_cast %94 : vector<4x16x16xf32> to vector<64x16xf32>
    %96 = vector.extract_strided_slice %9 {offsets = [16, 0], sizes = [16, 32], strides = [1, 1]} : vector<32x32xf32> to vector<16x32xf32>
    %cst_36 = arith.constant dense<0.000000e+00> : vector<64x32xf32>
    %97 = tpu.matmul %95, %96, %cst_36 {dimension_numbers = #tpu.dot_dimension_numbers<[1], [0], [0], [1], [0, 0, 1, 1], [], []>} : vector<64x16xf32>, vector<16x32xf32>, vector<64x32xf32> -> vector<64x32xf32>
    %98 = arith.addf %54, %97 : vector<64x32xf32>
    %c0_37 = arith.constant 0 : index
    %c0_38 = arith.constant 0 : index
    %99 = vector.load %arg8[%c0_37, %c0_38] : memref<1x32xf32, #tpu.memory_space<vmem>>, vector<1x32xf32>
    %100 = vector.broadcast %99 : vector<1x32xf32> to vector<64x32xf32>
    %101 = arith.addf %98, %100 : vector<64x32xf32>
    %c0_39 = arith.constant 0 : index
    %c0_40 = arith.constant 0 : index
    %102 = vector.load %arg9[%c0_39, %c0_40] : memref<64x32xf32, #tpu.memory_space<vmem>>, vector<64x32xf32>
    tpu.vector_store %arg9[%c0_39, %c0_40], %101 {strides = array<i32>} : memref<64x32xf32, #tpu.memory_space<vmem>>, vector<64x32xf32>,
    return
  }
  func.func @transform_0(%arg0: i32) -> (i32, i32, i32) {
    %c0_i32 = arith.constant 0 : i32
    %c0_i32_0 = arith.constant 0 : i32
    %c0_i32_1 = arith.constant 0 : i32
    return %arg0, %c0_i32, %c0_i32_0 : i32, i32, i32
  }
  func.func @transform_1(%arg0: i32) -> (i32, i32) {
    %c0_i32 = arith.constant 0 : i32
    %c0_i32_0 = arith.constant 0 : i32
    %c0_i32_1 = arith.constant 0 : i32
    return %c0_i32, %c0_i32_0 : i32, i32
  }
  func.func @transform_2(%arg0: i32) -> (i32, i32) {
    %c0_i32 = arith.constant 0 : i32
    %c0_i32_0 = arith.constant 0 : i32
    %c0_i32_1 = arith.constant 0 : i32
    return %c0_i32, %c0_i32_0 : i32, i32
  }
  func.func @transform_3(%arg0: i32) -> i32 {
    %c0_i32 = arith.constant 0 : i32
    %c0_i32_0 = arith.constant 0 : i32
    return %c0_i32 : i32
  }
  func.func @transform_4(%arg0: i32) -> (i32, i32, i32) {
    %c0_i32 = arith.constant 0 : i32
    %c0_i32_0 = arith.constant 0 : i32
    %c0_i32_1 = arith.constant 0 : i32
    %c0_i32_2 = arith.constant 0 : i32
    return %c0_i32, %c0_i32_0, %c0_i32_1 : i32, i32, i32
  }
  func.func @transform_5(%arg0: i32) -> (i32, i32, i32) {
    %c1_i32 = arith.constant 1 : i32
    %c0_i32 = arith.constant 0 : i32
    %0 = arith.cmpi eq, %c1_i32, %c0_i32 : i32
    %c1_i32_0 = arith.constant 1 : i32
    %1 = arith.select %0, %c1_i32_0, %c1_i32 : i32
    %2 = arith.remsi %arg0, %1 : i32
    %c0_i32_1 = arith.constant 0 : i32
    %3 = arith.cmpi ne, %2, %c0_i32_1 : i32
    %c0_i32_2 = arith.constant 0 : i32
    %4 = arith.cmpi slt, %2, %c0_i32_2 : i32
    %c0_i32_3 = arith.constant 0 : i32
    %5 = arith.cmpi slt, %1, %c0_i32_3 : i32
    %6 = arith.xori %4, %5 : i1
    %7 = arith.andi %6, %3 : i1
    %8 = arith.addi %2, %1 : i32
    %9 = arith.select %7, %8, %2 : i32
    %c0_i32_4 = arith.constant 0 : i32
    %c0_i32_5 = arith.constant 0 : i32
    %c0_i32_6 = arith.constant 0 : i32
    return %9, %c0_i32_4, %c0_i32_5 : i32, i32, i32
  }
  func.func @transform_6(%arg0: i32) -> (i32, i32) {
    %c0_i32 = arith.constant 0 : i32
    %c0_i32_0 = arith.constant 0 : i32
    %c0_i32_1 = arith.constant 0 : i32
    return %c0_i32, %c0_i32_0 : i32, i32
  }
  func.func @transform_7(%arg0: i32) -> (i32, i32) {
    %c0_i32 = arith.constant 0 : i32
    %c0_i32_0 = arith.constant 0 : i32
    %c0_i32_1 = arith.constant 0 : i32
    return %c0_i32, %c0_i32_0 : i32, i32
  }
  func.func @transform_8(%arg0: i32) -> (i32, i32) {
    %c0_i32 = arith.constant 0 : i32
    %c0_i32_0 = arith.constant 0 : i32
    return %arg0, %c0_i32 : i32, i32
  }
}

</mosaic_0001>

<llo_original>
// kernel: fwd.5
$region0: #{fwd.5}
  #allocation0 [shape = 'u32[]', space=smem, size = 0x4, offset = 0x4, fixed_abs, tag = 'smem constant byte address 0x4 - core index']
  #allocation1 [shape = 'u32[72,128]{1,0:T(1,128)}', space=vmem, size = 0x9000, scoped, tag = 'internal scratch']
  %s0 = inlined_call_operand.vmem [shape: f32[128,32], index: 0, kind: input, shape index: {}]
  %s1 = inlined_call_operand.vmem [shape: f32[128,32], index: 1, kind: input, shape index: {}]
  %s2 = inlined_call_operand.vmem [shape: f32[1,32], index: 2, kind: input, shape index: {}]
  %s3 = inlined_call_operand.vmem [shape: f32[1,32], index: 3, kind: input, shape index: {}]
  %s4 = inlined_call_operand.vmem [shape: f32[32,64], index: 4, kind: input, shape index: {}]
  %s5 = inlined_call_operand.vmem [shape: f32[1,64], index: 5, kind: input, shape index: {}]
  %s6 = inlined_call_operand.vmem [shape: f32[64,32], index: 6, kind: input, shape index: {}]
  %s7 = inlined_call_operand.vmem [shape: f32[1,32], index: 7, kind: input, shape index: {}]
  %s8 = inlined_call_operand.vmem [shape: f32[1,32], index: 8, kind: input, shape index: {}]
  %s9 = inlined_call_operand.vmem [shape: f32[1,32], index: 9, kind: input, shape index: {}]
  %s10 = inlined_call_operand.vmem [shape: f32[128,32], index: 10, kind: output, shape index: {}]
  %s11 = sld [smem:[#allocation0]]
  $region73: #{fwd.5} parent=0
    _
  %s13 = ssub.s32 1, %s11
  %s14 = scalar_select 0, %s13, %s11
  loop: start=0, step=1, limit=4
  $region2: #{fwd.5} parent=0 // loop_pre_header
    _
  $region3: #{fwd.5} parent=0 // loop_header
    %s16 = sphi 0, %s20
    %p17 = scmp.ge.s32.totalorder %s16, 4
    %s26 = sphi 0, %s28
    %s29 = sphi 0, %s26
    %s30 = sphi 0, %s29
    %s46 = sphi 0, %s30
    %s52 = sphi 0, %s54
    %s55 = sphi 0, %s52
    %s56 = sphi 0, %s55
    %s72 = sphi 0, %s56
    %s76 = sphi 0, %s76
    %s78 = sphi 0, %s76
    %s79 = sphi 0, %s78
    %s93 = sphi 0, %s79
    %s97 = sphi 0, %s97
    %s99 = sphi 0, %s97
    %s100 = sphi 0, %s99
    %s114 = sphi 0, %s100
    %s118 = sphi 0, %s118
    %s120 = sphi 0, %s118
    %s121 = sphi 0, %s120
    %s135 = sphi 0, %s121
    %s139 = sphi 0, %s139
    %s141 = sphi 0, %s139
    %s142 = sphi 0, %s141
    %s156 = sphi 0, %s142
    %s160 = sphi 0, %s160
    %s162 = sphi 0, %s160
    %s163 = sphi 0, %s162
    %s177 = sphi 0, %s163
    %s181 = sphi 0, %s181
    %s183 = sphi 0, %s181
    %s184 = sphi 0, %s183
    %s198 = sphi 0, %s184
    %s202 = sphi 0, %s202
    %s204 = sphi 0, %s202
    %s205 = sphi 0, %s204
    %s219 = sphi 0, %s205
    %s223 = sphi 0, %s223
    %s225 = sphi 0, %s223
    %s226 = sphi 0, %s225
    %s240 = sphi 0, %s226
    %s246 = sphi 0, %s248
    %s249 = sphi 0, %s246
    %s250 = sphi 0, %s249
    %s266 = sphi 0, %s250
  $region4: #{fwd.5} parent=0 // loop_header_branch
    %19 = sbr.rel (%p17) target = $region8
  $region5: #{fwd.5} parent=0 // loop_body
    %s21 = ssub.s32 %s16, 1
    %s22 = ssub.s32 %s16, 2
    %s23 = sadd.s32 %s16, 1
    %s24 = ssub.s32 %s16, %s23
    %p25 = scmp.eq.s32.totalorder %s24, 0
    %s27 = sadd.s32 %s26, 1
    %s28 = scalar_select %p25, %s26, %s27
    %p31 = pneg %p25
    %p32 = scmp.eq.s32.totalorder %s16, 1
    %p33 = por %p31, %p32
    %p34 = scmp.ne.s32.totalorder %s26, %s29
    %p35 = scmp.eq.s32.totalorder %s16, 0
    %p36 = por %p34, %p35
    %p37 = scmp.ne.s32.totalorder %s26, %s29
    %p38 = scmp.eq.s32.totalorder %s21, 1
    %p39 = por %p37, %p38
    %p40 = scmp.ne.s32.totalorder %s29, %s30
    %p41 = scmp.eq.s32.totalorder %s21, 0
    %p42 = por %p40, %p41
    %p43 = scmp.ne.s32.totalorder %s29, %s30
    %p44 = scmp.eq.s32.totalorder %s22, 1
    %p45 = por %p43, %p44
    %p47 = scmp.ne.s32.totalorder %s30, %s46
    %p48 = scmp.eq.s32.totalorder %s22, 0
    %p49 = por %p47, %p48
    %s50 = ssub.s32 %s16, %s23
    %p51 = scmp.eq.s32.totalorder %s50, 0
    %s53 = sadd.s32 %s52, 1
    %s54 = scalar_select %p51, %s52, %s53
    %p57 = pneg %p51
    %p58 = scmp.eq.s32.totalorder %s16, 1
    %p59 = por %p57, %p58
    %p60 = scmp.ne.s32.totalorder %s52, %s55
    %p61 = scmp.eq.s32.totalorder %s16, 0
    %p62 = por %p60, %p61
    %p63 = scmp.ne.s32.totalorder %s52, %s55
    %p64 = scmp.eq.s32.totalorder %s21, 1
    %p65 = por %p63, %p64
    %p66 = scmp.ne.s32.totalorder %s55, %s56
    %p67 = scmp.eq.s32.totalorder %s21, 0
    %p68 = por %p66, %p67
    %p69 = scmp.ne.s32.totalorder %s55, %s56
    %p70 = scmp.eq.s32.totalorder %s22, 1
    %p71 = por %p69, %p70
    %p73 = scmp.ne.s32.totalorder %s56, %s72
    %p74 = scmp.eq.s32.totalorder %s22, 0
    %p75 = por %p73, %p74
    %s77 = sadd.s32 %s76, 1
    %p80 = scmp.eq.s32.totalorder %s16, 1
    %p81 = scmp.ne.s32.totalorder %s76, %s78
    %p82 = scmp.eq.s32.totalorder %s16, 0
    %p83 = por %p81, %p82
    %p84 = scmp.ne.s32.totalorder %s76, %s78
    %p85 = scmp.eq.s32.totalorder %s21, 1
    %p86 = por %p84, %p85
    %p87 = scmp.ne.s32.totalorder %s78, %s79
    %p88 = scmp.eq.s32.totalorder %s21, 0
    %p89 = por %p87, %p88
    %p90 = scmp.ne.s32.totalorder %s78, %s79
    %p91 = scmp.eq.s32.totalorder %s22, 1
    %p92 = por %p90, %p91
    %p94 = scmp.ne.s32.totalorder %s79, %s93
    %p95 = scmp.eq.s32.totalorder %s22, 0
    %p96 = por %p94, %p95
    %s98 = sadd.s32 %s97, 1
    %p101 = scmp.eq.s32.totalorder %s16, 1
    %p102 = scmp.ne.s32.totalorder %s97, %s99
    %p103 = scmp.eq.s32.totalorder %s16, 0
    %p104 = por %p102, %p103
    %p105 = scmp.ne.s32.totalorder %s97, %s99
    %p106 = scmp.eq.s32.totalorder %s21, 1
    %p107 = por %p105, %p106
    %p108 = scmp.ne.s32.totalorder %s99, %s100
    %p109 = scmp.eq.s32.totalorder %s21, 0
    %p110 = por %p108, %p109
    %p111 = scmp.ne.s32.totalorder %s99, %s100
    %p112 = scmp.eq.s32.totalorder %s22, 1
    %p113 = por %p111, %p112
    %p115 = scmp.ne.s32.totalorder %s100, %s114
    %p116 = scmp.eq.s32.totalorder %s22, 0
    %p117 = por %p115, %p116
    %s119 = sadd.s32 %s118, 1
    %p122 = scmp.eq.s32.totalorder %s16, 1
    %p123 = scmp.ne.s32.totalorder %s118, %s120
    %p124 = scmp.eq.s32.totalorder %s16, 0
    %p125 = por %p123, %p124
    %p126 = scmp.ne.s32.totalorder %s118, %s120
    %p127 = scmp.eq.s32.totalorder %s21, 1
    %p128 = por %p126, %p127
    %p129 = scmp.ne.s32.totalorder %s120, %s121
    %p130 = scmp.eq.s32.totalorder %s21, 0
    %p131 = por %p129, %p130
    %p132 = scmp.ne.s32.totalorder %s120, %s121
    %p133 = scmp.eq.s32.totalorder %s22, 1
    %p134 = por %p132, %p133
    %p136 = scmp.ne.s32.totalorder %s121, %s135
    %p137 = scmp.eq.s32.totalorder %s22, 0
    %p138 = por %p136, %p137
    %s140 = sadd.s32 %s139, 1
    %p143 = scmp.eq.s32.totalorder %s16, 1
    %p144 = scmp.ne.s32.totalorder %s139, %s141
    %p145 = scmp.eq.s32.totalorder %s16, 0
    %p146 = por %p144, %p145
    %p147 = scmp.ne.s32.totalorder %s139, %s141
    %p148 = scmp.eq.s32.totalorder %s21, 1
    %p149 = por %p147, %p148
    %p150 = scmp.ne.s32.totalorder %s141, %s142
    %p151 = scmp.eq.s32.totalorder %s21, 0
    %p152 = por %p150, %p151
    %p153 = scmp.ne.s32.totalorder %s141, %s142
    %p154 = scmp.eq.s32.totalorder %s22, 1
    %p155 = por %p153, %p154
    %p157 = scmp.ne.s32.totalorder %s142, %s156
    %p158 = scmp.eq.s32.totalorder %s22, 0
    %p159 = por %p157, %p158
    %s161 = sadd.s32 %s160, 1
    %p164 = scmp.eq.s32.totalorder %s16, 1
    %p165 = scmp.ne.s32.totalorder %s160, %s162
    %p166 = scmp.eq.s32.totalorder %s16, 0
    %p167 = por %p165, %p166
    %p168 = scmp.ne.s32.totalorder %s160, %s162
    %p169 = scmp.eq.s32.totalorder %s21, 1
    %p170 = por %p168, %p169
    %p171 = scmp.ne.s32.totalorder %s162, %s163
    %p172 = scmp.eq.s32.totalorder %s21, 0
    %p173 = por %p171, %p172
    %p174 = scmp.ne.s32.totalorder %s162, %s163
    %p175 = scmp.eq.s32.totalorder %s22, 1
    %p176 = por %p174, %p175
    %p178 = scmp.ne.s32.totalorder %s163, %s177
    %p179 = scmp.eq.s32.totalorder %s22, 0
    %p180 = por %p178, %p179
    %s182 = sadd.s32 %s181, 1
    %p185 = scmp.eq.s32.totalorder %s16, 1
    %p186 = scmp.ne.s32.totalorder %s181, %s183
    %p187 = scmp.eq.s32.totalorder %s16, 0
    %p188 = por %p186, %p187
    %p189 = scmp.ne.s32.totalorder %s181, %s183
    %p190 = scmp.eq.s32.totalorder %s21, 1
    %p191 = por %p189, %p190
    %p192 = scmp.ne.s32.totalorder %s183, %s184
    %p193 = scmp.eq.s32.totalorder %s21, 0
    %p194 = por %p192, %p193
    %p195 = scmp.ne.s32.totalorder %s183, %s184
    %p196 = scmp.eq.s32.totalorder %s22, 1
    %p197 = por %p195, %p196
    %p199 = scmp.ne.s32.totalorder %s184, %s198
    %p200 = scmp.eq.s32.totalorder %s22, 0
    %p201 = por %p199, %p200
    %s203 = sadd.s32 %s202, 1
    %p206 = scmp.eq.s32.totalorder %s16, 1
    %p207 = scmp.ne.s32.totalorder %s202, %s204
    %p208 = scmp.eq.s32.totalorder %s16, 0
    %p209 = por %p207, %p208
    %p210 = scmp.ne.s32.totalorder %s202, %s204
    %p211 = scmp.eq.s32.totalorder %s21, 1
    %p212 = por %p210, %p211
    %p213 = scmp.ne.s32.totalorder %s204, %s205
    %p214 = scmp.eq.s32.totalorder %s21, 0
    %p215 = por %p213, %p214
    %p216 = scmp.ne.s32.totalorder %s204, %s205
    %p217 = scmp.eq.s32.totalorder %s22, 1
    %p218 = por %p216, %p217
    %p220 = scmp.ne.s32.totalorder %s205, %s219
    %p221 = scmp.eq.s32.totalorder %s22, 0
    %p222 = por %p220, %p221
    %s224 = sadd.s32 %s223, 1
    %p227 = scmp.eq.s32.totalorder %s16, 1
    %p228 = scmp.ne.s32.totalorder %s223, %s225
    %p229 = scmp.eq.s32.totalorder %s16, 0
    %p230 = por %p228, %p229
    %p231 = scmp.ne.s32.totalorder %s223, %s225
    %p232 = scmp.eq.s32.totalorder %s21, 1
    %p233 = por %p231, %p232
    %p234 = scmp.ne.s32.totalorder %s225, %s226
    %p235 = scmp.eq.s32.totalorder %s21, 0
    %p236 = por %p234, %p235
    %p237 = scmp.ne.s32.totalorder %s225, %s226
    %p238 = scmp.eq.s32.totalorder %s22, 1
    %p239 = por %p237, %p238
    %p241 = scmp.ne.s32.totalorder %s226, %s240
    %p242 = scmp.eq.s32.totalorder %s22, 0
    %p243 = por %p241, %p242
    %s244 = ssub.s32 %s16, %s23
    %p245 = scmp.eq.s32.totalorder %s244, 0
    %s247 = sadd.s32 %s246, 1
    %s248 = scalar_select %p245, %s246, %s247
    %p251 = pneg %p245
    %p252 = scmp.eq.s32.totalorder %s16, 1
    %p253 = por %p251, %p252
    %p254 = scmp.ne.s32.totalorder %s246, %s249
    %p255 = scmp.eq.s32.totalorder %s16, 0
    %p256 = por %p254, %p255
    %p257 = scmp.ne.s32.totalorder %s246, %s249
    %p258 = scmp.eq.s32.totalorder %s21, 1
    %p259 = por %p257, %p258
    %p260 = scmp.ne.s32.totalorder %s249, %s250
    %p261 = scmp.eq.s32.totalorder %s21, 0
    %p262 = por %p260, %p261
    %p263 = scmp.ne.s32.totalorder %s249, %s250
    %p264 = scmp.eq.s32.totalorder %s22, 1
    %p265 = por %p263, %p264
    %p267 = scmp.ne.s32.totalorder %s250, %s266
    %p268 = scmp.eq.s32.totalorder %s22, 0
    %p269 = por %p267, %p268
    %p270 = scmp.le.s32.totalorder 1, %s16
    %p271 = scmp.lt.s32.totalorder %s16, 3
    %p272 = pnand %p270, %p271
    %p273 = pneg %p272
    // Predicated region
    $region9: #{fwd.5} parent=5 // pred_check
      _
    $region10: #{fwd.5} parent=5 // pred_check_branch
      %275 = sbr.rel (%p272) target = $region12
    $region11: #{fwd.5} parent=5 // pred_region
      %s276 = ssub.s32 %s16, 1
      // Predicated region
      $region13: #{fwd.5} parent=11 // pred_check
        %p277 = pneg %p89
      $region14: #{fwd.5} parent=11 // pred_check_branch
        %279 = sbr.rel (%p277) target = $region16
      $region15: #{fwd.5} parent=11 // pred_region
        _
      $region16: #{fwd.5} parent=11 // pred_fallthru
        _
      // Predicated region
      $region17: #{fwd.5} parent=11 // pred_check
        %p280 = pneg %p110
      $region18: #{fwd.5} parent=11 // pred_check_branch
        %282 = sbr.rel (%p280) target = $region20
      $region19: #{fwd.5} parent=11 // pred_region
        _
      $region20: #{fwd.5} parent=11 // pred_fallthru
        _
      // Predicated region
      $region21: #{fwd.5} parent=11 // pred_check
        %p283 = pneg %p131
      $region22: #{fwd.5} parent=11 // pred_check_branch
        %285 = sbr.rel (%p283) target = $region24
      $region23: #{fwd.5} parent=11 // pred_region
        _
      $region24: #{fwd.5} parent=11 // pred_fallthru
        _
      // Predicated region
      $region25: #{fwd.5} parent=11 // pred_check
        %p286 = pneg %p152
      $region26: #{fwd.5} parent=11 // pred_check_branch
        %288 = sbr.rel (%p286) target = $region28
      $region27: #{fwd.5} parent=11 // pred_region
        _
      $region28: #{fwd.5} parent=11 // pred_fallthru
        _
      // Predicated region
      $region29: #{fwd.5} parent=11 // pred_check
        %p289 = pneg %p173
      $region30: #{fwd.5} parent=11 // pred_check_branch
        %291 = sbr.rel (%p289) target = $region32
      $region31: #{fwd.5} parent=11 // pred_region
        _
      $region32: #{fwd.5} parent=11 // pred_fallthru
        _
      // Predicated region
      $region33: #{fwd.5} parent=11 // pred_check
        %p292 = pneg %p194
      $region34: #{fwd.5} parent=11 // pred_check_branch
        %294 = sbr.rel (%p292) target = $region36
      $region35: #{fwd.5} parent=11 // pred_region
        _
      $region36: #{fwd.5} parent=11 // pred_fallthru
        _
      // Predicated region
      $region37: #{fwd.5} parent=11 // pred_check
        %p295 = pneg %p215
      $region38: #{fwd.5} parent=11 // pred_check_branch
        %297 = sbr.rel (%p295) target = $region40
      $region39: #{fwd.5} parent=11 // pred_region
        _
      $region40: #{fwd.5} parent=11 // pred_fallthru
        _
      // Predicated region
      $region41: #{fwd.5} parent=11 // pred_check
        %p298 = pneg %p236
      $region42: #{fwd.5} parent=11 // pred_check_branch
        %300 = sbr.rel (%p298) target = $region44
      $region43: #{fwd.5} parent=11 // pred_region
        _
      $region44: #{fwd.5} parent=11 // pred_fallthru
        _
    $region12: #{fwd.5} parent=5 // pred_fallthru
      _
    %p301 = scmp.lt.s32.totalorder %s16, 2
    // Predicated region
    $region45: #{fwd.5} parent=5 // pred_check
      %p302 = pneg %p301
    $region46: #{fwd.5} parent=5 // pred_check_branch
      %304 = sbr.rel (%p302) target = $region48
    $region47: #{fwd.5} parent=5 // pred_region
      // Predicated region
      $region49: #{fwd.5} parent=47 // pred_check
        %p305 = pneg %p36
      $region50: #{fwd.5} parent=47 // pred_check_branch
        %307 = sbr.rel (%p305) target = $region52
      $region51: #{fwd.5} parent=47 // pred_region
        %s308 = smul.u32 8, %s16
        %p309 = scmp.lt.s32.totalorder %s308, 15
        %s310 = scalar_select %p309, %s308, 15
        %s311 = smul.addr %s310, 8
        %s312 = scalar_lea.vmem %s0, %s311
        %s313 = smul.u32 8, %s16
      $region52: #{fwd.5} parent=47 // pred_fallthru
        _
      // Predicated region
      $region53: #{fwd.5} parent=47 // pred_check
        %p314 = pneg %p62
      $region54: #{fwd.5} parent=47 // pred_check_branch
        %316 = sbr.rel (%p314) target = $region56
      $region55: #{fwd.5} parent=47 // pred_region
        %s317 = smul.u32 8, %s16
        %p318 = scmp.lt.s32.totalorder %s317, 15
        %s319 = scalar_select %p318, %s317, 15
        %s320 = smul.addr %s319, 8
        %s321 = scalar_lea.vmem %s1, %s320
        %s322 = smul.u32 8, %s16
      $region56: #{fwd.5} parent=47 // pred_fallthru
        _
    $region48: #{fwd.5} parent=5 // pred_fallthru
      _
    %p323 = scmp.le.s32.totalorder 1, %s16
    %p324 = scmp.lt.s32.totalorder %s16, 3
    %p325 = pnand %p323, %p324
    %p326 = pneg %p325
    // Predicated region
    $region57: #{fwd.5} parent=5 // pred_check
      _
    $region58: #{fwd.5} parent=5 // pred_check_branch
      %328 = sbr.rel (%p325) target = $region60
    $region59: #{fwd.5} parent=5 // pred_region
      %s329 = ssub.s32 %s16, 1
      %s330 = smul.u32 8, %s21
      %p331 = scmp.lt.s32.totalorder %s330, 15
      %s332 = scalar_select %p331, %s330, 15
      %s333 = smul.addr %s332, 8
      %s334 = scalar_lea.vmem %s0, %s333
      %p335 = pneg %p42
      %p336 = pneg %p39
      %s337 = smul.u32 8, %s21
      %p338 = scmp.lt.s32.totalorder %s337, 15
      %s339 = scalar_select %p338, %s337, 15
      %s340 = smul.addr %s339, 8
      %s341 = scalar_lea.vmem %s1, %s340
      %p342 = pneg %p68
      %p343 = pneg %p65
      %p344 = pneg %p89
      %p345 = pneg %p86
      %p346 = pneg %p110
      %p347 = pneg %p107
      %p348 = pneg %p131
      %p349 = pneg %p128
      %p350 = pneg %p152
      %p351 = pneg %p149
      %p352 = pneg %p173
      %p353 = pneg %p170
      %p354 = pneg %p194
      %p355 = pneg %p191
      %p356 = pneg %p215
      %p357 = pneg %p212
      %p358 = pneg %p236
      %p359 = pneg %p233
      %p360 = pneg %p262
      %p361 = pneg %p259
      %s362 = smul.u32 8, %s21
      %p363 = scmp.lt.s32.totalorder %s362, 15
      %s364 = scalar_select %p363, %s362, 15
      %s365 = smul.addr %s364, 8
      %s366 = scalar_lea.vmem %s10, %s365
      %s367 = smul.u32 8, %s21
      %p368 = scmp.lt.s32.totalorder %s367, 15
      %s369 = scalar_select %p368, %s367, 15
      %s370 = smul.addr %s369, 8
      %s371 = scalar_lea.vmem %s0, %s370
      %s372 = smul.u32 8, %s21
      %s373 = smul.u32 8, %s21
      %p374 = scmp.lt.s32.totalorder %s373, 15
      %s375 = scalar_select %p374, %s373, 15
      %s376 = smul.addr %s375, 8
      %s377 = scalar_lea.vmem %s1, %s376
      %s378 = smul.u32 8, %s21
      %s379 = smul.u32 8, %s21
      %p380 = scmp.lt.s32.totalorder %s379, 15
      %s381 = scalar_select %p380, %s379, 15
      %s382 = smul.addr %s381, 8
      %s383 = scalar_lea.vmem %s10, %s382
      %s384 = smul.u32 8, %s21
      %v385 = vld [vmem:[%s371] sm:$0xff]
      %v386 = vld [vmem:[%s371 + $0x8] sm:$0xff]
      %v387 = vld [vmem:[%s371 + $0x10] sm:$0xff]
      %v388 = vld [vmem:[%s371 + $0x18] sm:$0xff]
      %v389 = vld [vmem:[%s371 + $0x20] sm:$0xff]
      %v390 = vld [vmem:[%s371 + $0x28] sm:$0xff]
      %v391 = vld [vmem:[%s371 + $0x30] sm:$0xff]
      %v392 = vld [vmem:[%s371 + $0x38] sm:$0xff]
      %v393 = vld [vmem:[%s2] sm:$0x1]
      %v394 = vld [vmem:[%s3] sm:$0x1]
      %vm395 = vcmask 261120
      %v396 = vsel %vm395, %v385, 0.0
      %397 = vadd.xlane.f32.xlu0 %v396
      %v398 = vpop.xlane.xlu0 %397
      %v399 = vsel %vm395, %v386, 0.0
      %400 = vadd.xlane.f32.xlu0 %v399
      %v401 = vpop.xlane.xlu0 %400
      %v402 = vsel %vm395, %v387, 0.0
      %403 = vadd.xlane.f32.xlu0 %v402
      %v404 = vpop.xlane.xlu0 %403
      %v405 = vsel %vm395, %v388, 0.0
      %406 = vadd.xlane.f32.xlu0 %v405
      %v407 = vpop.xlane.xlu0 %406
      %v408 = vsel %vm395, %v389, 0.0
      %409 = vadd.xlane.f32.xlu0 %v408
      %v410 = vpop.xlane.xlu0 %409
      %v411 = vsel %vm395, %v390, 0.0
      %412 = vadd.xlane.f32.xlu0 %v411
      %v413 = vpop.xlane.xlu0 %412
      %v414 = vsel %vm395, %v391, 0.0
      %415 = vadd.xlane.f32.xlu0 %v414
      %v416 = vpop.xlane.xlu0 %415
      %v417 = vsel %vm395, %v392, 0.0
      %418 = vadd.xlane.f32.xlu0 %v417
      %v419 = vpop.xlane.xlu0 %418
      %v420 = vrcp.pop 32.0
      %v421 = vmul.f32 32.0, %v420
      %v422 = vsub.f32 1.0, %v421
      %v423 = vmul.f32 %v420, %v422
      %v424 = vadd.f32 %v420, %v423
      %vm425 = vweird.f32 %v420
      %v426 = vsel %vm425, %v420, %v424
      %v427 = vmul.f32 %v398, %v426
      %v428 = vmul.f32 %v401, %v426
      %v429 = vmul.f32 %v404, %v426
      %v430 = vmul.f32 %v407, %v426
      %v431 = vmul.f32 %v410, %v426
      %v432 = vmul.f32 %v413, %v426
      %v433 = vmul.f32 %v416, %v426
      %v434 = vmul.f32 %v419, %v426
      %v435 = vsub.f32 %v385, %v427
      %v436 = vsub.f32 %v386, %v428
      %v437 = vsub.f32 %v387, %v429
      %v438 = vsub.f32 %v388, %v430
      %v439 = vsub.f32 %v389, %v431
      %v440 = vsub.f32 %v390, %v432
      %v441 = vsub.f32 %v391, %v433
      %v442 = vsub.f32 %v392, %v434
      %v443 = vmul.f32 %v435, %v435
      %v444 = vmul.f32 %v436, %v436
      %v445 = vmul.f32 %v437, %v437
      %v446 = vmul.f32 %v438, %v438
      %v447 = vmul.f32 %v439, %v439
      %v448 = vmul.f32 %v440, %v440
      %v449 = vmul.f32 %v441, %v441
      %v450 = vmul.f32 %v442, %v442
      %v451 = vsel %vm395, %v443, 0.0
      %452 = vadd.xlane.f32.xlu0 %v451
      %v453 = vpop.xlane.xlu0 %452
      %v454 = vsel %vm395, %v444, 0.0
      %455 = vadd.xlane.f32.xlu0 %v454
      %v456 = vpop.xlane.xlu0 %455
      %v457 = vsel %vm395, %v445, 0.0
      %458 = vadd.xlane.f32.xlu0 %v457
      %v459 = vpop.xlane.xlu0 %458
      %v460 = vsel %vm395, %v446, 0.0
      %461 = vadd.xlane.f32.xlu0 %v460
      %v462 = vpop.xlane.xlu0 %461
      %v463 = vsel %vm395, %v447, 0.0
      %464 = vadd.xlane.f32.xlu0 %v463
      %v465 = vpop.xlane.xlu0 %464
      %v466 = vsel %vm395, %v448, 0.0
      %467 = vadd.xlane.f32.xlu0 %v466
      %v468 = vpop.xlane.xlu0 %467
      %v469 = vsel %vm395, %v449, 0.0
      %470 = vadd.xlane.f32.xlu0 %v469
      %v471 = vpop.xlane.xlu0 %470
      %v472 = vsel %vm395, %v450, 0.0
      %473 = vadd.xlane.f32.xlu0 %v472
      %v474 = vpop.xlane.xlu0 %473
      %v475 = vmul.f32 %v453, %v426
      %v476 = vmul.f32 %v456, %v426
      %v477 = vmul.f32 %v459, %v426
      %v478 = vmul.f32 %v462, %v426
      %v479 = vmul.f32 %v465, %v426
      %v480 = vmul.f32 %v468, %v426
      %v481 = vmul.f32 %v471, %v426
      %v482 = vmul.f32 %v474, %v426
      %v483 = vadd.f32 %v475, 1e-05
      %v484 = vadd.f32 %v476, 1e-05
      %v485 = vadd.f32 %v477, 1e-05
      %v486 = vadd.f32 %v478, 1e-05
      %v487 = vadd.f32 %v479, 1e-05
      %v488 = vadd.f32 %v480, 1e-05
      %v489 = vadd.f32 %v481, 1e-05
      %v490 = vadd.f32 %v482, 1e-05
      %v491 = vrsqrt.pop %v483
      %v492 = vmul.f32 %v491, %v483
      %v493 = vmul.f32 %v492, %v491
      %v494 = vmul.f32 0.5, %v493
      %v495 = vsub.f32 1.5, %v494
      %v496 = vmul.f32 %v491, %v495
      %vm497 = vweird.f32 %v483
      %vm498 = vweird.f32 %v491
      %vm499 = vmor %vm497, %vm498
      %v500 = vsel %vm499, %v491, %v496
      %v501 = vrsqrt.pop %v484
      %v502 = vmul.f32 %v501, %v484
      %v503 = vmul.f32 %v502, %v501
      %v504 = vmul.f32 0.5, %v503
      %v505 = vsub.f32 1.5, %v504
      %v506 = vmul.f32 %v501, %v505
      %vm507 = vweird.f32 %v484
      %vm508 = vweird.f32 %v501
      %vm509 = vmor %vm507, %vm508
      %v510 = vsel %vm509, %v501, %v506
      %v511 = vrsqrt.pop %v485
      %v512 = vmul.f32 %v511, %v485
      %v513 = vmul.f32 %v512, %v511
      %v514 = vmul.f32 0.5, %v513
      %v515 = vsub.f32 1.5, %v514
      %v516 = vmul.f32 %v511, %v515
      %vm517 = vweird.f32 %v485
      %vm518 = vweird.f32 %v511
      %vm519 = vmor %vm517, %vm518
      %v520 = vsel %vm519, %v511, %v516
      %v521 = vrsqrt.pop %v486
      %v522 = vmul.f32 %v521, %v486
      %v523 = vmul.f32 %v522, %v521
      %v524 = vmul.f32 0.5, %v523
      %v525 = vsub.f32 1.5, %v524
      %v526 = vmul.f32 %v521, %v525
      %vm527 = vweird.f32 %v486
      %vm528 = vweird.f32 %v521
      %vm529 = vmor %vm527, %vm528
      %v530 = vsel %vm529, %v521, %v526
      %v531 = vrsqrt.pop %v487
      %v532 = vmul.f32 %v531, %v487
      %v533 = vmul.f32 %v532, %v531
      %v534 = vmul.f32 0.5, %v533
      %v535 = vsub.f32 1.5, %v534
      %v536 = vmul.f32 %v531, %v535
      %vm537 = vweird.f32 %v487
      %vm538 = vweird.f32 %v531
      %vm539 = vmor %vm537, %vm538
      %v540 = vsel %vm539, %v531, %v536
      %v541 = vrsqrt.pop %v488
      %v542 = vmul.f32 %v541, %v488
      %v543 = vmul.f32 %v542, %v541
      %v544 = vmul.f32 0.5, %v543
      %v545 = vsub.f32 1.5, %v544
      %v546 = vmul.f32 %v541, %v545
      %vm547 = vweird.f32 %v488
      %vm548 = vweird.f32 %v541
      %vm549 = vmor %vm547, %vm548
      %v550 = vsel %vm549, %v541, %v546
      %v551 = vrsqrt.pop %v489
      %v552 = vmul.f32 %v551, %v489
      %v553 = vmul.f32 %v552, %v551
      %v554 = vmul.f32 0.5, %v553
      %v555 = vsub.f32 1.5, %v554
      %v556 = vmul.f32 %v551, %v555
      %vm557 = vweird.f32 %v489
      %vm558 = vweird.f32 %v551
      %vm559 = vmor %vm557, %vm558
      %v560 = vsel %vm559, %v551, %v556
      %v561 = vrsqrt.pop %v490
      %v562 = vmul.f32 %v561, %v490
      %v563 = vmul.f32 %v562, %v561
      %v564 = vmul.f32 0.5, %v563
      %v565 = vsub.f32 1.5, %v564
      %v566 = vmul.f32 %v561, %v565
      %vm567 = vweird.f32 %v490
      %vm568 = vweird.f32 %v561
      %vm569 = vmor %vm567, %vm568
      %v570 = vsel %vm569, %v561, %v566
      %v571 = vmul.f32 %v435, %v500
      %v572 = vmul.f32 %v436, %v510
      %v573 = vmul.f32 %v437, %v520
      %v574 = vmul.f32 %v438, %v530
      %v575 = vmul.f32 %v439, %v540
      %v576 = vmul.f32 %v440, %v550
      %v577 = vmul.f32 %v441, %v560
      %v578 = vmul.f32 %v442, %v570
      %v580 = vperm.slane %v393, 0
      %v582 = vmul.f32 %v571, %v580
      %v583 = vmul.f32 %v572, %v580
      %v584 = vmul.f32 %v573, %v580
      %v585 = vmul.f32 %v574, %v580
      %v586 = vmul.f32 %v575, %v580
      %v587 = vmul.f32 %v576, %v580
      %v588 = vmul.f32 %v577, %v580
      %v589 = vmul.f32 %v578, %v580
      %v591 = vperm.slane %v394, 0
      %v593 = vadd.f32 %v582, %v591
      %v594 = vadd.f32 %v583, %v591
      %v595 = vadd.f32 %v584, %v591
      %v596 = vadd.f32 %v585, %v591
      %v597 = vadd.f32 %v586, %v591
      %v598 = vadd.f32 %v587, %v591
      %v599 = vadd.f32 %v588, %v591
      %v600 = vadd.f32 %v589, %v591
      %v601 = vld [vmem:[%s377] sm:$0xff]
      %v602 = vld [vmem:[%s377 + $0x8] sm:$0xff]
      %v603 = vld [vmem:[%s377 + $0x10] sm:$0xff]
      %v604 = vld [vmem:[%s377 + $0x18] sm:$0xff]
      %v605 = vld [vmem:[%s377 + $0x20] sm:$0xff]
      %v606 = vld [vmem:[%s377 + $0x28] sm:$0xff]
      %v607 = vld [vmem:[%s377 + $0x30] sm:$0xff]
      %v608 = vld [vmem:[%s377 + $0x38] sm:$0xff]
      %v609 = vadd.f32 %v593, %v601
      %v610 = vadd.f32 %v594, %v602
      %v611 = vadd.f32 %v595, %v603
      %v612 = vadd.f32 %v596, %v604
      %v613 = vadd.f32 %v597, %v605
      %v614 = vadd.f32 %v598, %v606
      %v615 = vadd.f32 %v599, %v607
      %v616 = vadd.f32 %v600, %v608
      %v617 = vld [vmem:[%s4] sm:$0xff]
      %v618 = vld [vmem:[%s4 + $0x8] sm:$0xff]
      %v619 = vld [vmem:[%s4 + $0x10] sm:$0xff]
      %v620 = vld [vmem:[%s4 + $0x18] sm:$0xff]
      %v621 = vld [vmem:[%s5] sm:$0x1]
      %v623 = vperm.slane %v621, 0
      %v626 = vsel %vm395, %v609, 0
      %v629 = vsel %vm395, %v610, 0
      %v632 = vsel %vm395, %v611, 0
      %v635 = vsel %vm395, %v612, 0
      %v638 = vsel %vm395, %v613, 0
      %v641 = vsel %vm395, %v614, 0
      %v644 = vsel %vm395, %v615, 0
      %v647 = vsel %vm395, %v616, 0
      %649 = vmatpush.msra.mxu0 0.0
      %650 = vmatpush.msra.mxu0 0.0
      %651 = vmatpush.msra.mxu0 0.0
      %652 = vmatpush.msra.mxu0 0.0
      %653 = vmatpush.msra.mxu0 0.0
      %654 = vmatpush.msra.mxu0 0.0
      %655 = vmatpush.msra.mxu0 0.0
      %656 = vmatpush.msra.mxu0 0.0
      %657 = vmatpush.msra.mxu0 0.0
      %658 = vmatpush.msra.mxu0 0.0
      %659 = vmatpush.msra.mxu0 0.0
      %660 = vmatpush.msra.mxu0 0.0
      %661 = vmatpush.msra.mxu0 %v620
      %662 = vmatpush.msra.mxu0 %v619
      %663 = vmatpush.msra.mxu0 %v618
      %664 = vmatpush.msra.mxu0 %v617
      %665 = vmatmul.f32.gmra.mxu0 %v626
      %v666 = vpop.f32.mrf.mxu0
      %v667 = vadd.f32 %v623, %v666
      %668 = vmatmul.f32.gmra.mxu0 %v629
      %v669 = vpop.f32.mrf.mxu0
      %v670 = vadd.f32 %v623, %v669
      %671 = vmatmul.f32.gmra.mxu0 %v632
      %v672 = vpop.f32.mrf.mxu0
      %v673 = vadd.f32 %v623, %v672
      %674 = vmatmul.f32.gmra.mxu0 %v635
      %v675 = vpop.f32.mrf.mxu0
      %v676 = vadd.f32 %v623, %v675
      %677 = vmatmul.f32.gmra.mxu0 %v638
      %v678 = vpop.f32.mrf.mxu0
      %v679 = vadd.f32 %v623, %v678
      %680 = vmatmul.f32.gmra.mxu0 %v641
      %v681 = vpop.f32.mrf.mxu0
      %v682 = vadd.f32 %v623, %v681
      %683 = vmatmul.f32.gmra.mxu0 %v644
      %v684 = vpop.f32.mrf.mxu0
      %v685 = vadd.f32 %v623, %v684
      %686 = vmatmul.f32.gmra.mxu0 %v647
      %v687 = vpop.f32.mrf.mxu0
      %v688 = vadd.f32 %v623, %v687
      %689 = vdwg.mxu0
      %v690 = vmul.f32 %v667, 0.5
      %v691 = vmul.f32 %v670, 0.5
      %v692 = vmul.f32 %v673, 0.5
      %v693 = vmul.f32 %v676, 0.5
      %v694 = vmul.f32 %v679, 0.5
      %v695 = vmul.f32 %v682, 0.5
      %v696 = vmul.f32 %v685, 0.5
      %v697 = vmul.f32 %v688, 0.5
      %v698 = vmul.f32 %v667, 0.70710677
      %v699 = vmul.f32 %v670, 0.70710677
      %v700 = vmul.f32 %v673, 0.70710677
      %v701 = vmul.f32 %v676, 0.70710677
      %v702 = vmul.f32 %v679, 0.70710677
      %v703 = vmul.f32 %v682, 0.70710677
      %v704 = vmul.f32 %v685, 0.70710677
      %v705 = vmul.f32 %v688, 0.70710677
      %vm706 = vcmp.ge.f32.partialorder %v698, 0.0
      %vm707 = vcmp.ge.f32.partialorder %v699, 0.0
      %vm708 = vcmp.ge.f32.partialorder %v700, 0.0
      %vm709 = vcmp.ge.f32.partialorder %v701, 0.0
      %vm710 = vcmp.ge.f32.partialorder %v702, 0.0
      %vm711 = vcmp.ge.f32.partialorder %v703, 0.0
      %vm712 = vcmp.ge.f32.partialorder %v704, 0.0
      %vm713 = vcmp.ge.f32.partialorder %v705, 0.0
      %v714 = vsel %vm706, 1.0, -1.0
      %v715 = vsel %vm707, 1.0, -1.0
      %v716 = vsel %vm708, 1.0, -1.0
      %v717 = vsel %vm709, 1.0, -1.0
      %v718 = vsel %vm710, 1.0, -1.0
      %v719 = vsel %vm711, 1.0, -1.0
      %v720 = vsel %vm712, 1.0, -1.0
      %v721 = vsel %vm713, 1.0, -1.0
      %v722 = vand.u32 2147483647, %v698
      %v723 = vand.u32 2147483647, %v699
      %v724 = vand.u32 2147483647, %v700
      %v725 = vand.u32 2147483647, %v701
      %v726 = vand.u32 2147483647, %v702
      %v727 = vand.u32 2147483647, %v703
      %v728 = vand.u32 2147483647, %v704
      %v729 = vand.u32 2147483647, %v705
      %v730 = vmul.f32 %v722, 0.3275911
      %v731 = vmul.f32 %v723, 0.3275911
      %v732 = vmul.f32 %v724, 0.3275911
      %v733 = vmul.f32 %v725, 0.3275911
      %v734 = vmul.f32 %v726, 0.3275911
      %v735 = vmul.f32 %v727, 0.3275911
      %v736 = vmul.f32 %v728, 0.3275911
      %v737 = vmul.f32 %v729, 0.3275911
      %v738 = vadd.f32 %v730, 1.0
      %v739 = vadd.f32 %v731, 1.0
      %v740 = vadd.f32 %v732, 1.0
      %v741 = vadd.f32 %v733, 1.0
      %v742 = vadd.f32 %v734, 1.0
      %v743 = vadd.f32 %v735, 1.0
      %v744 = vadd.f32 %v736, 1.0
      %v745 = vadd.f32 %v737, 1.0
      %v746 = vrcp.pop %v738
      %v747 = vmul.f32 %v738, %v746
      %v748 = vsub.f32 1.0, %v747
      %v749 = vmul.f32 %v746, %v748
      %v750 = vadd.f32 %v746, %v749
      %vm751 = vweird.f32 %v738
      %vm752 = vweird.f32 %v746
      %vm753 = vmor %vm751, %vm752
      %v754 = vsel %vm753, %v746, %v750
      %v755 = vand.u32 2147483647, %v738
      %vm756 = vcmp.eq.f32.partialorder %v755, 8.507059e+37
      %v757 = vand.u32 %v738, 2147483648
      %v758 = vor.u32 1.1754944e-38, %v757
      %v759 = vsel %vm756, %v758, %v754
      %v760 = vmul.f32 1.0, %v759
      %v761 = vrcp.pop %v739
      %v762 = vmul.f32 %v739, %v761
      %v763 = vsub.f32 1.0, %v762
      %v764 = vmul.f32 %v761, %v763
      %v765 = vadd.f32 %v761, %v764
      %vm766 = vweird.f32 %v739
      %vm767 = vweird.f32 %v761
      %vm768 = vmor %vm766, %vm767
      %v769 = vsel %vm768, %v761, %v765
      %v770 = vand.u32 2147483647, %v739
      %vm771 = vcmp.eq.f32.partialorder %v770, 8.507059e+37
      %v772 = vand.u32 %v739, 2147483648
      %v773 = vor.u32 1.1754944e-38, %v772
      %v774 = vsel %vm771, %v773, %v769
      %v775 = vmul.f32 1.0, %v774
      %v776 = vrcp.pop %v740
      %v777 = vmul.f32 %v740, %v776
      %v778 = vsub.f32 1.0, %v777
      %v779 = vmul.f32 %v776, %v778
      %v780 = vadd.f32 %v776, %v779
      %vm781 = vweird.f32 %v740
      %vm782 = vweird.f32 %v776
      %vm783 = vmor %vm781, %vm782
      %v784 = vsel %vm783, %v776, %v780
      %v785 = vand.u32 2147483647, %v740
      %vm786 = vcmp.eq.f32.partialorder %v785, 8.507059e+37
      %v787 = vand.u32 %v740, 2147483648
      %v788 = vor.u32 1.1754944e-38, %v787
      %v789 = vsel %vm786, %v788, %v784
      %v790 = vmul.f32 1.0, %v789
      %v791 = vrcp.pop %v741
      %v792 = vmul.f32 %v741, %v791
      %v793 = vsub.f32 1.0, %v792
      %v794 = vmul.f32 %v791, %v793
      %v795 = vadd.f32 %v791, %v794
      %vm796 = vweird.f32 %v741
      %vm797 = vweird.f32 %v791
      %vm798 = vmor %vm796, %vm797
      %v799 = vsel %vm798, %v791, %v795
      %v800 = vand.u32 2147483647, %v741
      %vm801 = vcmp.eq.f32.partialorder %v800, 8.507059e+37
      %v802 = vand.u32 %v741, 2147483648
      %v803 = vor.u32 1.1754944e-38, %v802
      %v804 = vsel %vm801, %v803, %v799
      %v805 = vmul.f32 1.0, %v804
      %v806 = vrcp.pop %v742
      %v807 = vmul.f32 %v742, %v806
      %v808 = vsub.f32 1.0, %v807
      %v809 = vmul.f32 %v806, %v808
      %v810 = vadd.f32 %v806, %v809
      %vm811 = vweird.f32 %v742
      %vm812 = vweird.f32 %v806
      %vm813 = vmor %vm811, %vm812
      %v814 = vsel %vm813, %v806, %v810
      %v815 = vand.u32 2147483647, %v742
      %vm816 = vcmp.eq.f32.partialorder %v815, 8.507059e+37
      %v817 = vand.u32 %v742, 2147483648
      %v818 = vor.u32 1.1754944e-38, %v817
      %v819 = vsel %vm816, %v818, %v814
      %v820 = vmul.f32 1.0, %v819
      %v821 = vrcp.pop %v743
      %v822 = vmul.f32 %v743, %v821
      %v823 = vsub.f32 1.0, %v822
      %v824 = vmul.f32 %v821, %v823
      %v825 = vadd.f32 %v821, %v824
      %vm826 = vweird.f32 %v743
      %vm827 = vweird.f32 %v821
      %vm828 = vmor %vm826, %vm827
      %v829 = vsel %vm828, %v821, %v825
      %v830 = vand.u32 2147483647, %v743
      %vm831 = vcmp.eq.f32.partialorder %v830, 8.507059e+37
      %v832 = vand.u32 %v743, 2147483648
      %v833 = vor.u32 1.1754944e-38, %v832
      %v834 = vsel %vm831, %v833, %v829
      %v835 = vmul.f32 1.0, %v834
      %v836 = vrcp.pop %v744
      %v837 = vmul.f32 %v744, %v836
      %v838 = vsub.f32 1.0, %v837
      %v839 = vmul.f32 %v836, %v838
      %v840 = vadd.f32 %v836, %v839
      %vm841 = vweird.f32 %v744
      %vm842 = vweird.f32 %v836
      %vm843 = vmor %vm841, %vm842
      %v844 = vsel %vm843, %v836, %v840
      %v845 = vand.u32 2147483647, %v744
      %vm846 = vcmp.eq.f32.partialorder %v845, 8.507059e+37
      %v847 = vand.u32 %v744, 2147483648
      %v848 = vor.u32 1.1754944e-38, %v847
      %v849 = vsel %vm846, %v848, %v844
      %v850 = vmul.f32 1.0, %v849
      %v851 = vrcp.pop %v745
      %v852 = vmul.f32 %v745, %v851
      %v853 = vsub.f32 1.0, %v852
      %v854 = vmul.f32 %v851, %v853
      %v855 = vadd.f32 %v851, %v854
      %vm856 = vweird.f32 %v745
      %vm857 = vweird.f32 %v851
      %vm858 = vmor %vm856, %vm857
      %v859 = vsel %vm858, %v851, %v855
      %v860 = vand.u32 2147483647, %v745
      %vm861 = vcmp.eq.f32.partialorder %v860, 8.507059e+37
      %v862 = vand.u32 %v745, 2147483648
      %v863 = vor.u32 1.1754944e-38, %v862
      %v864 = vsel %vm861, %v863, %v859
      %v865 = vmul.f32 1.0, %v864
      %v866 = vmul.f32 %v760, 1.0614054
      %v867 = vmul.f32 %v775, 1.0614054
      %v868 = vmul.f32 %v790, 1.0614054
      %v869 = vmul.f32 %v805, 1.0614054
      %v870 = vmul.f32 %v820, 1.0614054
      %v871 = vmul.f32 %v835, 1.0614054
      %v872 = vmul.f32 %v850, 1.0614054
      %v873 = vmul.f32 %v865, 1.0614054
      %v874 = vadd.f32 %v866, -1.4531521
      %v875 = vadd.f32 %v867, -1.4531521
      %v876 = vadd.f32 %v868, -1.4531521
      %v877 = vadd.f32 %v869, -1.4531521
      %v878 = vadd.f32 %v870, -1.4531521
      %v879 = vadd.f32 %v871, -1.4531521
      %v880 = vadd.f32 %v872, -1.4531521
      %v881 = vadd.f32 %v873, -1.4531521
      %v882 = vmul.f32 %v874, %v760
      %v883 = vmul.f32 %v875, %v775
      %v884 = vmul.f32 %v876, %v790
      %v885 = vmul.f32 %v877, %v805
      %v886 = vmul.f32 %v878, %v820
      %v887 = vmul.f32 %v879, %v835
      %v888 = vmul.f32 %v880, %v850
      %v889 = vmul.f32 %v881, %v865
      %v890 = vadd.f32 %v882, 1.4214138
      %v891 = vadd.f32 %v883, 1.4214138
      %v892 = vadd.f32 %v884, 1.4214138
      %v893 = vadd.f32 %v885, 1.4214138
      %v894 = vadd.f32 %v886, 1.4214138
      %v895 = vadd.f32 %v887, 1.4214138
      %v896 = vadd.f32 %v888, 1.4214138
      %v897 = vadd.f32 %v889, 1.4214138
      %v898 = vmul.f32 %v890, %v760
      %v899 = vmul.f32 %v891, %v775
      %v900 = vmul.f32 %v892, %v790
      %v901 = vmul.f32 %v893, %v805
      %v902 = vmul.f32 %v894, %v820
      %v903 = vmul.f32 %v895, %v835
      %v904 = vmul.f32 %v896, %v850
      %v905 = vmul.f32 %v897, %v865
      %v906 = vadd.f32 %v898, -0.28449672
      %v907 = vadd.f32 %v899, -0.28449672
      %v908 = vadd.f32 %v900, -0.28449672
      %v909 = vadd.f32 %v901, -0.28449672
      %v910 = vadd.f32 %v902, -0.28449672
      %v911 = vadd.f32 %v903, -0.28449672
      %v912 = vadd.f32 %v904, -0.28449672
      %v913 = vadd.f32 %v905, -0.28449672
      %v914 = vmul.f32 %v906, %v760
      %v915 = vmul.f32 %v907, %v775
      %v916 = vmul.f32 %v908, %v790
      %v917 = vmul.f32 %v909, %v805
      %v918 = vmul.f32 %v910, %v820
      %v919 = vmul.f32 %v911, %v835
      %v920 = vmul.f32 %v912, %v850
      %v921 = vmul.f32 %v913, %v865
      %v922 = vadd.f32 %v914, 0.2548296
      %v923 = vadd.f32 %v915, 0.2548296
      %v924 = vadd.f32 %v916, 0.2548296
      %v925 = vadd.f32 %v917, 0.2548296
      %v926 = vadd.f32 %v918, 0.2548296
      %v927 = vadd.f32 %v919, 0.2548296
      %v928 = vadd.f32 %v920, 0.2548296
      %v929 = vadd.f32 %v921, 0.2548296
      %v930 = vmul.f32 %v922, %v760
      %v931 = vmul.f32 %v923, %v775
      %v932 = vmul.f32 %v924, %v790
      %v933 = vmul.f32 %v925, %v805
      %v934 = vmul.f32 %v926, %v820
      %v935 = vmul.f32 %v927, %v835
      %v936 = vmul.f32 %v928, %v850
      %v937 = vmul.f32 %v929, %v865
      %v938 = vsub.f32 0.0, %v722
      %v939 = vsub.f32 0.0, %v723
      %v940 = vsub.f32 0.0, %v724
      %v941 = vsub.f32 0.0, %v725
      %v942 = vsub.f32 0.0, %v726
      %v943 = vsub.f32 0.0, %v727
      %v944 = vsub.f32 0.0, %v728
      %v945 = vsub.f32 0.0, %v729
      %v946 = vmul.f32 %v938, %v722
      %v947 = vmul.f32 %v939, %v723
      %v948 = vmul.f32 %v940, %v724
      %v949 = vmul.f32 %v941, %v725
      %v950 = vmul.f32 %v942, %v726
      %v951 = vmul.f32 %v943, %v727
      %v952 = vmul.f32 %v944, %v728
      %v953 = vmul.f32 %v945, %v729
      %v954 = vmul.f32 %v946, 1.442695
      %v955 = vpow.pop %v954
      %v956 = vmul.f32 %v947, 1.442695
      %v957 = vpow.pop %v956
      %v958 = vmul.f32 %v948, 1.442695
      %v959 = vpow.pop %v958
      %v960 = vmul.f32 %v949, 1.442695
      %v961 = vpow.pop %v960
      %v962 = vmul.f32 %v950, 1.442695
      %v963 = vpow.pop %v962
      %v964 = vmul.f32 %v951, 1.442695
      %v965 = vpow.pop %v964
      %v966 = vmul.f32 %v952, 1.442695
      %v967 = vpow.pop %v966
      %v968 = vmul.f32 %v953, 1.442695
      %v969 = vpow.pop %v968
      %v970 = vmul.f32 %v930, %v955
      %v971 = vmul.f32 %v931, %v957
      %v972 = vmul.f32 %v932, %v959
      %v973 = vmul.f32 %v933, %v961
      %v974 = vmul.f32 %v934, %v963
      %v975 = vmul.f32 %v935, %v965
      %v976 = vmul.f32 %v936, %v967
      %v977 = vmul.f32 %v937, %v969
      %v978 = vsub.f32 1.0, %v970
      %v979 = vsub.f32 1.0, %v971
      %v980 = vsub.f32 1.0, %v972
      %v981 = vsub.f32 1.0, %v973
      %v982 = vsub.f32 1.0, %v974
      %v983 = vsub.f32 1.0, %v975
      %v984 = vsub.f32 1.0, %v976
      %v985 = vsub.f32 1.0, %v977
      %v986 = vmul.f32 %v714, %v978
      %v987 = vmul.f32 %v715, %v979
      %v988 = vmul.f32 %v716, %v980
      %v989 = vmul.f32 %v717, %v981
      %v990 = vmul.f32 %v718, %v982
      %v991 = vmul.f32 %v719, %v983
      %v992 = vmul.f32 %v720, %v984
      %v993 = vmul.f32 %v721, %v985
      %v994 = vadd.f32 %v986, 1.0
      %v995 = vadd.f32 %v987, 1.0
      %v996 = vadd.f32 %v988, 1.0
      %v997 = vadd.f32 %v989, 1.0
      %v998 = vadd.f32 %v990, 1.0
      %v999 = vadd.f32 %v991, 1.0
      %v1000 = vadd.f32 %v992, 1.0
      %v1001 = vadd.f32 %v993, 1.0
      %v1002 = vmul.f32 %v690, %v994
      %v1003 = vmul.f32 %v691, %v995
      %v1004 = vmul.f32 %v692, %v996
      %v1005 = vmul.f32 %v693, %v997
      %v1006 = vmul.f32 %v694, %v998
      %v1007 = vmul.f32 %v695, %v999
      %v1008 = vmul.f32 %v696, %v1000
      %v1009 = vmul.f32 %v697, %v1001
      %v1010 = vld [vmem:[%s6] sm:$0xff]
      %v1011 = vld [vmem:[%s6 + $0x8] sm:$0xff]
      %v1012 = vld [vmem:[%s6 + $0x10] sm:$0xff]
      %v1013 = vld [vmem:[%s6 + $0x18] sm:$0xff]
      %v1014 = vld [vmem:[%s6 + $0x20] sm:$0xff]
      %v1015 = vld [vmem:[%s6 + $0x28] sm:$0xff]
      %v1016 = vld [vmem:[%s6 + $0x30] sm:$0xff]
      %v1017 = vld [vmem:[%s6 + $0x38] sm:$0xff]
      %v1018 = vld [vmem:[%s7] sm:$0x1]
      %v1020 = vperm.slane %v1018, 0
      %vm1022 = vcmask 523264
      %v1024 = vsel %vm1022, %v1002, 0
      %v1027 = vsel %vm1022, %v1003, 0
      %v1030 = vsel %vm1022, %v1004, 0
      %v1033 = vsel %vm1022, %v1005, 0
      %v1036 = vsel %vm1022, %v1006, 0
      %v1039 = vsel %vm1022, %v1007, 0
      %v1042 = vsel %vm1022, %v1008, 0
      %v1045 = vsel %vm1022, %v1009, 0
      %1047 = vmatpush.msra.mxu0 0.0
      %1048 = vmatpush.msra.mxu0 0.0
      %1049 = vmatpush.msra.mxu0 0.0
      %1050 = vmatpush.msra.mxu0 0.0
      %1051 = vmatpush.msra.mxu0 0.0
      %1052 = vmatpush.msra.mxu0 0.0
      %1053 = vmatpush.msra.mxu0 0.0
      %1054 = vmatpush.msra.mxu0 0.0
      %1055 = vmatpush.msra.mxu0 %v1017
      %1056 = vmatpush.msra.mxu0 %v1016
      %1057 = vmatpush.msra.mxu0 %v1015
      %1058 = vmatpush.msra.mxu0 %v1014
      %1059 = vmatpush.msra.mxu0 %v1013
      %1060 = vmatpush.msra.mxu0 %v1012
      %1061 = vmatpush.msra.mxu0 %v1011
      %1062 = vmatpush.msra.mxu0 %v1010
      %1063 = vmatmul.f32.gmra.mxu0 %v1024
      %v1064 = vpop.f32.mrf.mxu0
      %v1065 = vadd.f32 %v1020, %v1064
      %1066 = vmatmul.f32.gmra.mxu0 %v1027
      %v1067 = vpop.f32.mrf.mxu0
      %v1068 = vadd.f32 %v1020, %v1067
      %1069 = vmatmul.f32.gmra.mxu0 %v1030
      %v1070 = vpop.f32.mrf.mxu0
      %v1071 = vadd.f32 %v1020, %v1070
      %1072 = vmatmul.f32.gmra.mxu0 %v1033
      %v1073 = vpop.f32.mrf.mxu0
      %v1074 = vadd.f32 %v1020, %v1073
      %1075 = vmatmul.f32.gmra.mxu0 %v1036
      %v1076 = vpop.f32.mrf.mxu0
      %v1077 = vadd.f32 %v1020, %v1076
      %1078 = vmatmul.f32.gmra.mxu0 %v1039
      %v1079 = vpop.f32.mrf.mxu0
      %v1080 = vadd.f32 %v1020, %v1079
      %1081 = vmatmul.f32.gmra.mxu0 %v1042
      %v1082 = vpop.f32.mrf.mxu0
      %v1083 = vadd.f32 %v1020, %v1082
      %1084 = vmatmul.f32.gmra.mxu0 %v1045
      %v1085 = vpop.f32.mrf.mxu0
      %v1086 = vadd.f32 %v1020, %v1085
      %1087 = vdwg.mxu0
      %v1088 = vld [vmem:[%s8] sm:$0x1]
      %v1089 = vld [vmem:[%s9] sm:$0x1]
      %v1090 = vsel %vm395, %v1065, 0.0
      %1091 = vadd.xlane.f32.xlu0 %v1090
      %v1092 = vpop.xlane.xlu0 %1091
      %v1093 = vsel %vm395, %v1068, 0.0
      %1094 = vadd.xlane.f32.xlu0 %v1093
      %v1095 = vpop.xlane.xlu0 %1094
      %v1096 = vsel %vm395, %v1071, 0.0
      %1097 = vadd.xlane.f32.xlu0 %v1096
      %v1098 = vpop.xlane.xlu0 %1097
      %v1099 = vsel %vm395, %v1074, 0.0
      %1100 = vadd.xlane.f32.xlu0 %v1099
      %v1101 = vpop.xlane.xlu0 %1100
      %v1102 = vsel %vm395, %v1077, 0.0
      %1103 = vadd.xlane.f32.xlu0 %v1102
      %v1104 = vpop.xlane.xlu0 %1103
      %v1105 = vsel %vm395, %v1080, 0.0
      %1106 = vadd.xlane.f32.xlu0 %v1105
      %v1107 = vpop.xlane.xlu0 %1106
      %v1108 = vsel %vm395, %v1083, 0.0
      %1109 = vadd.xlane.f32.xlu0 %v1108
      %v1110 = vpop.xlane.xlu0 %1109
      %v1111 = vsel %vm395, %v1086, 0.0
      %1112 = vadd.xlane.f32.xlu0 %v1111
      %v1113 = vpop.xlane.xlu0 %1112
      %v1114 = vmul.f32 %v1092, %v426
      %v1115 = vmul.f32 %v1095, %v426
      %v1116 = vmul.f32 %v1098, %v426
      %v1117 = vmul.f32 %v1101, %v426
      %v1118 = vmul.f32 %v1104, %v426
      %v1119 = vmul.f32 %v1107, %v426
      %v1120 = vmul.f32 %v1110, %v426
      %v1121 = vmul.f32 %v1113, %v426
      %v1122 = vsub.f32 %v1065, %v1114
      %v1123 = vsub.f32 %v1068, %v1115
      %v1124 = vsub.f32 %v1071, %v1116
      %v1125 = vsub.f32 %v1074, %v1117
      %v1126 = vsub.f32 %v1077, %v1118
      %v1127 = vsub.f32 %v1080, %v1119
      %v1128 = vsub.f32 %v1083, %v1120
      %v1129 = vsub.f32 %v1086, %v1121
      %v1130 = vmul.f32 %v1122, %v1122
      %v1131 = vmul.f32 %v1123, %v1123
      %v1132 = vmul.f32 %v1124, %v1124
      %v1133 = vmul.f32 %v1125, %v1125
      %v1134 = vmul.f32 %v1126, %v1126
      %v1135 = vmul.f32 %v1127, %v1127
      %v1136 = vmul.f32 %v1128, %v1128
      %v1137 = vmul.f32 %v1129, %v1129
      %v1138 = vsel %vm395, %v1130, 0.0
      %1139 = vadd.xlane.f32.xlu0 %v1138
      %v1140 = vpop.xlane.xlu0 %1139
      %v1141 = vsel %vm395, %v1131, 0.0
      %1142 = vadd.xlane.f32.xlu0 %v1141
      %v1143 = vpop.xlane.xlu0 %1142
      %v1144 = vsel %vm395, %v1132, 0.0
      %1145 = vadd.xlane.f32.xlu0 %v1144
      %v1146 = vpop.xlane.xlu0 %1145
      %v1147 = vsel %vm395, %v1133, 0.0
      %1148 = vadd.xlane.f32.xlu0 %v1147
      %v1149 = vpop.xlane.xlu0 %1148
      %v1150 = vsel %vm395, %v1134, 0.0
      %1151 = vadd.xlane.f32.xlu0 %v1150
      %v1152 = vpop.xlane.xlu0 %1151
      %v1153 = vsel %vm395, %v1135, 0.0
      %1154 = vadd.xlane.f32.xlu0 %v1153
      %v1155 = vpop.xlane.xlu0 %1154
      %v1156 = vsel %vm395, %v1136, 0.0
      %1157 = vadd.xlane.f32.xlu0 %v1156
      %v1158 = vpop.xlane.xlu0 %1157
      %v1159 = vsel %vm395, %v1137, 0.0
      %1160 = vadd.xlane.f32.xlu0 %v1159
      %v1161 = vpop.xlane.xlu0 %1160
      %v1162 = vmul.f32 %v1140, %v426
      %v1163 = vmul.f32 %v1143, %v426
      %v1164 = vmul.f32 %v1146, %v426
      %v1165 = vmul.f32 %v1149, %v426
      %v1166 = vmul.f32 %v1152, %v426
      %v1167 = vmul.f32 %v1155, %v426
      %v1168 = vmul.f32 %v1158, %v426
      %v1169 = vmul.f32 %v1161, %v426
      %v1170 = vadd.f32 %v1162, 1e-05
      %v1171 = vadd.f32 %v1163, 1e-05
      %v1172 = vadd.f32 %v1164, 1e-05
      %v1173 = vadd.f32 %v1165, 1e-05
      %v1174 = vadd.f32 %v1166, 1e-05
      %v1175 = vadd.f32 %v1167, 1e-05
      %v1176 = vadd.f32 %v1168, 1e-05
      %v1177 = vadd.f32 %v1169, 1e-05
      %v1178 = vrsqrt.pop %v1170
      %v1179 = vmul.f32 %v1178, %v1170
      %v1180 = vmul.f32 %v1179, %v1178
      %v1181 = vmul.f32 0.5, %v1180
      %v1182 = vsub.f32 1.5, %v1181
      %v1183 = vmul.f32 %v1178, %v1182
      %vm1184 = vweird.f32 %v1170
      %vm1185 = vweird.f32 %v1178
      %vm1186 = vmor %vm1184, %vm1185
      %v1187 = vsel %vm1186, %v1178, %v1183
      %v1188 = vrsqrt.pop %v1171
      %v1189 = vmul.f32 %v1188, %v1171
      %v1190 = vmul.f32 %v1189, %v1188
      %v1191 = vmul.f32 0.5, %v1190
      %v1192 = vsub.f32 1.5, %v1191
      %v1193 = vmul.f32 %v1188, %v1192
      %vm1194 = vweird.f32 %v1171
      %vm1195 = vweird.f32 %v1188
      %vm1196 = vmor %vm1194, %vm1195
      %v1197 = vsel %vm1196, %v1188, %v1193
      %v1198 = vrsqrt.pop %v1172
      %v1199 = vmul.f32 %v1198, %v1172
      %v1200 = vmul.f32 %v1199, %v1198
      %v1201 = vmul.f32 0.5, %v1200
      %v1202 = vsub.f32 1.5, %v1201
      %v1203 = vmul.f32 %v1198, %v1202
      %vm1204 = vweird.f32 %v1172
      %vm1205 = vweird.f32 %v1198
      %vm1206 = vmor %vm1204, %vm1205
      %v1207 = vsel %vm1206, %v1198, %v1203
      %v1208 = vrsqrt.pop %v1173
      %v1209 = vmul.f32 %v1208, %v1173
      %v1210 = vmul.f32 %v1209, %v1208
      %v1211 = vmul.f32 0.5, %v1210
      %v1212 = vsub.f32 1.5, %v1211
      %v1213 = vmul.f32 %v1208, %v1212
      %vm1214 = vweird.f32 %v1173
      %vm1215 = vweird.f32 %v1208
      %vm1216 = vmor %vm1214, %vm1215
      %v1217 = vsel %vm1216, %v1208, %v1213
      %v1218 = vrsqrt.pop %v1174
      %v1219 = vmul.f32 %v1218, %v1174
      %v1220 = vmul.f32 %v1219, %v1218
      %v1221 = vmul.f32 0.5, %v1220
      %v1222 = vsub.f32 1.5, %v1221
      %v1223 = vmul.f32 %v1218, %v1222
      %vm1224 = vweird.f32 %v1174
      %vm1225 = vweird.f32 %v1218
      %vm1226 = vmor %vm1224, %vm1225
      %v1227 = vsel %vm1226, %v1218, %v1223
      %v1228 = vrsqrt.pop %v1175
      %v1229 = vmul.f32 %v1228, %v1175
      %v1230 = vmul.f32 %v1229, %v1228
      %v1231 = vmul.f32 0.5, %v1230
      %v1232 = vsub.f32 1.5, %v1231
      %v1233 = vmul.f32 %v1228, %v1232
      %vm1234 = vweird.f32 %v1175
      %vm1235 = vweird.f32 %v1228
      %vm1236 = vmor %vm1234, %vm1235
      %v1237 = vsel %vm1236, %v1228, %v1233
      %v1238 = vrsqrt.pop %v1176
      %v1239 = vmul.f32 %v1238, %v1176
      %v1240 = vmul.f32 %v1239, %v1238
      %v1241 = vmul.f32 0.5, %v1240
      %v1242 = vsub.f32 1.5, %v1241
      %v1243 = vmul.f32 %v1238, %v1242
      %vm1244 = vweird.f32 %v1176
      %vm1245 = vweird.f32 %v1238
      %vm1246 = vmor %vm1244, %vm1245
      %v1247 = vsel %vm1246, %v1238, %v1243
      %v1248 = vrsqrt.pop %v1177
      %v1249 = vmul.f32 %v1248, %v1177
      %v1250 = vmul.f32 %v1249, %v1248
      %v1251 = vmul.f32 0.5, %v1250
      %v1252 = vsub.f32 1.5, %v1251
      %v1253 = vmul.f32 %v1248, %v1252
      %vm1254 = vweird.f32 %v1177
      %vm1255 = vweird.f32 %v1248
      %vm1256 = vmor %vm1254, %vm1255
      %v1257 = vsel %vm1256, %v1248, %v1253
      %v1258 = vmul.f32 %v1122, %v1187
      %v1259 = vmul.f32 %v1123, %v1197
      %v1260 = vmul.f32 %v1124, %v1207
      %v1261 = vmul.f32 %v1125, %v1217
      %v1262 = vmul.f32 %v1126, %v1227
      %v1263 = vmul.f32 %v1127, %v1237
      %v1264 = vmul.f32 %v1128, %v1247
      %v1265 = vmul.f32 %v1129, %v1257
      %v1267 = vperm.slane %v1088, 0
      %v1269 = vmul.f32 %v1258, %v1267
      %v1270 = vmul.f32 %v1259, %v1267
      %v1271 = vmul.f32 %v1260, %v1267
      %v1272 = vmul.f32 %v1261, %v1267
      %v1273 = vmul.f32 %v1262, %v1267
      %v1274 = vmul.f32 %v1263, %v1267
      %v1275 = vmul.f32 %v1264, %v1267
      %v1276 = vmul.f32 %v1265, %v1267
      %v1278 = vperm.slane %v1089, 0
      %v1280 = vadd.f32 %v1269, %v1278
      %v1281 = vadd.f32 %v1270, %v1278
      %v1282 = vadd.f32 %v1271, %v1278
      %v1283 = vadd.f32 %v1272, %v1278
      %v1284 = vadd.f32 %v1273, %v1278
      %v1285 = vadd.f32 %v1274, %v1278
      %v1286 = vadd.f32 %v1275, %v1278
      %v1287 = vadd.f32 %v1276, %v1278
      %v1288 = vadd.f32 %v609, %v1280
      %v1289 = vadd.f32 %v610, %v1281
      %v1290 = vadd.f32 %v611, %v1282
      %v1291 = vadd.f32 %v612, %v1283
      %v1292 = vadd.f32 %v613, %v1284
      %v1293 = vadd.f32 %v614, %v1285
      %v1294 = vadd.f32 %v615, %v1286
      %v1295 = vadd.f32 %v616, %v1287
      %1296 = vst.msk [vmem:[%s383] sm:$0xff] %vm395, %v1288
      %1297 = vst.msk [vmem:[%s383 + $0x8] sm:$0xff] %vm395, %v1289
      %1298 = vst.msk [vmem:[%s383 + $0x10] sm:$0xff] %vm395, %v1290
      %1299 = vst.msk [vmem:[%s383 + $0x18] sm:$0xff] %vm395, %v1291
      %1300 = vst.msk [vmem:[%s383 + $0x20] sm:$0xff] %vm395, %v1292
      %1301 = vst.msk [vmem:[%s383 + $0x28] sm:$0xff] %vm395, %v1293
      %1302 = vst.msk [vmem:[%s383 + $0x30] sm:$0xff] %vm395, %v1294
      %1303 = vst.msk [vmem:[%s383 + $0x38] sm:$0xff] %vm395, %v1295
      %s1304 = smul.u32 8, %s21
      %p1305 = scmp.lt.s32.totalorder %s1304, 15
      %s1306 = scalar_select %p1305, %s1304, 15
      %s1307 = smul.addr %s1306, 8
      %s1308 = scalar_lea.vmem %s10, %s1307
      // Predicated region
      $region61: #{fwd.5} parent=59 // pred_check
        %p1309 = pneg %p259
      $region62: #{fwd.5} parent=59 // pred_check_branch
        %1311 = sbr.rel (%p1309) target = $region64
      $region63: #{fwd.5} parent=59 // pred_region
        %s1312 = smul.u32 8, %s21
      $region64: #{fwd.5} parent=59 // pred_fallthru
        _
    $region60: #{fwd.5} parent=5 // pred_fallthru
      _
    %p1313 = scmp.le.s32.totalorder 2, %s16
    // Predicated region
    $region65: #{fwd.5} parent=5 // pred_check
      %p1314 = pneg %p1313
    $region66: #{fwd.5} parent=5 // pred_check_branch
      %1316 = sbr.rel (%p1314) target = $region68
    $region67: #{fwd.5} parent=5 // pred_region
      %s1317 = ssub.s32 %s16, 2
      // Predicated region
      $region69: #{fwd.5} parent=67 // pred_check
        %p1318 = pneg %p265
      $region70: #{fwd.5} parent=67 // pred_check_branch
        %1320 = sbr.rel (%p1318) target = $region72
      $region71: #{fwd.5} parent=67 // pred_region
        %s1321 = smul.u32 8, %s22
        %p1322 = scmp.lt.s32.totalorder %s1321, 15
        %s1323 = scalar_select %p1322, %s1321, 15
        %s1324 = smul.addr %s1323, 8
        %s1325 = scalar_lea.vmem %s10, %s1324
      $region72: #{fwd.5} parent=67 // pred_fallthru
        _
    $region68: #{fwd.5} parent=5 // pred_fallthru
      _
  $region6: #{fwd.5} parent=0 // loop_footer
    %s20 = sadd.s32 1, %s16
  $region7: #{fwd.5} parent=0 // loop_footer_branch
    %15 = sbr.rel target = $region3
  $region8: #{fwd.5} parent=0 // loop_exit
    _

// kernel: fwd.4
$region0: #{fwd.4}
  #allocation0 [shape = 'u32[]', space=smem, size = 0x4, offset = 0x4, fixed_abs, tag = 'smem constant byte address 0x4 - core index']
  #allocation1 [shape = 'u32[72,128]{1,0:T(1,128)}', space=vmem, size = 0x9000, scoped, tag = 'internal scratch']
  %s0 = inlined_call_operand.vmem [shape: f32[8,16,32], index: 0, kind: input, shape index: {}]
  %s1 = inlined_call_operand.vmem [shape: f32[32,96], index: 1, kind: input, shape index: {}]
  %s2 = inlined_call_operand.vmem [shape: f32[1,96], index: 2, kind: input, shape index: {}]
  %s3 = inlined_call_operand.vmem [shape: f32[2], index: 3, kind: input, shape index: {}]
  %s4 = inlined_call_operand.vmem [shape: f32[2,16,16], index: 4, kind: input, shape index: {}]
  %s5 = inlined_call_operand.vmem [shape: f32[32,32], index: 5, kind: input, shape index: {}]
  %s6 = inlined_call_operand.vmem [shape: f32[1,32], index: 6, kind: input, shape index: {}]
  %s7 = inlined_call_operand.vmem [shape: f32[128,32], index: 7, kind: output, shape index: {}]
  %s8 = sld [smem:[#allocation0]]
  $region65: #{fwd.4} parent=0
    _
  %s10 = ssub.s32 1, %s8
  %s11 = scalar_select 0, %s10, %s8
  $region1: #{fwd.4} parent=0
    #allocation2 [shape = 'u8[512]{0}', space=smem, size = 0x200, scoped, tag = 'input window, operand 3, single buffered']
    #allocation3 [shape = 's32[2]{0}', space=sflag, size = 0x8, scoped, tag = 'scoped memory for fwd.4']
    %12 = vsyncpa [#allocation3], 0
    loop: start=0, step=1, limit=4
    $region2: #{fwd.4} parent=1 // loop_pre_header
      _
    $region3: #{fwd.4} parent=1 // loop_header
      %s14 = sphi 0, %s18
      %p15 = scmp.ge.s32.totalorder %s14, 4
      %s24 = sphi 0, %s26
      %s27 = sphi 0, %s24
      %s28 = sphi 0, %s27
      %s44 = sphi 0, %s28
      %s48 = sphi 0, %s48
      %s50 = sphi 0, %s48
      %s51 = sphi 0, %s50
      %s65 = sphi 0, %s51
      %s69 = sphi 0, %s69
      %s71 = sphi 0, %s69
      %s72 = sphi 0, %s71
      %s86 = sphi 0, %s72
      %s90 = sphi 0, %s90
      %s92 = sphi 0, %s90
      %s93 = sphi 0, %s92
      %s107 = sphi 0, %s93
      %s111 = sphi 0, %s111
      %s113 = sphi 0, %s111
      %s114 = sphi 0, %s113
      %s128 = sphi 0, %s114
      %s132 = sphi 0, %s132
      %s134 = sphi 0, %s132
      %s135 = sphi 0, %s134
      %s149 = sphi 0, %s135
      %s153 = sphi 0, %s153
      %s155 = sphi 0, %s153
      %s156 = sphi 0, %s155
      %s170 = sphi 0, %s156
      %s176 = sphi 0, %s178
      %s179 = sphi 0, %s176
      %s180 = sphi 0, %s179
      %s196 = sphi 0, %s180
    $region4: #{fwd.4} parent=1 // loop_header_branch
      %17 = sbr.rel (%p15) target = $region8
    $region5: #{fwd.4} parent=1 // loop_body
      %s19 = ssub.s32 %s14, 1
      %s20 = ssub.s32 %s14, 2
      %s21 = sadd.s32 %s14, 1
      %s22 = ssub.s32 %s14, %s21
      %p23 = scmp.eq.s32.totalorder %s22, 0
      %s25 = sadd.s32 %s24, 1
      %s26 = scalar_select %p23, %s24, %s25
      %p29 = pneg %p23
      %p30 = scmp.eq.s32.totalorder %s14, 1
      %p31 = por %p29, %p30
      %p32 = scmp.ne.s32.totalorder %s24, %s27
      %p33 = scmp.eq.s32.totalorder %s14, 0
      %p34 = por %p32, %p33
      %p35 = scmp.ne.s32.totalorder %s24, %s27
      %p36 = scmp.eq.s32.totalorder %s19, 1
      %p37 = por %p35, %p36
      %p38 = scmp.ne.s32.totalorder %s27, %s28
      %p39 = scmp.eq.s32.totalorder %s19, 0
      %p40 = por %p38, %p39
      %p41 = scmp.ne.s32.totalorder %s27, %s28
      %p42 = scmp.eq.s32.totalorder %s20, 1
      %p43 = por %p41, %p42
      %p45 = scmp.ne.s32.totalorder %s28, %s44
      %p46 = scmp.eq.s32.totalorder %s20, 0
      %p47 = por %p45, %p46
      %s49 = sadd.s32 %s48, 1
      %p52 = scmp.eq.s32.totalorder %s14, 1
      %p53 = scmp.ne.s32.totalorder %s48, %s50
      %p54 = scmp.eq.s32.totalorder %s14, 0
      %p55 = por %p53, %p54
      %p56 = scmp.ne.s32.totalorder %s48, %s50
      %p57 = scmp.eq.s32.totalorder %s19, 1
      %p58 = por %p56, %p57
      %p59 = scmp.ne.s32.totalorder %s50, %s51
      %p60 = scmp.eq.s32.totalorder %s19, 0
      %p61 = por %p59, %p60
      %p62 = scmp.ne.s32.totalorder %s50, %s51
      %p63 = scmp.eq.s32.totalorder %s20, 1
      %p64 = por %p62, %p63
      %p66 = scmp.ne.s32.totalorder %s51, %s65
      %p67 = scmp.eq.s32.totalorder %s20, 0
      %p68 = por %p66, %p67
      %s70 = sadd.s32 %s69, 1
      %p73 = scmp.eq.s32.totalorder %s14, 1
      %p74 = scmp.ne.s32.totalorder %s69, %s71
      %p75 = scmp.eq.s32.totalorder %s14, 0
      %p76 = por %p74, %p75
      %p77 = scmp.ne.s32.totalorder %s69, %s71
      %p78 = scmp.eq.s32.totalorder %s19, 1
      %p79 = por %p77, %p78
      %p80 = scmp.ne.s32.totalorder %s71, %s72
      %p81 = scmp.eq.s32.totalorder %s19, 0
      %p82 = por %p80, %p81
      %p83 = scmp.ne.s32.totalorder %s71, %s72
      %p84 = scmp.eq.s32.totalorder %s20, 1
      %p85 = por %p83, %p84
      %p87 = scmp.ne.s32.totalorder %s72, %s86
      %p88 = scmp.eq.s32.totalorder %s20, 0
      %p89 = por %p87, %p88
      %s91 = sadd.s32 %s90, 1
      %p94 = scmp.eq.s32.totalorder %s14, 1
      %p95 = scmp.ne.s32.totalorder %s90, %s92
      %p96 = scmp.eq.s32.totalorder %s14, 0
      %p97 = por %p95, %p96
      %p98 = scmp.ne.s32.totalorder %s90, %s92
      %p99 = scmp.eq.s32.totalorder %s19, 1
      %p100 = por %p98, %p99
      %p101 = scmp.ne.s32.totalorder %s92, %s93
      %p102 = scmp.eq.s32.totalorder %s19, 0
      %p103 = por %p101, %p102
      %p104 = scmp.ne.s32.totalorder %s92, %s93
      %p105 = scmp.eq.s32.totalorder %s20, 1
      %p106 = por %p104, %p105
      %p108 = scmp.ne.s32.totalorder %s93, %s107
      %p109 = scmp.eq.s32.totalorder %s20, 0
      %p110 = por %p108, %p109
      %s112 = sadd.s32 %s111, 1
      %p115 = scmp.eq.s32.totalorder %s14, 1
      %p116 = scmp.ne.s32.totalorder %s111, %s113
      %p117 = scmp.eq.s32.totalorder %s14, 0
      %p118 = por %p116, %p117
      %p119 = scmp.ne.s32.totalorder %s111, %s113
      %p120 = scmp.eq.s32.totalorder %s19, 1
      %p121 = por %p119, %p120
      %p122 = scmp.ne.s32.totalorder %s113, %s114
      %p123 = scmp.eq.s32.totalorder %s19, 0
      %p124 = por %p122, %p123
      %p125 = scmp.ne.s32.totalorder %s113, %s114
      %p126 = scmp.eq.s32.totalorder %s20, 1
      %p127 = por %p125, %p126
      %p129 = scmp.ne.s32.totalorder %s114, %s128
      %p130 = scmp.eq.s32.totalorder %s20, 0
      %p131 = por %p129, %p130
      %s133 = sadd.s32 %s132, 1
      %p136 = scmp.eq.s32.totalorder %s14, 1
      %p137 = scmp.ne.s32.totalorder %s132, %s134
      %p138 = scmp.eq.s32.totalorder %s14, 0
      %p139 = por %p137, %p138
      %p140 = scmp.ne.s32.totalorder %s132, %s134
      %p141 = scmp.eq.s32.totalorder %s19, 1
      %p142 = por %p140, %p141
      %p143 = scmp.ne.s32.totalorder %s134, %s135
      %p144 = scmp.eq.s32.totalorder %s19, 0
      %p145 = por %p143, %p144
      %p146 = scmp.ne.s32.totalorder %s134, %s135
      %p147 = scmp.eq.s32.totalorder %s20, 1
      %p148 = por %p146, %p147
      %p150 = scmp.ne.s32.totalorder %s135, %s149
      %p151 = scmp.eq.s32.totalorder %s20, 0
      %p152 = por %p150, %p151
      %s154 = sadd.s32 %s153, 1
      %p157 = scmp.eq.s32.totalorder %s14, 1
      %p158 = scmp.ne.s32.totalorder %s153, %s155
      %p159 = scmp.eq.s32.totalorder %s14, 0
      %p160 = por %p158, %p159
      %p161 = scmp.ne.s32.totalorder %s153, %s155
      %p162 = scmp.eq.s32.totalorder %s19, 1
      %p163 = por %p161, %p162
      %p164 = scmp.ne.s32.totalorder %s155, %s156
      %p165 = scmp.eq.s32.totalorder %s19, 0
      %p166 = por %p164, %p165
      %p167 = scmp.ne.s32.totalorder %s155, %s156
      %p168 = scmp.eq.s32.totalorder %s20, 1
      %p169 = por %p167, %p168
      %p171 = scmp.ne.s32.totalorder %s156, %s170
      %p172 = scmp.eq.s32.totalorder %s20, 0
      %p173 = por %p171, %p172
      %s174 = ssub.s32 %s14, %s21
      %p175 = scmp.eq.s32.totalorder %s174, 0
      %s177 = sadd.s32 %s176, 1
      %s178 = scalar_select %p175, %s176, %s177
      %p181 = pneg %p175
      %p182 = scmp.eq.s32.totalorder %s14, 1
      %p183 = por %p181, %p182
      %p184 = scmp.ne.s32.totalorder %s176, %s179
      %p185 = scmp.eq.s32.totalorder %s14, 0
      %p186 = por %p184, %p185
      %p187 = scmp.ne.s32.totalorder %s176, %s179
      %p188 = scmp.eq.s32.totalorder %s19, 1
      %p189 = por %p187, %p188
      %p190 = scmp.ne.s32.totalorder %s179, %s180
      %p191 = scmp.eq.s32.totalorder %s19, 0
      %p192 = por %p190, %p191
      %p193 = scmp.ne.s32.totalorder %s179, %s180
      %p194 = scmp.eq.s32.totalorder %s20, 1
      %p195 = por %p193, %p194
      %p197 = scmp.ne.s32.totalorder %s180, %s196
      %p198 = scmp.eq.s32.totalorder %s20, 0
      %p199 = por %p197, %p198
      %p200 = scmp.le.s32.totalorder 1, %s14
      %p201 = scmp.lt.s32.totalorder %s14, 3
      %p202 = pnand %p200, %p201
      %p203 = pneg %p202
      // Predicated region
      $region9: #{fwd.4} parent=5 // pred_check
        _
      $region10: #{fwd.4} parent=5 // pred_check_branch
        %205 = sbr.rel (%p202) target = $region12
      $region11: #{fwd.4} parent=5 // pred_region
        %s206 = ssub.s32 %s14, 1
        // Predicated region
        $region13: #{fwd.4} parent=11 // pred_check
          %p207 = pneg %p61
        $region14: #{fwd.4} parent=11 // pred_check_branch
          %209 = sbr.rel (%p207) target = $region16
        $region15: #{fwd.4} parent=11 // pred_region
          _
        $region16: #{fwd.4} parent=11 // pred_fallthru
          _
        // Predicated region
        $region17: #{fwd.4} parent=11 // pred_check
          %p210 = pneg %p82
        $region18: #{fwd.4} parent=11 // pred_check_branch
          %212 = sbr.rel (%p210) target = $region20
        $region19: #{fwd.4} parent=11 // pred_region
          _
        $region20: #{fwd.4} parent=11 // pred_fallthru
          _
        // Predicated region
        $region21: #{fwd.4} parent=11 // pred_check
          %p213 = pneg %p103
        $region22: #{fwd.4} parent=11 // pred_check_branch
          %215 = sbr.rel (%p213) target = $region24
        $region23: #{fwd.4} parent=11 // pred_region
          %217 = vsyncadd [#allocation3], 0
          %s219 = sshll.u32 %s3, 4
          %s220 = int_to_ptr.vmem [resolvable:$true] %s219
          %222 = dma.vmem_to_smem %s220, 16, [#allocation2], [#allocation3]
        $region24: #{fwd.4} parent=11 // pred_fallthru
          _
        // Predicated region
        $region25: #{fwd.4} parent=11 // pred_check
          %p223 = pneg %p124
        $region26: #{fwd.4} parent=11 // pred_check_branch
          %225 = sbr.rel (%p223) target = $region28
        $region27: #{fwd.4} parent=11 // pred_region
          _
        $region28: #{fwd.4} parent=11 // pred_fallthru
          _
        // Predicated region
        $region29: #{fwd.4} parent=11 // pred_check
          %p226 = pneg %p145
        $region30: #{fwd.4} parent=11 // pred_check_branch
          %228 = sbr.rel (%p226) target = $region32
        $region31: #{fwd.4} parent=11 // pred_region
          _
        $region32: #{fwd.4} parent=11 // pred_fallthru
          _
        // Predicated region
        $region33: #{fwd.4} parent=11 // pred_check
          %p229 = pneg %p166
        $region34: #{fwd.4} parent=11 // pred_check_branch
          %231 = sbr.rel (%p229) target = $region36
        $region35: #{fwd.4} parent=11 // pred_region
          _
        $region36: #{fwd.4} parent=11 // pred_fallthru
          _
      $region12: #{fwd.4} parent=5 // pred_fallthru
        _
      %p232 = scmp.lt.s32.totalorder %s14, 2
      // Predicated region
      $region37: #{fwd.4} parent=5 // pred_check
        %p233 = pneg %p232
      $region38: #{fwd.4} parent=5 // pred_check_branch
        %235 = sbr.rel (%p233) target = $region40
      $region39: #{fwd.4} parent=5 // pred_region
        // Predicated region
        $region41: #{fwd.4} parent=39 // pred_check
          %p236 = pneg %p34
        $region42: #{fwd.4} parent=39 // pred_check_branch
          %238 = sbr.rel (%p236) target = $region44
        $region43: #{fwd.4} parent=39 // pred_region
          %s239 = smul.u32 4, %s14
          %p240 = scmp.lt.s32.totalorder %s239, 7
          %s241 = scalar_select %p240, %s239, 7
          %s242 = smul.addr %s241, 2
          %s243 = smul.addr %s242, 8
          %s244 = scalar_lea.vmem %s0, %s243
          %s245 = smul.u32 4, %s14
        $region44: #{fwd.4} parent=39 // pred_fallthru
          _
      $region40: #{fwd.4} parent=5 // pred_fallthru
        _
      %p246 = scmp.le.s32.totalorder 1, %s14
      %p247 = scmp.lt.s32.totalorder %s14, 3
      %p248 = pnand %p246, %p247
      %p249 = pneg %p248
      // Predicated region
      $region45: #{fwd.4} parent=5 // pred_check
        _
      $region46: #{fwd.4} parent=5 // pred_check_branch
        %251 = sbr.rel (%p248) target = $region48
      $region47: #{fwd.4} parent=5 // pred_region
        %s252 = ssub.s32 %s14, 1
        // Predicated region
        $region49: #{fwd.4} parent=47 // pred_check
          %p253 = pneg %p103
        $region50: #{fwd.4} parent=47 // pred_check_branch
          %255 = sbr.rel (%p253) target = $region52
        $region51: #{fwd.4} parent=47 // pred_region
          %257 = dma.done [#allocation3], 16
        $region52: #{fwd.4} parent=47 // pred_fallthru
          _
        %258 = sfence
        %s259 = smul.u32 4, %s19
        %p260 = scmp.lt.s32.totalorder %s259, 7
        %s261 = scalar_select %p260, %s259, 7
        %s262 = smul.addr %s261, 2
        %s263 = smul.addr %s262, 8
        %s264 = scalar_lea.vmem %s0, %s263
        %p265 = pneg %p40
        %p266 = pneg %p37
        %p267 = pneg %p61
        %p268 = pneg %p58
        %p269 = pneg %p82
        %p270 = pneg %p79
        %p271 = pneg %p103
        %p272 = pneg %p100
        %p273 = pneg %p124
        %p274 = pneg %p121
        %p275 = pneg %p145
        %p276 = pneg %p142
        %p277 = pneg %p166
        %p278 = pneg %p163
        %p279 = pneg %p192
        %p280 = pneg %p189
        %s281 = smul.u32 8, %s19
        %p282 = scmp.lt.s32.totalorder %s281, 15
        %s283 = scalar_select %p282, %s281, 15
        %s284 = smul.addr %s283, 8
        %s285 = scalar_lea.vmem %s7, %s284
        %s286 = smul.u32 4, %s19
        %p287 = scmp.lt.s32.totalorder %s286, 7
        %s288 = scalar_select %p287, %s286, 7
        %s289 = smul.addr %s288, 2
        %s290 = smul.addr %s289, 8
        %s291 = scalar_lea.vmem %s0, %s290
        %s292 = smul.u32 4, %s19
        %s293 = smul.u32 8, %s19
        %p294 = scmp.lt.s32.totalorder %s293, 15
        %s295 = scalar_select %p294, %s293, 15
        %s296 = smul.addr %s295, 8
        %s297 = scalar_lea.vmem %s7, %s296
        %s298 = smul.u32 8, %s19
        %v299 = vld [vmem:[%s291] sm:$0xff]
        %v300 = vld [vmem:[%s291 + $0x8] sm:$0xff]
        %v301 = vld [vmem:[%s291 + $0x10] sm:$0xff]
        %v302 = vld [vmem:[%s291 + $0x18] sm:$0xff]
        %v303 = vld [vmem:[%s291 + $0x20] sm:$0xff]
        %v304 = vld [vmem:[%s291 + $0x28] sm:$0xff]
        %v305 = vld [vmem:[%s291 + $0x30] sm:$0xff]
        %v306 = vld [vmem:[%s291 + $0x38] sm:$0xff]
        %v307 = vld [vmem:[%s1] sm:$0xff]
        %v308 = vld [vmem:[%s1 + $0x8] sm:$0xff]
        %v309 = vld [vmem:[%s1 + $0x10] sm:$0xff]
        %v310 = vld [vmem:[%s1 + $0x18] sm:$0xff]
        %v311 = vld [vmem:[%s2] sm:$0x1]
        %v313 = vperm.slane %v311, 0
        %vm315 = vcmask 261120
        %v317 = vsel %vm315, %v299, 0
        %v320 = vsel %vm315, %v300, 0
        %v323 = vsel %vm315, %v301, 0
        %v326 = vsel %vm315, %v302, 0
        %v329 = vsel %vm315, %v303, 0
        %v332 = vsel %vm315, %v304, 0
        %v335 = vsel %vm315, %v305, 0
        %v338 = vsel %vm315, %v306, 0
        %340 = vmatpush.msra.mxu0 0.0
        %341 = vmatpush.msra.mxu0 0.0
        %342 = vmatpush.msra.mxu0 0.0
        %343 = vmatpush.msra.mxu0 0.0
        %344 = vmatpush.msra.mxu0 0.0
        %345 = vmatpush.msra.mxu0 0.0
        %346 = vmatpush.msra.mxu0 0.0
        %347 = vmatpush.msra.mxu0 0.0
        %348 = vmatpush.msra.mxu0 0.0
        %349 = vmatpush.msra.mxu0 0.0
        %350 = vmatpush.msra.mxu0 0.0
        %351 = vmatpush.msra.mxu0 0.0
        %352 = vmatpush.msra.mxu0 %v310
        %353 = vmatpush.msra.mxu0 %v309
        %354 = vmatpush.msra.mxu0 %v308
        %355 = vmatpush.msra.mxu0 %v307
        %356 = vmatmul.f32.gmra.mxu0 %v317
        %v357 = vpop.f32.mrf.mxu0
        %v358 = vadd.f32 %v313, %v357
        %359 = vmatmul.f32.gmra.mxu0 %v320
        %v360 = vpop.f32.mrf.mxu0
        %v361 = vadd.f32 %v313, %v360
        %362 = vmatmul.f32.gmra.mxu0 %v323
        %v363 = vpop.f32.mrf.mxu0
        %v364 = vadd.f32 %v313, %v363
        %365 = vmatmul.f32.gmra.mxu0 %v326
        %v366 = vpop.f32.mrf.mxu0
        %v367 = vadd.f32 %v313, %v366
        %368 = vmatmul.f32.gmra.mxu0 %v329
        %v369 = vpop.f32.mrf.mxu0
        %v370 = vadd.f32 %v313, %v369
        %371 = vmatmul.f32.gmra.mxu0 %v332
        %v372 = vpop.f32.mrf.mxu0
        %v373 = vadd.f32 %v313, %v372
        %374 = vmatmul.f32.gmra.mxu0 %v335
        %v375 = vpop.f32.mrf.mxu0
        %v376 = vadd.f32 %v313, %v375
        %377 = vmatmul.f32.gmra.mxu0 %v338
        %v378 = vpop.f32.mrf.mxu0
        %v379 = vadd.f32 %v313, %v378
        %380 = vdwg.mxu0
        %v381 = vld [vmem:[%s5] sm:$0xff]
        %v382 = vld [vmem:[%s5 + $0x8] sm:$0xff]
        %v383 = vld [vmem:[%s5 + $0x10] sm:$0xff]
        %v384 = vld [vmem:[%s5 + $0x18] sm:$0xff]
        %v385 = vmul.f32 %v358, %v358
        %v386 = vmul.f32 %v361, %v361
        %v387 = vmul.f32 %v364, %v364
        %v388 = vmul.f32 %v367, %v367
        %v389 = vmul.f32 %v370, %v370
        %v390 = vmul.f32 %v373, %v373
        %v391 = vmul.f32 %v376, %v376
        %v392 = vmul.f32 %v379, %v379
        %vm393 = vcmask 130048
        %v394 = vsel %vm393, %v385, 0.0
        %395 = vadd.xlane.f32.xlu0 %v394
        %v396 = vpop.xlane.xlu0 %395
        %v397 = vsel %vm393, %v386, 0.0
        %398 = vadd.xlane.f32.xlu0 %v397
        %v399 = vpop.xlane.xlu0 %398
        %v400 = vsel %vm393, %v387, 0.0
        %401 = vadd.xlane.f32.xlu0 %v400
        %v402 = vpop.xlane.xlu0 %401
        %v403 = vsel %vm393, %v388, 0.0
        %404 = vadd.xlane.f32.xlu0 %v403
        %v405 = vpop.xlane.xlu0 %404
        %v406 = vsel %vm393, %v389, 0.0
        %407 = vadd.xlane.f32.xlu0 %v406
        %v408 = vpop.xlane.xlu0 %407
        %v409 = vsel %vm393, %v390, 0.0
        %410 = vadd.xlane.f32.xlu0 %v409
        %v411 = vpop.xlane.xlu0 %410
        %v412 = vsel %vm393, %v391, 0.0
        %413 = vadd.xlane.f32.xlu0 %v412
        %v414 = vpop.xlane.xlu0 %413
        %v415 = vsel %vm393, %v392, 0.0
        %416 = vadd.xlane.f32.xlu0 %v415
        %v417 = vpop.xlane.xlu0 %416
        %v418 = vmax.f32 %v396, 1e-24
        %v419 = vmax.f32 %v399, 1e-24
        %v420 = vmax.f32 %v402, 1e-24
        %v421 = vmax.f32 %v405, 1e-24
        %v422 = vmax.f32 %v408, 1e-24
        %v423 = vmax.f32 %v411, 1e-24
        %v424 = vmax.f32 %v414, 1e-24
        %v425 = vmax.f32 %v417, 1e-24
        %v426 = vrsqrt.pop %v418
        %v427 = vmul.f32 %v426, %v418
        %v428 = vmul.f32 %v427, %v426
        %v429 = vmul.f32 0.5, %v428
        %v430 = vsub.f32 1.5, %v429
        %v431 = vmul.f32 %v426, %v430
        %vm432 = vweird.f32 %v418
        %vm433 = vweird.f32 %v426
        %vm434 = vmor %vm432, %vm433
        %v435 = vsel %vm434, %v426, %v431
        %v436 = vrsqrt.pop %v419
        %v437 = vmul.f32 %v436, %v419
        %v438 = vmul.f32 %v437, %v436
        %v439 = vmul.f32 0.5, %v438
        %v440 = vsub.f32 1.5, %v439
        %v441 = vmul.f32 %v436, %v440
        %vm442 = vweird.f32 %v419
        %vm443 = vweird.f32 %v436
        %vm444 = vmor %vm442, %vm443
        %v445 = vsel %vm444, %v436, %v441
        %v446 = vrsqrt.pop %v420
        %v447 = vmul.f32 %v446, %v420
        %v448 = vmul.f32 %v447, %v446
        %v449 = vmul.f32 0.5, %v448
        %v450 = vsub.f32 1.5, %v449
        %v451 = vmul.f32 %v446, %v450
        %vm452 = vweird.f32 %v420
        %vm453 = vweird.f32 %v446
        %vm454 = vmor %vm452, %vm453
        %v455 = vsel %vm454, %v446, %v451
        %v456 = vrsqrt.pop %v421
        %v457 = vmul.f32 %v456, %v421
        %v458 = vmul.f32 %v457, %v456
        %v459 = vmul.f32 0.5, %v458
        %v460 = vsub.f32 1.5, %v459
        %v461 = vmul.f32 %v456, %v460
        %vm462 = vweird.f32 %v421
        %vm463 = vweird.f32 %v456
        %vm464 = vmor %vm462, %vm463
        %v465 = vsel %vm464, %v456, %v461
        %v466 = vrsqrt.pop %v422
        %v467 = vmul.f32 %v466, %v422
        %v468 = vmul.f32 %v467, %v466
        %v469 = vmul.f32 0.5, %v468
        %v470 = vsub.f32 1.5, %v469
        %v471 = vmul.f32 %v466, %v470
        %vm472 = vweird.f32 %v422
        %vm473 = vweird.f32 %v466
        %vm474 = vmor %vm472, %vm473
        %v475 = vsel %vm474, %v466, %v471
        %v476 = vrsqrt.pop %v423
        %v477 = vmul.f32 %v476, %v423
        %v478 = vmul.f32 %v477, %v476
        %v479 = vmul.f32 0.5, %v478
        %v480 = vsub.f32 1.5, %v479
        %v481 = vmul.f32 %v476, %v480
        %vm482 = vweird.f32 %v423
        %vm483 = vweird.f32 %v476
        %vm484 = vmor %vm482, %vm483
        %v485 = vsel %vm484, %v476, %v481
        %v486 = vrsqrt.pop %v424
        %v487 = vmul.f32 %v486, %v424
        %v488 = vmul.f32 %v487, %v486
        %v489 = vmul.f32 0.5, %v488
        %v490 = vsub.f32 1.5, %v489
        %v491 = vmul.f32 %v486, %v490
        %vm492 = vweird.f32 %v424
        %vm493 = vweird.f32 %v486
        %vm494 = vmor %vm492, %vm493
        %v495 = vsel %vm494, %v486, %v491
        %v496 = vrsqrt.pop %v425
        %v497 = vmul.f32 %v496, %v425
        %v498 = vmul.f32 %v497, %v496
        %v499 = vmul.f32 0.5, %v498
        %v500 = vsub.f32 1.5, %v499
        %v501 = vmul.f32 %v496, %v500
        %vm502 = vweird.f32 %v425
        %vm503 = vweird.f32 %v496
        %vm504 = vmor %vm502, %vm503
        %v505 = vsel %vm504, %v496, %v501
        %v506 = vmul.f32 %v358, %v435
        %v507 = vmul.f32 %v361, %v445
        %v508 = vmul.f32 %v364, %v455
        %v509 = vmul.f32 %v367, %v465
        %v510 = vmul.f32 %v370, %v475
        %v511 = vmul.f32 %v373, %v485
        %v512 = vmul.f32 %v376, %v495
        %v513 = vmul.f32 %v379, %v505
        %522 = vrot.lane.b32.xlu0 %v385, 96
        %v523 = vpop.permute.xlu0 %522
        %524 = vrot.lane.b32.xlu0 %v386, 96
        %v525 = vpop.permute.xlu0 %524
        %526 = vrot.lane.b32.xlu0 %v387, 96
        %v527 = vpop.permute.xlu0 %526
        %528 = vrot.lane.b32.xlu0 %v388, 96
        %v529 = vpop.permute.xlu0 %528
        %530 = vrot.lane.b32.xlu0 %v389, 96
        %v531 = vpop.permute.xlu0 %530
        %532 = vrot.lane.b32.xlu0 %v390, 96
        %v533 = vpop.permute.xlu0 %532
        %534 = vrot.lane.b32.xlu0 %v391, 96
        %v535 = vpop.permute.xlu0 %534
        %536 = vrot.lane.b32.xlu0 %v392, 96
        %v537 = vpop.permute.xlu0 %536
        %v546 = vsel %vm393, %v523, 0.0
        %547 = vadd.xlane.f32.xlu0 %v546
        %v548 = vpop.xlane.xlu0 %547
        %v549 = vsel %vm393, %v525, 0.0
        %550 = vadd.xlane.f32.xlu0 %v549
        %v551 = vpop.xlane.xlu0 %550
        %v552 = vsel %vm393, %v527, 0.0
        %553 = vadd.xlane.f32.xlu0 %v552
        %v554 = vpop.xlane.xlu0 %553
        %v555 = vsel %vm393, %v529, 0.0
        %556 = vadd.xlane.f32.xlu0 %v555
        %v557 = vpop.xlane.xlu0 %556
        %v558 = vsel %vm393, %v531, 0.0
        %559 = vadd.xlane.f32.xlu0 %v558
        %v560 = vpop.xlane.xlu0 %559
        %v561 = vsel %vm393, %v533, 0.0
        %562 = vadd.xlane.f32.xlu0 %v561
        %v563 = vpop.xlane.xlu0 %562
        %v564 = vsel %vm393, %v535, 0.0
        %565 = vadd.xlane.f32.xlu0 %v564
        %v566 = vpop.xlane.xlu0 %565
        %v567 = vsel %vm393, %v537, 0.0
        %568 = vadd.xlane.f32.xlu0 %v567
        %v569 = vpop.xlane.xlu0 %568
        %v570 = vmax.f32 %v548, 1e-24
        %v571 = vmax.f32 %v551, 1e-24
        %v572 = vmax.f32 %v554, 1e-24
        %v573 = vmax.f32 %v557, 1e-24
        %v574 = vmax.f32 %v560, 1e-24
        %v575 = vmax.f32 %v563, 1e-24
        %v576 = vmax.f32 %v566, 1e-24
        %v577 = vmax.f32 %v569, 1e-24
        %v578 = vrsqrt.pop %v570
        %v579 = vmul.f32 %v578, %v570
        %v580 = vmul.f32 %v579, %v578
        %v581 = vmul.f32 0.5, %v580
        %v582 = vsub.f32 1.5, %v581
        %v583 = vmul.f32 %v578, %v582
        %vm584 = vweird.f32 %v570
        %vm585 = vweird.f32 %v578
        %vm586 = vmor %vm584, %vm585
        %v587 = vsel %vm586, %v578, %v583
        %v588 = vrsqrt.pop %v571
        %v589 = vmul.f32 %v588, %v571
        %v590 = vmul.f32 %v589, %v588
        %v591 = vmul.f32 0.5, %v590
        %v592 = vsub.f32 1.5, %v591
        %v593 = vmul.f32 %v588, %v592
        %vm594 = vweird.f32 %v571
        %vm595 = vweird.f32 %v588
        %vm596 = vmor %vm594, %vm595
        %v597 = vsel %vm596, %v588, %v593
        %v598 = vrsqrt.pop %v572
        %v599 = vmul.f32 %v598, %v572
        %v600 = vmul.f32 %v599, %v598
        %v601 = vmul.f32 0.5, %v600
        %v602 = vsub.f32 1.5, %v601
        %v603 = vmul.f32 %v598, %v602
        %vm604 = vweird.f32 %v572
        %vm605 = vweird.f32 %v598
        %vm606 = vmor %vm604, %vm605
        %v607 = vsel %vm606, %v598, %v603
        %v608 = vrsqrt.pop %v573
        %v609 = vmul.f32 %v608, %v573
        %v610 = vmul.f32 %v609, %v608
        %v611 = vmul.f32 0.5, %v610
        %v612 = vsub.f32 1.5, %v611
        %v613 = vmul.f32 %v608, %v612
        %vm614 = vweird.f32 %v573
        %vm615 = vweird.f32 %v608
        %vm616 = vmor %vm614, %vm615
        %v617 = vsel %vm616, %v608, %v613
        %v618 = vrsqrt.pop %v574
        %v619 = vmul.f32 %v618, %v574
        %v620 = vmul.f32 %v619, %v618
        %v621 = vmul.f32 0.5, %v620
        %v622 = vsub.f32 1.5, %v621
        %v623 = vmul.f32 %v618, %v622
        %vm624 = vweird.f32 %v574
        %vm625 = vweird.f32 %v618
        %vm626 = vmor %vm624, %vm625
        %v627 = vsel %vm626, %v618, %v623
        %v628 = vrsqrt.pop %v575
        %v629 = vmul.f32 %v628, %v575
        %v630 = vmul.f32 %v629, %v628
        %v631 = vmul.f32 0.5, %v630
        %v632 = vsub.f32 1.5, %v631
        %v633 = vmul.f32 %v628, %v632
        %vm634 = vweird.f32 %v575
        %vm635 = vweird.f32 %v628
        %vm636 = vmor %vm634, %vm635
        %v637 = vsel %vm636, %v628, %v633
        %v638 = vrsqrt.pop %v576
        %v639 = vmul.f32 %v638, %v576
        %v640 = vmul.f32 %v639, %v638
        %v641 = vmul.f32 0.5, %v640
        %v642 = vsub.f32 1.5, %v641
        %v643 = vmul.f32 %v638, %v642
        %vm644 = vweird.f32 %v576
        %vm645 = vweird.f32 %v638
        %vm646 = vmor %vm644, %vm645
        %v647 = vsel %vm646, %v638, %v643
        %v648 = vrsqrt.pop %v577
        %v649 = vmul.f32 %v648, %v577
        %v650 = vmul.f32 %v649, %v648
        %v651 = vmul.f32 0.5, %v650
        %v652 = vsub.f32 1.5, %v651
        %v653 = vmul.f32 %v648, %v652
        %vm654 = vweird.f32 %v577
        %vm655 = vweird.f32 %v648
        %vm656 = vmor %vm654, %vm655
        %v657 = vsel %vm656, %v648, %v653
        %v658 = vmul.f32 %v358, %v587
        %v659 = vmul.f32 %v361, %v597
        %v660 = vmul.f32 %v364, %v607
        %v661 = vmul.f32 %v367, %v617
        %v662 = vmul.f32 %v370, %v627
        %v663 = vmul.f32 %v373, %v637
        %v664 = vmul.f32 %v376, %v647
        %v665 = vmul.f32 %v379, %v657
        %668 = vrot.lane.b32.xlu0 %v658, 96
        %v669 = vpop.permute.xlu0 %668
        %670 = vrot.lane.b32.xlu0 %v659, 96
        %v671 = vpop.permute.xlu0 %670
        %v673 = vsel %vm393, %v506, 0
        %v676 = vsel %vm393, %v507, 0
        %v678 = vsel %vm393, %v669, 0
        %v680 = vsel %vm393, %v671, 0
        %682 = vmatpush.xpose.msra.mxu0 0.0
        %683 = vmatpush.xpose.msra.mxu0 0.0
        %684 = vmatpush.xpose.msra.mxu0 0.0
        %685 = vmatpush.xpose.msra.mxu0 0.0
        %686 = vmatpush.xpose.msra.mxu0 0.0
        %687 = vmatpush.xpose.msra.mxu0 0.0
        %688 = vmatpush.xpose.msra.mxu0 0.0
        %689 = vmatpush.xpose.msra.mxu0 0.0
        %690 = vmatpush.xpose.msra.mxu0 0.0
        %691 = vmatpush.xpose.msra.mxu0 0.0
        %692 = vmatpush.xpose.msra.mxu0 0.0
        %693 = vmatpush.xpose.msra.mxu0 0.0
        %694 = vmatpush.xpose.msra.mxu0 0.0
        %695 = vmatpush.xpose.msra.mxu0 0.0
        %696 = vmatpush.xpose.msra.mxu0 %v680
        %697 = vmatpush.xpose.msra.mxu0 %v678
        %698 = vmatmul.f32.gmra.mxu0 %v673
        %v699 = vpop.f32.mrf.mxu0
        %v700 = vadd.f32 0.0, %v699
        %701 = vmatmul.f32.gmra.mxu0 %v676
        %v702 = vpop.f32.mrf.mxu0
        %v703 = vadd.f32 0.0, %v702
        %704 = vdwg.mxu0
        %707 = vrot.lane.b32.xlu0 %v660, 96
        %v708 = vpop.permute.xlu0 %707
        %709 = vrot.lane.b32.xlu0 %v661, 96
        %v710 = vpop.permute.xlu0 %709
        %v712 = vsel %vm393, %v508, 0
        %v715 = vsel %vm393, %v509, 0
        %v717 = vsel %vm393, %v708, 0
        %v719 = vsel %vm393, %v710, 0
        %721 = vmatpush.xpose.msra.mxu0 0.0
        %722 = vmatpush.xpose.msra.mxu0 0.0
        %723 = vmatpush.xpose.msra.mxu0 0.0
        %724 = vmatpush.xpose.msra.mxu0 0.0
        %725 = vmatpush.xpose.msra.mxu0 0.0
        %726 = vmatpush.xpose.msra.mxu0 0.0
        %727 = vmatpush.xpose.msra.mxu0 0.0
        %728 = vmatpush.xpose.msra.mxu0 0.0
        %729 = vmatpush.xpose.msra.mxu0 0.0
        %730 = vmatpush.xpose.msra.mxu0 0.0
        %731 = vmatpush.xpose.msra.mxu0 0.0
        %732 = vmatpush.xpose.msra.mxu0 0.0
        %733 = vmatpush.xpose.msra.mxu0 0.0
        %734 = vmatpush.xpose.msra.mxu0 0.0
        %735 = vmatpush.xpose.msra.mxu0 %v719
        %736 = vmatpush.xpose.msra.mxu0 %v717
        %737 = vmatmul.f32.gmra.mxu0 %v712
        %v738 = vpop.f32.mrf.mxu0
        %v739 = vadd.f32 0.0, %v738
        %740 = vmatmul.f32.gmra.mxu0 %v715
        %v741 = vpop.f32.mrf.mxu0
        %v742 = vadd.f32 0.0, %v741
        %743 = vdwg.mxu0
        %746 = vrot.lane.b32.xlu0 %v662, 96
        %v747 = vpop.permute.xlu0 %746
        %748 = vrot.lane.b32.xlu0 %v663, 96
        %v749 = vpop.permute.xlu0 %748
        %v751 = vsel %vm393, %v510, 0
        %v754 = vsel %vm393, %v511, 0
        %v756 = vsel %vm393, %v747, 0
        %v758 = vsel %vm393, %v749, 0
        %760 = vmatpush.xpose.msra.mxu0 0.0
        %761 = vmatpush.xpose.msra.mxu0 0.0
        %762 = vmatpush.xpose.msra.mxu0 0.0
        %763 = vmatpush.xpose.msra.mxu0 0.0
        %764 = vmatpush.xpose.msra.mxu0 0.0
        %765 = vmatpush.xpose.msra.mxu0 0.0
        %766 = vmatpush.xpose.msra.mxu0 0.0
        %767 = vmatpush.xpose.msra.mxu0 0.0
        %768 = vmatpush.xpose.msra.mxu0 0.0
        %769 = vmatpush.xpose.msra.mxu0 0.0
        %770 = vmatpush.xpose.msra.mxu0 0.0
        %771 = vmatpush.xpose.msra.mxu0 0.0
        %772 = vmatpush.xpose.msra.mxu0 0.0
        %773 = vmatpush.xpose.msra.mxu0 0.0
        %774 = vmatpush.xpose.msra.mxu0 %v758
        %775 = vmatpush.xpose.msra.mxu0 %v756
        %776 = vmatmul.f32.gmra.mxu0 %v751
        %v777 = vpop.f32.mrf.mxu0
        %v778 = vadd.f32 0.0, %v777
        %779 = vmatmul.f32.gmra.mxu0 %v754
        %v780 = vpop.f32.mrf.mxu0
        %v781 = vadd.f32 0.0, %v780
        %782 = vdwg.mxu0
        %785 = vrot.lane.b32.xlu0 %v664, 96
        %v786 = vpop.permute.xlu0 %785
        %787 = vrot.lane.b32.xlu0 %v665, 96
        %v788 = vpop.permute.xlu0 %787
        %v790 = vsel %vm393, %v512, 0
        %v793 = vsel %vm393, %v513, 0
        %v795 = vsel %vm393, %v786, 0
        %v797 = vsel %vm393, %v788, 0
        %799 = vmatpush.xpose.msra.mxu0 0.0
        %800 = vmatpush.xpose.msra.mxu0 0.0
        %801 = vmatpush.xpose.msra.mxu0 0.0
        %802 = vmatpush.xpose.msra.mxu0 0.0
        %803 = vmatpush.xpose.msra.mxu0 0.0
        %804 = vmatpush.xpose.msra.mxu0 0.0
        %805 = vmatpush.xpose.msra.mxu0 0.0
        %806 = vmatpush.xpose.msra.mxu0 0.0
        %807 = vmatpush.xpose.msra.mxu0 0.0
        %808 = vmatpush.xpose.msra.mxu0 0.0
        %809 = vmatpush.xpose.msra.mxu0 0.0
        %810 = vmatpush.xpose.msra.mxu0 0.0
        %811 = vmatpush.xpose.msra.mxu0 0.0
        %812 = vmatpush.xpose.msra.mxu0 0.0
        %813 = vmatpush.xpose.msra.mxu0 %v797
        %814 = vmatpush.xpose.msra.mxu0 %v795
        %815 = vmatmul.f32.gmra.mxu0 %v790
        %v816 = vpop.f32.mrf.mxu0
        %v817 = vadd.f32 0.0, %v816
        %818 = vmatmul.f32.gmra.mxu0 %v793
        %v819 = vpop.f32.mrf.mxu0
        %v820 = vadd.f32 0.0, %v819
        %821 = vdwg.mxu0
        %s822 = sld [smem:[#allocation2]]
        %v823 = vstv %s822
        %v824 = vmul.f32 %v700, %v823
        %v825 = vmul.f32 %v703, %v823
        %v826 = vmul.f32 %v739, %v823
        %v827 = vmul.f32 %v742, %v823
        %v828 = vmul.f32 %v778, %v823
        %v829 = vmul.f32 %v781, %v823
        %v830 = vmul.f32 %v817, %v823
        %v831 = vmul.f32 %v820, %v823
        %v832 = vld [vmem:[%s4] sm:$0xff]
        %v833 = vld [vmem:[%s4 + $0x8] sm:$0xff]
        %v834 = vadd.f32 %v824, %v832
        %v835 = vadd.f32 %v825, %v833
        %v836 = vadd.f32 %v826, %v832
        %v837 = vadd.f32 %v827, %v833
        %v838 = vadd.f32 %v828, %v832
        %v839 = vadd.f32 %v829, %v833
        %v840 = vadd.f32 %v830, %v832
        %v841 = vadd.f32 %v831, %v833
        %v842 = vsel %vm393, %v834, -inf
        %843 = vmax.xlane.f32.xlu0 %v842
        %v844 = vpop.xlane.xlu0 %843
        %v845 = vsel %vm393, %v835, -inf
        %846 = vmax.xlane.f32.xlu0 %v845
        %v847 = vpop.xlane.xlu0 %846
        %v848 = vsel %vm393, %v836, -inf
        %849 = vmax.xlane.f32.xlu0 %v848
        %v850 = vpop.xlane.xlu0 %849
        %v851 = vsel %vm393, %v837, -inf
        %852 = vmax.xlane.f32.xlu0 %v851
        %v853 = vpop.xlane.xlu0 %852
        %v854 = vsel %vm393, %v838, -inf
        %855 = vmax.xlane.f32.xlu0 %v854
        %v856 = vpop.xlane.xlu0 %855
        %v857 = vsel %vm393, %v839, -inf
        %858 = vmax.xlane.f32.xlu0 %v857
        %v859 = vpop.xlane.xlu0 %858
        %v860 = vsel %vm393, %v840, -inf
        %861 = vmax.xlane.f32.xlu0 %v860
        %v862 = vpop.xlane.xlu0 %861
        %v863 = vsel %vm393, %v841, -inf
        %864 = vmax.xlane.f32.xlu0 %v863
        %v865 = vpop.xlane.xlu0 %864
        %v866 = vsub.f32 %v834, %v844
        %v867 = vsub.f32 %v835, %v847
        %v868 = vsub.f32 %v836, %v850
        %v869 = vsub.f32 %v837, %v853
        %v870 = vsub.f32 %v838, %v856
        %v871 = vsub.f32 %v839, %v859
        %v872 = vsub.f32 %v840, %v862
        %v873 = vsub.f32 %v841, %v865
        %v874 = vmul.f32 %v866, 1.442695
        %v875 = vpow.pop %v874
        %v876 = vmul.f32 %v867, 1.442695
        %v877 = vpow.pop %v876
        %v878 = vmul.f32 %v868, 1.442695
        %v879 = vpow.pop %v878
        %v880 = vmul.f32 %v869, 1.442695
        %v881 = vpow.pop %v880
        %v882 = vmul.f32 %v870, 1.442695
        %v883 = vpow.pop %v882
        %v884 = vmul.f32 %v871, 1.442695
        %v885 = vpow.pop %v884
        %v886 = vmul.f32 %v872, 1.442695
        %v887 = vpow.pop %v886
        %v888 = vmul.f32 %v873, 1.442695
        %v889 = vpow.pop %v888
        %v890 = vsel %vm393, %v875, 0.0
        %891 = vadd.xlane.f32.xlu0 %v890
        %v892 = vpop.xlane.xlu0 %891
        %v893 = vsel %vm393, %v877, 0.0
        %894 = vadd.xlane.f32.xlu0 %v893
        %v895 = vpop.xlane.xlu0 %894
        %v896 = vsel %vm393, %v879, 0.0
        %897 = vadd.xlane.f32.xlu0 %v896
        %v898 = vpop.xlane.xlu0 %897
        %v899 = vsel %vm393, %v881, 0.0
        %900 = vadd.xlane.f32.xlu0 %v899
        %v901 = vpop.xlane.xlu0 %900
        %v902 = vsel %vm393, %v883, 0.0
        %903 = vadd.xlane.f32.xlu0 %v902
        %v904 = vpop.xlane.xlu0 %903
        %v905 = vsel %vm393, %v885, 0.0
        %906 = vadd.xlane.f32.xlu0 %v905
        %v907 = vpop.xlane.xlu0 %906
        %v908 = vsel %vm393, %v887, 0.0
        %909 = vadd.xlane.f32.xlu0 %v908
        %v910 = vpop.xlane.xlu0 %909
        %v911 = vsel %vm393, %v889, 0.0
        %912 = vadd.xlane.f32.xlu0 %v911
        %v913 = vpop.xlane.xlu0 %912
        %v914 = vrcp.pop %v892
        %v915 = vrcp.pop %v895
        %v916 = vrcp.pop %v898
        %v917 = vrcp.pop %v901
        %v918 = vrcp.pop %v904
        %v919 = vrcp.pop %v907
        %v920 = vrcp.pop %v910
        %v921 = vrcp.pop %v913
        %v922 = vmul.f32 %v875, %v914
        %v923 = vmul.f32 %v877, %v915
        %v924 = vmul.f32 %v879, %v916
        %v925 = vmul.f32 %v881, %v917
        %v926 = vmul.f32 %v883, %v918
        %v927 = vmul.f32 %v885, %v919
        %v928 = vmul.f32 %v887, %v920
        %v929 = vmul.f32 %v889, %v921
        %932 = vrot.lane.b32.xlu0 %v358, 64
        %v933 = vpop.permute.xlu0 %932
        %934 = vrot.lane.b32.xlu0 %v361, 64
        %v935 = vpop.permute.xlu0 %934
        %v939 = vsel %vm393, %v922, 0
        %v942 = vsel %vm393, %v923, 0
        %944 = vmatpush.msra.mxu0 0.0
        %945 = vmatpush.msra.mxu0 0.0
        %946 = vmatpush.msra.mxu0 0.0
        %947 = vmatpush.msra.mxu0 0.0
        %948 = vmatpush.msra.mxu0 0.0
        %949 = vmatpush.msra.mxu0 0.0
        %950 = vmatpush.msra.mxu0 0.0
        %951 = vmatpush.msra.mxu0 0.0
        %952 = vmatpush.msra.mxu0 0.0
        %953 = vmatpush.msra.mxu0 0.0
        %954 = vmatpush.msra.mxu0 0.0
        %955 = vmatpush.msra.mxu0 0.0
        %956 = vmatpush.msra.mxu0 0.0
        %957 = vmatpush.msra.mxu0 0.0
        %958 = vmatpush.msra.mxu0 %v935
        %959 = vmatpush.msra.mxu0 %v933
        %960 = vmatmul.f32.gmra.mxu0 %v939
        %v961 = vpop.f32.mrf.mxu0
        %v962 = vadd.f32 0.0, %v961
        %963 = vmatmul.f32.gmra.mxu0 %v942
        %v964 = vpop.f32.mrf.mxu0
        %v965 = vadd.f32 0.0, %v964
        %966 = vdwg.mxu0
        %969 = vrot.lane.b32.xlu0 %v364, 64
        %v970 = vpop.permute.xlu0 %969
        %971 = vrot.lane.b32.xlu0 %v367, 64
        %v972 = vpop.permute.xlu0 %971
        %v976 = vsel %vm393, %v924, 0
        %v979 = vsel %vm393, %v925, 0
        %981 = vmatpush.msra.mxu0 0.0
        %982 = vmatpush.msra.mxu0 0.0
        %983 = vmatpush.msra.mxu0 0.0
        %984 = vmatpush.msra.mxu0 0.0
        %985 = vmatpush.msra.mxu0 0.0
        %986 = vmatpush.msra.mxu0 0.0
        %987 = vmatpush.msra.mxu0 0.0
        %988 = vmatpush.msra.mxu0 0.0
        %989 = vmatpush.msra.mxu0 0.0
        %990 = vmatpush.msra.mxu0 0.0
        %991 = vmatpush.msra.mxu0 0.0
        %992 = vmatpush.msra.mxu0 0.0
        %993 = vmatpush.msra.mxu0 0.0
        %994 = vmatpush.msra.mxu0 0.0
        %995 = vmatpush.msra.mxu0 %v972
        %996 = vmatpush.msra.mxu0 %v970
        %997 = vmatmul.f32.gmra.mxu0 %v976
        %v998 = vpop.f32.mrf.mxu0
        %v999 = vadd.f32 0.0, %v998
        %1000 = vmatmul.f32.gmra.mxu0 %v979
        %v1001 = vpop.f32.mrf.mxu0
        %v1002 = vadd.f32 0.0, %v1001
        %1003 = vdwg.mxu0
        %1006 = vrot.lane.b32.xlu0 %v370, 64
        %v1007 = vpop.permute.xlu0 %1006
        %1008 = vrot.lane.b32.xlu0 %v373, 64
        %v1009 = vpop.permute.xlu0 %1008
        %v1013 = vsel %vm393, %v926, 0
        %v1016 = vsel %vm393, %v927, 0
        %1018 = vmatpush.msra.mxu0 0.0
        %1019 = vmatpush.msra.mxu0 0.0
        %1020 = vmatpush.msra.mxu0 0.0
        %1021 = vmatpush.msra.mxu0 0.0
        %1022 = vmatpush.msra.mxu0 0.0
        %1023 = vmatpush.msra.mxu0 0.0
        %1024 = vmatpush.msra.mxu0 0.0
        %1025 = vmatpush.msra.mxu0 0.0
        %1026 = vmatpush.msra.mxu0 0.0
        %1027 = vmatpush.msra.mxu0 0.0
        %1028 = vmatpush.msra.mxu0 0.0
        %1029 = vmatpush.msra.mxu0 0.0
        %1030 = vmatpush.msra.mxu0 0.0
        %1031 = vmatpush.msra.mxu0 0.0
        %1032 = vmatpush.msra.mxu0 %v1009
        %1033 = vmatpush.msra.mxu0 %v1007
        %1034 = vmatmul.f32.gmra.mxu0 %v1013
        %v1035 = vpop.f32.mrf.mxu0
        %v1036 = vadd.f32 0.0, %v1035
        %1037 = vmatmul.f32.gmra.mxu0 %v1016
        %v1038 = vpop.f32.mrf.mxu0
        %v1039 = vadd.f32 0.0, %v1038
        %1040 = vdwg.mxu0
        %1043 = vrot.lane.b32.xlu0 %v376, 64
        %v1044 = vpop.permute.xlu0 %1043
        %1045 = vrot.lane.b32.xlu0 %v379, 64
        %v1046 = vpop.permute.xlu0 %1045
        %v1050 = vsel %vm393, %v928, 0
        %v1053 = vsel %vm393, %v929, 0
        %1055 = vmatpush.msra.mxu0 0.0
        %1056 = vmatpush.msra.mxu0 0.0
        %1057 = vmatpush.msra.mxu0 0.0
        %1058 = vmatpush.msra.mxu0 0.0
        %1059 = vmatpush.msra.mxu0 0.0
        %1060 = vmatpush.msra.mxu0 0.0
        %1061 = vmatpush.msra.mxu0 0.0
        %1062 = vmatpush.msra.mxu0 0.0
        %1063 = vmatpush.msra.mxu0 0.0
        %1064 = vmatpush.msra.mxu0 0.0
        %1065 = vmatpush.msra.mxu0 0.0
        %1066 = vmatpush.msra.mxu0 0.0
        %1067 = vmatpush.msra.mxu0 0.0
        %1068 = vmatpush.msra.mxu0 0.0
        %1069 = vmatpush.msra.mxu0 %v1046
        %1070 = vmatpush.msra.mxu0 %v1044
        %1071 = vmatmul.f32.gmra.mxu0 %v1050
        %v1072 = vpop.f32.mrf.mxu0
        %v1073 = vadd.f32 0.0, %v1072
        %1074 = vmatmul.f32.gmra.mxu0 %v1053
        %v1075 = vpop.f32.mrf.mxu0
        %v1076 = vadd.f32 0.0, %v1075
        %1077 = vdwg.mxu0
        %1078 = vrot.lane.b32.xlu0 %v385, 112
        %v1079 = vpop.permute.xlu0 %1078
        %1080 = vrot.lane.b32.xlu0 %v386, 112
        %v1081 = vpop.permute.xlu0 %1080
        %1082 = vrot.lane.b32.xlu0 %v387, 112
        %v1083 = vpop.permute.xlu0 %1082
        %1084 = vrot.lane.b32.xlu0 %v388, 112
        %v1085 = vpop.permute.xlu0 %1084
        %1086 = vrot.lane.b32.xlu0 %v389, 112
        %v1087 = vpop.permute.xlu0 %1086
        %1088 = vrot.lane.b32.xlu0 %v390, 112
        %v1089 = vpop.permute.xlu0 %1088
        %1090 = vrot.lane.b32.xlu0 %v391, 112
        %v1091 = vpop.permute.xlu0 %1090
        %1092 = vrot.lane.b32.xlu0 %v392, 112
        %v1093 = vpop.permute.xlu0 %1092
        %v1102 = vsel %vm393, %v1079, 0.0
        %1103 = vadd.xlane.f32.xlu0 %v1102
        %v1104 = vpop.xlane.xlu0 %1103
        %v1105 = vsel %vm393, %v1081, 0.0
        %1106 = vadd.xlane.f32.xlu0 %v1105
        %v1107 = vpop.xlane.xlu0 %1106
        %v1108 = vsel %vm393, %v1083, 0.0
        %1109 = vadd.xlane.f32.xlu0 %v1108
        %v1110 = vpop.xlane.xlu0 %1109
        %v1111 = vsel %vm393, %v1085, 0.0
        %1112 = vadd.xlane.f32.xlu0 %v1111
        %v1113 = vpop.xlane.xlu0 %1112
        %v1114 = vsel %vm393, %v1087, 0.0
        %1115 = vadd.xlane.f32.xlu0 %v1114
        %v1116 = vpop.xlane.xlu0 %1115
        %v1117 = vsel %vm393, %v1089, 0.0
        %1118 = vadd.xlane.f32.xlu0 %v1117
        %v1119 = vpop.xlane.xlu0 %1118
        %v1120 = vsel %vm393, %v1091, 0.0
        %1121 = vadd.xlane.f32.xlu0 %v1120
        %v1122 = vpop.xlane.xlu0 %1121
        %v1123 = vsel %vm393, %v1093, 0.0
        %1124 = vadd.xlane.f32.xlu0 %v1123
        %v1125 = vpop.xlane.xlu0 %1124
        %v1126 = vmax.f32 %v1104, 1e-24
        %v1127 = vmax.f32 %v1107, 1e-24
        %v1128 = vmax.f32 %v1110, 1e-24
        %v1129 = vmax.f32 %v1113, 1e-24
        %v1130 = vmax.f32 %v1116, 1e-24
        %v1131 = vmax.f32 %v1119, 1e-24
        %v1132 = vmax.f32 %v1122, 1e-24
        %v1133 = vmax.f32 %v1125, 1e-24
        %v1134 = vrsqrt.pop %v1126
        %v1135 = vmul.f32 %v1134, %v1126
        %v1136 = vmul.f32 %v1135, %v1134
        %v1137 = vmul.f32 0.5, %v1136
        %v1138 = vsub.f32 1.5, %v1137
        %v1139 = vmul.f32 %v1134, %v1138
        %vm1140 = vweird.f32 %v1126
        %vm1141 = vweird.f32 %v1134
        %vm1142 = vmor %vm1140, %vm1141
        %v1143 = vsel %vm1142, %v1134, %v1139
        %v1144 = vrsqrt.pop %v1127
        %v1145 = vmul.f32 %v1144, %v1127
        %v1146 = vmul.f32 %v1145, %v1144
        %v1147 = vmul.f32 0.5, %v1146
        %v1148 = vsub.f32 1.5, %v1147
        %v1149 = vmul.f32 %v1144, %v1148
        %vm1150 = vweird.f32 %v1127
        %vm1151 = vweird.f32 %v1144
        %vm1152 = vmor %vm1150, %vm1151
        %v1153 = vsel %vm1152, %v1144, %v1149
        %v1154 = vrsqrt.pop %v1128
        %v1155 = vmul.f32 %v1154, %v1128
        %v1156 = vmul.f32 %v1155, %v1154
        %v1157 = vmul.f32 0.5, %v1156
        %v1158 = vsub.f32 1.5, %v1157
        %v1159 = vmul.f32 %v1154, %v1158
        %vm1160 = vweird.f32 %v1128
        %vm1161 = vweird.f32 %v1154
        %vm1162 = vmor %vm1160, %vm1161
        %v1163 = vsel %vm1162, %v1154, %v1159
        %v1164 = vrsqrt.pop %v1129
        %v1165 = vmul.f32 %v1164, %v1129
        %v1166 = vmul.f32 %v1165, %v1164
        %v1167 = vmul.f32 0.5, %v1166
        %v1168 = vsub.f32 1.5, %v1167
        %v1169 = vmul.f32 %v1164, %v1168
        %vm1170 = vweird.f32 %v1129
        %vm1171 = vweird.f32 %v1164
        %vm1172 = vmor %vm1170, %vm1171
        %v1173 = vsel %vm1172, %v1164, %v1169
        %v1174 = vrsqrt.pop %v1130
        %v1175 = vmul.f32 %v1174, %v1130
        %v1176 = vmul.f32 %v1175, %v1174
        %v1177 = vmul.f32 0.5, %v1176
        %v1178 = vsub.f32 1.5, %v1177
        %v1179 = vmul.f32 %v1174, %v1178
        %vm1180 = vweird.f32 %v1130
        %vm1181 = vweird.f32 %v1174
        %vm1182 = vmor %vm1180, %vm1181
        %v1183 = vsel %vm1182, %v1174, %v1179
        %v1184 = vrsqrt.pop %v1131
        %v1185 = vmul.f32 %v1184, %v1131
        %v1186 = vmul.f32 %v1185, %v1184
        %v1187 = vmul.f32 0.5, %v1186
        %v1188 = vsub.f32 1.5, %v1187
        %v1189 = vmul.f32 %v1184, %v1188
        %vm1190 = vweird.f32 %v1131
        %vm1191 = vweird.f32 %v1184
        %vm1192 = vmor %vm1190, %vm1191
        %v1193 = vsel %vm1192, %v1184, %v1189
        %v1194 = vrsqrt.pop %v1132
        %v1195 = vmul.f32 %v1194, %v1132
        %v1196 = vmul.f32 %v1195, %v1194
        %v1197 = vmul.f32 0.5, %v1196
        %v1198 = vsub.f32 1.5, %v1197
        %v1199 = vmul.f32 %v1194, %v1198
        %vm1200 = vweird.f32 %v1132
        %vm1201 = vweird.f32 %v1194
        %vm1202 = vmor %vm1200, %vm1201
        %v1203 = vsel %vm1202, %v1194, %v1199
        %v1204 = vrsqrt.pop %v1133
        %v1205 = vmul.f32 %v1204, %v1133
        %v1206 = vmul.f32 %v1205, %v1204
        %v1207 = vmul.f32 0.5, %v1206
        %v1208 = vsub.f32 1.5, %v1207
        %v1209 = vmul.f32 %v1204, %v1208
        %vm1210 = vweird.f32 %v1133
        %vm1211 = vweird.f32 %v1204
        %vm1212 = vmor %vm1210, %vm1211
        %v1213 = vsel %vm1212, %v1204, %v1209
        %v1214 = vmul.f32 %v358, %v1143
        %v1215 = vmul.f32 %v361, %v1153
        %v1216 = vmul.f32 %v364, %v1163
        %v1217 = vmul.f32 %v367, %v1173
        %v1218 = vmul.f32 %v370, %v1183
        %v1219 = vmul.f32 %v373, %v1193
        %v1220 = vmul.f32 %v376, %v1203
        %v1221 = vmul.f32 %v379, %v1213
        %1222 = vrot.lane.b32.xlu0 %v385, 80
        %v1223 = vpop.permute.xlu0 %1222
        %1224 = vrot.lane.b32.xlu0 %v386, 80
        %v1225 = vpop.permute.xlu0 %1224
        %1226 = vrot.lane.b32.xlu0 %v387, 80
        %v1227 = vpop.permute.xlu0 %1226
        %1228 = vrot.lane.b32.xlu0 %v388, 80
        %v1229 = vpop.permute.xlu0 %1228
        %1230 = vrot.lane.b32.xlu0 %v389, 80
        %v1231 = vpop.permute.xlu0 %1230
        %1232 = vrot.lane.b32.xlu0 %v390, 80
        %v1233 = vpop.permute.xlu0 %1232
        %1234 = vrot.lane.b32.xlu0 %v391, 80
        %v1235 = vpop.permute.xlu0 %1234
        %1236 = vrot.lane.b32.xlu0 %v392, 80
        %v1237 = vpop.permute.xlu0 %1236
        %v1246 = vsel %vm393, %v1223, 0.0
        %1247 = vadd.xlane.f32.xlu0 %v1246
        %v1248 = vpop.xlane.xlu0 %1247
        %v1249 = vsel %vm393, %v1225, 0.0
        %1250 = vadd.xlane.f32.xlu0 %v1249
        %v1251 = vpop.xlane.xlu0 %1250
        %v1252 = vsel %vm393, %v1227, 0.0
        %1253 = vadd.xlane.f32.xlu0 %v1252
        %v1254 = vpop.xlane.xlu0 %1253
        %v1255 = vsel %vm393, %v1229, 0.0
        %1256 = vadd.xlane.f32.xlu0 %v1255
        %v1257 = vpop.xlane.xlu0 %1256
        %v1258 = vsel %vm393, %v1231, 0.0
        %1259 = vadd.xlane.f32.xlu0 %v1258
        %v1260 = vpop.xlane.xlu0 %1259
        %v1261 = vsel %vm393, %v1233, 0.0
        %1262 = vadd.xlane.f32.xlu0 %v1261
        %v1263 = vpop.xlane.xlu0 %1262
        %v1264 = vsel %vm393, %v1235, 0.0
        %1265 = vadd.xlane.f32.xlu0 %v1264
        %v1266 = vpop.xlane.xlu0 %1265
        %v1267 = vsel %vm393, %v1237, 0.0
        %1268 = vadd.xlane.f32.xlu0 %v1267
        %v1269 = vpop.xlane.xlu0 %1268
        %v1270 = vmax.f32 %v1248, 1e-24
        %v1271 = vmax.f32 %v1251, 1e-24
        %v1272 = vmax.f32 %v1254, 1e-24
        %v1273 = vmax.f32 %v1257, 1e-24
        %v1274 = vmax.f32 %v1260, 1e-24
        %v1275 = vmax.f32 %v1263, 1e-24
        %v1276 = vmax.f32 %v1266, 1e-24
        %v1277 = vmax.f32 %v1269, 1e-24
        %v1278 = vrsqrt.pop %v1270
        %v1279 = vmul.f32 %v1278, %v1270
        %v1280 = vmul.f32 %v1279, %v1278
        %v1281 = vmul.f32 0.5, %v1280
        %v1282 = vsub.f32 1.5, %v1281
        %v1283 = vmul.f32 %v1278, %v1282
        %vm1284 = vweird.f32 %v1270
        %vm1285 = vweird.f32 %v1278
        %vm1286 = vmor %vm1284, %vm1285
        %v1287 = vsel %vm1286, %v1278, %v1283
        %v1288 = vrsqrt.pop %v1271
        %v1289 = vmul.f32 %v1288, %v1271
        %v1290 = vmul.f32 %v1289, %v1288
        %v1291 = vmul.f32 0.5, %v1290
        %v1292 = vsub.f32 1.5, %v1291
        %v1293 = vmul.f32 %v1288, %v1292
        %vm1294 = vweird.f32 %v1271
        %vm1295 = vweird.f32 %v1288
        %vm1296 = vmor %vm1294, %vm1295
        %v1297 = vsel %vm1296, %v1288, %v1293
        %v1298 = vrsqrt.pop %v1272
        %v1299 = vmul.f32 %v1298, %v1272
        %v1300 = vmul.f32 %v1299, %v1298
        %v1301 = vmul.f32 0.5, %v1300
        %v1302 = vsub.f32 1.5, %v1301
        %v1303 = vmul.f32 %v1298, %v1302
        %vm1304 = vweird.f32 %v1272
        %vm1305 = vweird.f32 %v1298
        %vm1306 = vmor %vm1304, %vm1305
        %v1307 = vsel %vm1306, %v1298, %v1303
        %v1308 = vrsqrt.pop %v1273
        %v1309 = vmul.f32 %v1308, %v1273
        %v1310 = vmul.f32 %v1309, %v1308
        %v1311 = vmul.f32 0.5, %v1310
        %v1312 = vsub.f32 1.5, %v1311
        %v1313 = vmul.f32 %v1308, %v1312
        %vm1314 = vweird.f32 %v1273
        %vm1315 = vweird.f32 %v1308
        %vm1316 = vmor %vm1314, %vm1315
        %v1317 = vsel %vm1316, %v1308, %v1313
        %v1318 = vrsqrt.pop %v1274
        %v1319 = vmul.f32 %v1318, %v1274
        %v1320 = vmul.f32 %v1319, %v1318
        %v1321 = vmul.f32 0.5, %v1320
        %v1322 = vsub.f32 1.5, %v1321
        %v1323 = vmul.f32 %v1318, %v1322
        %vm1324 = vweird.f32 %v1274
        %vm1325 = vweird.f32 %v1318
        %vm1326 = vmor %vm1324, %vm1325
        %v1327 = vsel %vm1326, %v1318, %v1323
        %v1328 = vrsqrt.pop %v1275
        %v1329 = vmul.f32 %v1328, %v1275
        %v1330 = vmul.f32 %v1329, %v1328
        %v1331 = vmul.f32 0.5, %v1330
        %v1332 = vsub.f32 1.5, %v1331
        %v1333 = vmul.f32 %v1328, %v1332
        %vm1334 = vweird.f32 %v1275
        %vm1335 = vweird.f32 %v1328
        %vm1336 = vmor %vm1334, %vm1335
        %v1337 = vsel %vm1336, %v1328, %v1333
        %v1338 = vrsqrt.pop %v1276
        %v1339 = vmul.f32 %v1338, %v1276
        %v1340 = vmul.f32 %v1339, %v1338
        %v1341 = vmul.f32 0.5, %v1340
        %v1342 = vsub.f32 1.5, %v1341
        %v1343 = vmul.f32 %v1338, %v1342
        %vm1344 = vweird.f32 %v1276
        %vm1345 = vweird.f32 %v1338
        %vm1346 = vmor %vm1344, %vm1345
        %v1347 = vsel %vm1346, %v1338, %v1343
        %v1348 = vrsqrt.pop %v1277
        %v1349 = vmul.f32 %v1348, %v1277
        %v1350 = vmul.f32 %v1349, %v1348
        %v1351 = vmul.f32 0.5, %v1350
        %v1352 = vsub.f32 1.5, %v1351
        %v1353 = vmul.f32 %v1348, %v1352
        %vm1354 = vweird.f32 %v1277
        %vm1355 = vweird.f32 %v1348
        %vm1356 = vmor %vm1354, %vm1355
        %v1357 = vsel %vm1356, %v1348, %v1353
        %v1358 = vmul.f32 %v358, %v1287
        %v1359 = vmul.f32 %v361, %v1297
        %v1360 = vmul.f32 %v364, %v1307
        %v1361 = vmul.f32 %v367, %v1317
        %v1362 = vmul.f32 %v370, %v1327
        %v1363 = vmul.f32 %v373, %v1337
        %v1364 = vmul.f32 %v376, %v1347
        %v1365 = vmul.f32 %v379, %v1357
        %1368 = vrot.lane.b32.xlu0 %v1214, 112
        %v1369 = vpop.permute.xlu0 %1368
        %1370 = vrot.lane.b32.xlu0 %v1215, 112
        %v1371 = vpop.permute.xlu0 %1370
        %1374 = vrot.lane.b32.xlu0 %v1358, 80
        %v1375 = vpop.permute.xlu0 %1374
        %1376 = vrot.lane.b32.xlu0 %v1359, 80
        %v1377 = vpop.permute.xlu0 %1376
        %v1378 = vsel %vm393, %v1369, 0
        %v1380 = vsel %vm393, %v1371, 0
        %v1382 = vsel %vm393, %v1375, 0
        %v1384 = vsel %vm393, %v1377, 0
        %1386 = vmatpush.xpose.msra.mxu0 0.0
        %1387 = vmatpush.xpose.msra.mxu0 0.0
        %1388 = vmatpush.xpose.msra.mxu0 0.0
        %1389 = vmatpush.xpose.msra.mxu0 0.0
        %1390 = vmatpush.xpose.msra.mxu0 0.0
        %1391 = vmatpush.xpose.msra.mxu0 0.0
        %1392 = vmatpush.xpose.msra.mxu0 0.0
        %1393 = vmatpush.xpose.msra.mxu0 0.0
        %1394 = vmatpush.xpose.msra.mxu0 0.0
        %1395 = vmatpush.xpose.msra.mxu0 0.0
        %1396 = vmatpush.xpose.msra.mxu0 0.0
        %1397 = vmatpush.xpose.msra.mxu0 0.0
        %1398 = vmatpush.xpose.msra.mxu0 0.0
        %1399 = vmatpush.xpose.msra.mxu0 0.0
        %1400 = vmatpush.xpose.msra.mxu0 %v1384
        %1401 = vmatpush.xpose.msra.mxu0 %v1382
        %1402 = vmatmul.f32.gmra.mxu0 %v1378
        %v1403 = vpop.f32.mrf.mxu0
        %v1404 = vadd.f32 0.0, %v1403
        %1405 = vmatmul.f32.gmra.mxu0 %v1380
        %v1406 = vpop.f32.mrf.mxu0
        %v1407 = vadd.f32 0.0, %v1406
        %1408 = vdwg.mxu0
        %1411 = vrot.lane.b32.xlu0 %v1216, 112
        %v1412 = vpop.permute.xlu0 %1411
        %1413 = vrot.lane.b32.xlu0 %v1217, 112
        %v1414 = vpop.permute.xlu0 %1413
        %1417 = vrot.lane.b32.xlu0 %v1360, 80
        %v1418 = vpop.permute.xlu0 %1417
        %1419 = vrot.lane.b32.xlu0 %v1361, 80
        %v1420 = vpop.permute.xlu0 %1419
        %v1421 = vsel %vm393, %v1412, 0
        %v1423 = vsel %vm393, %v1414, 0
        %v1425 = vsel %vm393, %v1418, 0
        %v1427 = vsel %vm393, %v1420, 0
        %1429 = vmatpush.xpose.msra.mxu0 0.0
        %1430 = vmatpush.xpose.msra.mxu0 0.0
        %1431 = vmatpush.xpose.msra.mxu0 0.0
        %1432 = vmatpush.xpose.msra.mxu0 0.0
        %1433 = vmatpush.xpose.msra.mxu0 0.0
        %1434 = vmatpush.xpose.msra.mxu0 0.0
        %1435 = vmatpush.xpose.msra.mxu0 0.0
        %1436 = vmatpush.xpose.msra.mxu0 0.0
        %1437 = vmatpush.xpose.msra.mxu0 0.0
        %1438 = vmatpush.xpose.msra.mxu0 0.0
        %1439 = vmatpush.xpose.msra.mxu0 0.0
        %1440 = vmatpush.xpose.msra.mxu0 0.0
        %1441 = vmatpush.xpose.msra.mxu0 0.0
        %1442 = vmatpush.xpose.msra.mxu0 0.0
        %1443 = vmatpush.xpose.msra.mxu0 %v1427
        %1444 = vmatpush.xpose.msra.mxu0 %v1425
        %1445 = vmatmul.f32.gmra.mxu0 %v1421
        %v1446 = vpop.f32.mrf.mxu0
        %v1447 = vadd.f32 0.0, %v1446
        %1448 = vmatmul.f32.gmra.mxu0 %v1423
        %v1449 = vpop.f32.mrf.mxu0
        %v1450 = vadd.f32 0.0, %v1449
        %1451 = vdwg.mxu0
        %1454 = vrot.lane.b32.xlu0 %v1218, 112
        %v1455 = vpop.permute.xlu0 %1454
        %1456 = vrot.lane.b32.xlu0 %v1219, 112
        %v1457 = vpop.permute.xlu0 %1456
        %1460 = vrot.lane.b32.xlu0 %v1362, 80
        %v1461 = vpop.permute.xlu0 %1460
        %1462 = vrot.lane.b32.xlu0 %v1363, 80
        %v1463 = vpop.permute.xlu0 %1462
        %v1464 = vsel %vm393, %v1455, 0
        %v1466 = vsel %vm393, %v1457, 0
        %v1468 = vsel %vm393, %v1461, 0
        %v1470 = vsel %vm393, %v1463, 0
        %1472 = vmatpush.xpose.msra.mxu0 0.0
        %1473 = vmatpush.xpose.msra.mxu0 0.0
        %1474 = vmatpush.xpose.msra.mxu0 0.0
        %1475 = vmatpush.xpose.msra.mxu0 0.0
        %1476 = vmatpush.xpose.msra.mxu0 0.0
        %1477 = vmatpush.xpose.msra.mxu0 0.0
        %1478 = vmatpush.xpose.msra.mxu0 0.0
        %1479 = vmatpush.xpose.msra.mxu0 0.0
        %1480 = vmatpush.xpose.msra.mxu0 0.0
        %1481 = vmatpush.xpose.msra.mxu0 0.0
        %1482 = vmatpush.xpose.msra.mxu0 0.0
        %1483 = vmatpush.xpose.msra.mxu0 0.0
        %1484 = vmatpush.xpose.msra.mxu0 0.0
        %1485 = vmatpush.xpose.msra.mxu0 0.0
        %1486 = vmatpush.xpose.msra.mxu0 %v1470
        %1487 = vmatpush.xpose.msra.mxu0 %v1468
        %1488 = vmatmul.f32.gmra.mxu0 %v1464
        %v1489 = vpop.f32.mrf.mxu0
        %v1490 = vadd.f32 0.0, %v1489
        %1491 = vmatmul.f32.gmra.mxu0 %v1466
        %v1492 = vpop.f32.mrf.mxu0
        %v1493 = vadd.f32 0.0, %v1492
        %1494 = vdwg.mxu0
        %1497 = vrot.lane.b32.xlu0 %v1220, 112
        %v1498 = vpop.permute.xlu0 %1497
        %1499 = vrot.lane.b32.xlu0 %v1221, 112
        %v1500 = vpop.permute.xlu0 %1499
        %1503 = vrot.lane.b32.xlu0 %v1364, 80
        %v1504 = vpop.permute.xlu0 %1503
        %1505 = vrot.lane.b32.xlu0 %v1365, 80
        %v1506 = vpop.permute.xlu0 %1505
        %v1507 = vsel %vm393, %v1498, 0
        %v1509 = vsel %vm393, %v1500, 0
        %v1511 = vsel %vm393, %v1504, 0
        %v1513 = vsel %vm393, %v1506, 0
        %1515 = vmatpush.xpose.msra.mxu0 0.0
        %1516 = vmatpush.xpose.msra.mxu0 0.0
        %1517 = vmatpush.xpose.msra.mxu0 0.0
        %1518 = vmatpush.xpose.msra.mxu0 0.0
        %1519 = vmatpush.xpose.msra.mxu0 0.0
        %1520 = vmatpush.xpose.msra.mxu0 0.0
        %1521 = vmatpush.xpose.msra.mxu0 0.0
        %1522 = vmatpush.xpose.msra.mxu0 0.0
        %1523 = vmatpush.xpose.msra.mxu0 0.0
        %1524 = vmatpush.xpose.msra.mxu0 0.0
        %1525 = vmatpush.xpose.msra.mxu0 0.0
        %1526 = vmatpush.xpose.msra.mxu0 0.0
        %1527 = vmatpush.xpose.msra.mxu0 0.0
        %1528 = vmatpush.xpose.msra.mxu0 0.0
        %1529 = vmatpush.xpose.msra.mxu0 %v1513
        %1530 = vmatpush.xpose.msra.mxu0 %v1511
        %1531 = vmatmul.f32.gmra.mxu0 %v1507
        %v1532 = vpop.f32.mrf.mxu0
        %v1533 = vadd.f32 0.0, %v1532
        %1534 = vmatmul.f32.gmra.mxu0 %v1509
        %v1535 = vpop.f32.mrf.mxu0
        %v1536 = vadd.f32 0.0, %v1535
        %1537 = vdwg.mxu0
        %s1538 = sld [smem:[#allocation2 + $0x1]]
        %v1539 = vstv %s1538
        %v1540 = vmul.f32 %v1404, %v1539
        %v1541 = vmul.f32 %v1407, %v1539
        %v1542 = vmul.f32 %v1447, %v1539
        %v1543 = vmul.f32 %v1450, %v1539
        %v1544 = vmul.f32 %v1490, %v1539
        %v1545 = vmul.f32 %v1493, %v1539
        %v1546 = vmul.f32 %v1533, %v1539
        %v1547 = vmul.f32 %v1536, %v1539
        %s1548 = scalar_lea.vmem %s4, 16
        %v1549 = vld [vmem:[%s1548] sm:$0xff]
        %v1550 = vld [vmem:[%s1548 + $0x8] sm:$0xff]
        %v1551 = vadd.f32 %v1540, %v1549
        %v1552 = vadd.f32 %v1541, %v1550
        %v1553 = vadd.f32 %v1542, %v1549
        %v1554 = vadd.f32 %v1543, %v1550
        %v1555 = vadd.f32 %v1544, %v1549
        %v1556 = vadd.f32 %v1545, %v1550
        %v1557 = vadd.f32 %v1546, %v1549
        %v1558 = vadd.f32 %v1547, %v1550
        %v1559 = vsel %vm393, %v1551, -inf
        %1560 = vmax.xlane.f32.xlu0 %v1559
        %v1561 = vpop.xlane.xlu0 %1560
        %v1562 = vsel %vm393, %v1552, -inf
        %1563 = vmax.xlane.f32.xlu0 %v1562
        %v1564 = vpop.xlane.xlu0 %1563
        %v1565 = vsel %vm393, %v1553, -inf
        %1566 = vmax.xlane.f32.xlu0 %v1565
        %v1567 = vpop.xlane.xlu0 %1566
        %v1568 = vsel %vm393, %v1554, -inf
        %1569 = vmax.xlane.f32.xlu0 %v1568
        %v1570 = vpop.xlane.xlu0 %1569
        %v1571 = vsel %vm393, %v1555, -inf
        %1572 = vmax.xlane.f32.xlu0 %v1571
        %v1573 = vpop.xlane.xlu0 %1572
        %v1574 = vsel %vm393, %v1556, -inf
        %1575 = vmax.xlane.f32.xlu0 %v1574
        %v1576 = vpop.xlane.xlu0 %1575
        %v1577 = vsel %vm393, %v1557, -inf
        %1578 = vmax.xlane.f32.xlu0 %v1577
        %v1579 = vpop.xlane.xlu0 %1578
        %v1580 = vsel %vm393, %v1558, -inf
        %1581 = vmax.xlane.f32.xlu0 %v1580
        %v1582 = vpop.xlane.xlu0 %1581
        %v1583 = vsub.f32 %v1551, %v1561
        %v1584 = vsub.f32 %v1552, %v1564
        %v1585 = vsub.f32 %v1553, %v1567
        %v1586 = vsub.f32 %v1554, %v1570
        %v1587 = vsub.f32 %v1555, %v1573
        %v1588 = vsub.f32 %v1556, %v1576
        %v1589 = vsub.f32 %v1557, %v1579
        %v1590 = vsub.f32 %v1558, %v1582
        %v1591 = vmul.f32 %v1583, 1.442695
        %v1592 = vpow.pop %v1591
        %v1593 = vmul.f32 %v1584, 1.442695
        %v1594 = vpow.pop %v1593
        %v1595 = vmul.f32 %v1585, 1.442695
        %v1596 = vpow.pop %v1595
        %v1597 = vmul.f32 %v1586, 1.442695
        %v1598 = vpow.pop %v1597
        %v1599 = vmul.f32 %v1587, 1.442695
        %v1600 = vpow.pop %v1599
        %v1601 = vmul.f32 %v1588, 1.442695
        %v1602 = vpow.pop %v1601
        %v1603 = vmul.f32 %v1589, 1.442695
        %v1604 = vpow.pop %v1603
        %v1605 = vmul.f32 %v1590, 1.442695
        %v1606 = vpow.pop %v1605
        %v1607 = vsel %vm393, %v1592, 0.0
        %1608 = vadd.xlane.f32.xlu0 %v1607
        %v1609 = vpop.xlane.xlu0 %1608
        %v1610 = vsel %vm393, %v1594, 0.0
        %1611 = vadd.xlane.f32.xlu0 %v1610
        %v1612 = vpop.xlane.xlu0 %1611
        %v1613 = vsel %vm393, %v1596, 0.0
        %1614 = vadd.xlane.f32.xlu0 %v1613
        %v1615 = vpop.xlane.xlu0 %1614
        %v1616 = vsel %vm393, %v1598, 0.0
        %1617 = vadd.xlane.f32.xlu0 %v1616
        %v1618 = vpop.xlane.xlu0 %1617
        %v1619 = vsel %vm393, %v1600, 0.0
        %1620 = vadd.xlane.f32.xlu0 %v1619
        %v1621 = vpop.xlane.xlu0 %1620
        %v1622 = vsel %vm393, %v1602, 0.0
        %1623 = vadd.xlane.f32.xlu0 %v1622
        %v1624 = vpop.xlane.xlu0 %1623
        %v1625 = vsel %vm393, %v1604, 0.0
        %1626 = vadd.xlane.f32.xlu0 %v1625
        %v1627 = vpop.xlane.xlu0 %1626
        %v1628 = vsel %vm393, %v1606, 0.0
        %1629 = vadd.xlane.f32.xlu0 %v1628
        %v1630 = vpop.xlane.xlu0 %1629
        %v1631 = vrcp.pop %v1609
        %v1632 = vrcp.pop %v1612
        %v1633 = vrcp.pop %v1615
        %v1634 = vrcp.pop %v1618
        %v1635 = vrcp.pop %v1621
        %v1636 = vrcp.pop %v1624
        %v1637 = vrcp.pop %v1627
        %v1638 = vrcp.pop %v1630
        %v1639 = vmul.f32 %v1592, %v1631
        %v1640 = vmul.f32 %v1594, %v1632
        %v1641 = vmul.f32 %v1596, %v1633
        %v1642 = vmul.f32 %v1598, %v1634
        %v1643 = vmul.f32 %v1600, %v1635
        %v1644 = vmul.f32 %v1602, %v1636
        %v1645 = vmul.f32 %v1604, %v1637
        %v1646 = vmul.f32 %v1606, %v1638
        %1647 = vrot.lane.b32.xlu0 %v358, 48
        %v1648 = vpop.permute.xlu0 %1647
        %1649 = vrot.lane.b32.xlu0 %v361, 48
        %v1650 = vpop.permute.xlu0 %1649
        %v1654 = vsel %vm393, %v1639, 0
        %v1657 = vsel %vm393, %v1640, 0
        %1659 = vmatpush.msra.mxu0 0.0
        %1660 = vmatpush.msra.mxu0 0.0
        %1661 = vmatpush.msra.mxu0 0.0
        %1662 = vmatpush.msra.mxu0 0.0
        %1663 = vmatpush.msra.mxu0 0.0
        %1664 = vmatpush.msra.mxu0 0.0
        %1665 = vmatpush.msra.mxu0 0.0
        %1666 = vmatpush.msra.mxu0 0.0
        %1667 = vmatpush.msra.mxu0 0.0
        %1668 = vmatpush.msra.mxu0 0.0
        %1669 = vmatpush.msra.mxu0 0.0
        %1670 = vmatpush.msra.mxu0 0.0
        %1671 = vmatpush.msra.mxu0 0.0
        %1672 = vmatpush.msra.mxu0 0.0
        %1673 = vmatpush.msra.mxu0 %v1650
        %1674 = vmatpush.msra.mxu0 %v1648
        %1675 = vmatmul.f32.gmra.mxu0 %v1654
        %v1676 = vpop.f32.mrf.mxu0
        %v1677 = vadd.f32 0.0, %v1676
        %1678 = vmatmul.f32.gmra.mxu0 %v1657
        %v1679 = vpop.f32.mrf.mxu0
        %v1680 = vadd.f32 0.0, %v1679
        %1681 = vdwg.mxu0
        %1682 = vrot.lane.b32.xlu0 %v364, 48
        %v1683 = vpop.permute.xlu0 %1682
        %1684 = vrot.lane.b32.xlu0 %v367, 48
        %v1685 = vpop.permute.xlu0 %1684
        %v1689 = vsel %vm393, %v1641, 0
        %v1692 = vsel %vm393, %v1642, 0
        %1694 = vmatpush.msra.mxu0 0.0
        %1695 = vmatpush.msra.mxu0 0.0
        %1696 = vmatpush.msra.mxu0 0.0
        %1697 = vmatpush.msra.mxu0 0.0
        %1698 = vmatpush.msra.mxu0 0.0
        %1699 = vmatpush.msra.mxu0 0.0
        %1700 = vmatpush.msra.mxu0 0.0
        %1701 = vmatpush.msra.mxu0 0.0
        %1702 = vmatpush.msra.mxu0 0.0
        %1703 = vmatpush.msra.mxu0 0.0
        %1704 = vmatpush.msra.mxu0 0.0
        %1705 = vmatpush.msra.mxu0 0.0
        %1706 = vmatpush.msra.mxu0 0.0
        %1707 = vmatpush.msra.mxu0 0.0
        %1708 = vmatpush.msra.mxu0 %v1685
        %1709 = vmatpush.msra.mxu0 %v1683
        %1710 = vmatmul.f32.gmra.mxu0 %v1689
        %v1711 = vpop.f32.mrf.mxu0
        %v1712 = vadd.f32 0.0, %v1711
        %1713 = vmatmul.f32.gmra.mxu0 %v1692
        %v1714 = vpop.f32.mrf.mxu0
        %v1715 = vadd.f32 0.0, %v1714
        %1716 = vdwg.mxu0
        %1717 = vrot.lane.b32.xlu0 %v370, 48
        %v1718 = vpop.permute.xlu0 %1717
        %1719 = vrot.lane.b32.xlu0 %v373, 48
        %v1720 = vpop.permute.xlu0 %1719
        %v1724 = vsel %vm393, %v1643, 0
        %v1727 = vsel %vm393, %v1644, 0
        %1729 = vmatpush.msra.mxu0 0.0
        %1730 = vmatpush.msra.mxu0 0.0
        %1731 = vmatpush.msra.mxu0 0.0
        %1732 = vmatpush.msra.mxu0 0.0
        %1733 = vmatpush.msra.mxu0 0.0
        %1734 = vmatpush.msra.mxu0 0.0
        %1735 = vmatpush.msra.mxu0 0.0
        %1736 = vmatpush.msra.mxu0 0.0
        %1737 = vmatpush.msra.mxu0 0.0
        %1738 = vmatpush.msra.mxu0 0.0
        %1739 = vmatpush.msra.mxu0 0.0
        %1740 = vmatpush.msra.mxu0 0.0
        %1741 = vmatpush.msra.mxu0 0.0
        %1742 = vmatpush.msra.mxu0 0.0
        %1743 = vmatpush.msra.mxu0 %v1720
        %1744 = vmatpush.msra.mxu0 %v1718
        %1745 = vmatmul.f32.gmra.mxu0 %v1724
        %v1746 = vpop.f32.mrf.mxu0
        %v1747 = vadd.f32 0.0, %v1746
        %1748 = vmatmul.f32.gmra.mxu0 %v1727
        %v1749 = vpop.f32.mrf.mxu0
        %v1750 = vadd.f32 0.0, %v1749
        %1751 = vdwg.mxu0
        %1752 = vrot.lane.b32.xlu0 %v376, 48
        %v1753 = vpop.permute.xlu0 %1752
        %1754 = vrot.lane.b32.xlu0 %v379, 48
        %v1755 = vpop.permute.xlu0 %1754
        %v1759 = vsel %vm393, %v1645, 0
        %v1762 = vsel %vm393, %v1646, 0
        %1764 = vmatpush.msra.mxu0 0.0
        %1765 = vmatpush.msra.mxu0 0.0
        %1766 = vmatpush.msra.mxu0 0.0
        %1767 = vmatpush.msra.mxu0 0.0
        %1768 = vmatpush.msra.mxu0 0.0
        %1769 = vmatpush.msra.mxu0 0.0
        %1770 = vmatpush.msra.mxu0 0.0
        %1771 = vmatpush.msra.mxu0 0.0
        %1772 = vmatpush.msra.mxu0 0.0
        %1773 = vmatpush.msra.mxu0 0.0
        %1774 = vmatpush.msra.mxu0 0.0
        %1775 = vmatpush.msra.mxu0 0.0
        %1776 = vmatpush.msra.mxu0 0.0
        %1777 = vmatpush.msra.mxu0 0.0
        %1778 = vmatpush.msra.mxu0 %v1755
        %1779 = vmatpush.msra.mxu0 %v1753
        %1780 = vmatmul.f32.gmra.mxu0 %v1759
        %v1781 = vpop.f32.mrf.mxu0
        %v1782 = vadd.f32 0.0, %v1781
        %1783 = vmatmul.f32.gmra.mxu0 %v1762
        %v1784 = vpop.f32.mrf.mxu0
        %v1785 = vadd.f32 0.0, %v1784
        %1786 = vdwg.mxu0
        %v1788 = vsel %vm393, %v1677, 0
        %v1791 = vsel %vm393, %v1680, 0
        %v1794 = vsel %vm393, %v1712, 0
        %v1797 = vsel %vm393, %v1715, 0
        %v1800 = vsel %vm393, %v1747, 0
        %v1803 = vsel %vm393, %v1750, 0
        %v1806 = vsel %vm393, %v1782, 0
        %v1809 = vsel %vm393, %v1785, 0
        %1811 = vmatpush.msra.mxu0 0.0
        %1812 = vmatpush.msra.mxu0 0.0
        %1813 = vmatpush.msra.mxu0 0.0
        %1814 = vmatpush.msra.mxu0 0.0
        %1815 = vmatpush.msra.mxu0 0.0
        %1816 = vmatpush.msra.mxu0 0.0
        %1817 = vmatpush.msra.mxu0 0.0
        %1818 = vmatpush.msra.mxu0 0.0
        %1819 = vmatpush.msra.mxu0 0.0
        %1820 = vmatpush.msra.mxu0 0.0
        %1821 = vmatpush.msra.mxu0 0.0
        %1822 = vmatpush.msra.mxu0 0.0
        %1823 = vmatpush.msra.mxu0 0.0
        %1824 = vmatpush.msra.mxu0 0.0
        %1825 = vmatpush.msra.mxu0 %v384
        %1826 = vmatpush.msra.mxu0 %v383
        %1827 = vmatmul.f32.gmra.mxu0 %v1788
        %v1828 = vpop.f32.mrf.mxu0
        %v1829 = vadd.f32 0.0, %v1828
        %1830 = vmatmul.f32.gmra.mxu0 %v1791
        %v1831 = vpop.f32.mrf.mxu0
        %v1832 = vadd.f32 0.0, %v1831
        %1833 = vmatmul.f32.gmra.mxu0 %v1794
        %v1834 = vpop.f32.mrf.mxu0
        %v1835 = vadd.f32 0.0, %v1834
        %1836 = vmatmul.f32.gmra.mxu0 %v1797
        %v1837 = vpop.f32.mrf.mxu0
        %v1838 = vadd.f32 0.0, %v1837
        %1839 = vmatmul.f32.gmra.mxu0 %v1800
        %v1840 = vpop.f32.mrf.mxu0
        %v1841 = vadd.f32 0.0, %v1840
        %1842 = vmatmul.f32.gmra.mxu0 %v1803
        %v1843 = vpop.f32.mrf.mxu0
        %v1844 = vadd.f32 0.0, %v1843
        %1845 = vmatmul.f32.gmra.mxu0 %v1806
        %v1846 = vpop.f32.mrf.mxu0
        %v1847 = vadd.f32 0.0, %v1846
        %1848 = vmatmul.f32.gmra.mxu0 %v1809
        %v1849 = vpop.f32.mrf.mxu0
        %v1850 = vadd.f32 0.0, %v1849
        %1851 = vdwg.mxu0
        %v1853 = vsel %vm393, %v962, 0
        %v1856 = vsel %vm393, %v965, 0
        %v1859 = vsel %vm393, %v999, 0
        %v1862 = vsel %vm393, %v1002, 0
        %v1865 = vsel %vm393, %v1036, 0
        %v1868 = vsel %vm393, %v1039, 0
        %v1871 = vsel %vm393, %v1073, 0
        %v1874 = vsel %vm393, %v1076, 0
        %1876 = vmatpush.msra.mxu0 0.0
        %1877 = vmatpush.msra.mxu0 0.0
        %1878 = vmatpush.msra.mxu0 0.0
        %1879 = vmatpush.msra.mxu0 0.0
        %1880 = vmatpush.msra.mxu0 0.0
        %1881 = vmatpush.msra.mxu0 0.0
        %1882 = vmatpush.msra.mxu0 0.0
        %1883 = vmatpush.msra.mxu0 0.0
        %1884 = vmatpush.msra.mxu0 0.0
        %1885 = vmatpush.msra.mxu0 0.0
        %1886 = vmatpush.msra.mxu0 0.0
        %1887 = vmatpush.msra.mxu0 0.0
        %1888 = vmatpush.msra.mxu0 0.0
        %1889 = vmatpush.msra.mxu0 0.0
        %1890 = vmatpush.msra.mxu0 %v382
        %1891 = vmatpush.msra.mxu0 %v381
        %1892 = vmatmul.f32.gmra.mxu0 %v1853
        %v1893 = vpop.f32.mrf.mxu0
        %v1894 = vadd.f32 %v1829, %v1893
        %1895 = vmatmul.f32.gmra.mxu0 %v1856
        %v1896 = vpop.f32.mrf.mxu0
        %v1897 = vadd.f32 %v1832, %v1896
        %1898 = vmatmul.f32.gmra.mxu0 %v1859
        %v1899 = vpop.f32.mrf.mxu0
        %v1900 = vadd.f32 %v1835, %v1899
        %1901 = vmatmul.f32.gmra.mxu0 %v1862
        %v1902 = vpop.f32.mrf.mxu0
        %v1903 = vadd.f32 %v1838, %v1902
        %1904 = vmatmul.f32.gmra.mxu0 %v1865
        %v1905 = vpop.f32.mrf.mxu0
        %v1906 = vadd.f32 %v1841, %v1905
        %1907 = vmatmul.f32.gmra.mxu0 %v1868
        %v1908 = vpop.f32.mrf.mxu0
        %v1909 = vadd.f32 %v1844, %v1908
        %1910 = vmatmul.f32.gmra.mxu0 %v1871
        %v1911 = vpop.f32.mrf.mxu0
        %v1912 = vadd.f32 %v1847, %v1911
        %1913 = vmatmul.f32.gmra.mxu0 %v1874
        %v1914 = vpop.f32.mrf.mxu0
        %v1915 = vadd.f32 %v1850, %v1914
        %1916 = vdwg.mxu0
        %v1917 = vld [vmem:[%s6] sm:$0x1]
        %v1919 = vperm.slane %v1917, 0
        %v1921 = vadd.f32 %v1894, %v1919
        %v1922 = vadd.f32 %v1897, %v1919
        %v1923 = vadd.f32 %v1900, %v1919
        %v1924 = vadd.f32 %v1903, %v1919
        %v1925 = vadd.f32 %v1906, %v1919
        %v1926 = vadd.f32 %v1909, %v1919
        %v1927 = vadd.f32 %v1912, %v1919
        %v1928 = vadd.f32 %v1915, %v1919
        %1929 = vst.msk [vmem:[%s297] sm:$0xff] %vm315, %v1921
        %1930 = vst.msk [vmem:[%s297 + $0x8] sm:$0xff] %vm315, %v1922
        %1931 = vst.msk [vmem:[%s297 + $0x10] sm:$0xff] %vm315, %v1923
        %1932 = vst.msk [vmem:[%s297 + $0x18] sm:$0xff] %vm315, %v1924
        %1933 = vst.msk [vmem:[%s297 + $0x20] sm:$0xff] %vm315, %v1925
        %1934 = vst.msk [vmem:[%s297 + $0x28] sm:$0xff] %vm315, %v1926
        %1935 = vst.msk [vmem:[%s297 + $0x30] sm:$0xff] %vm315, %v1927
        %1936 = vst.msk [vmem:[%s297 + $0x38] sm:$0xff] %vm315, %v1928
        %s1937 = smul.u32 8, %s19
        %p1938 = scmp.lt.s32.totalorder %s1937, 15
        %s1939 = scalar_select %p1938, %s1937, 15
        %s1940 = smul.addr %s1939, 8
        %s1941 = scalar_lea.vmem %s7, %s1940
        // Predicated region
        $region53: #{fwd.4} parent=47 // pred_check
          %p1942 = pneg %p189
        $region54: #{fwd.4} parent=47 // pred_check_branch
          %1944 = sbr.rel (%p1942) target = $region56
        $region55: #{fwd.4} parent=47 // pred_region
          %s1945 = smul.u32 8, %s19
        $region56: #{fwd.4} parent=47 // pred_fallthru
          _
      $region48: #{fwd.4} parent=5 // pred_fallthru
        _
      %p1946 = scmp.le.s32.totalorder 2, %s14
      // Predicated region
      $region57: #{fwd.4} parent=5 // pred_check
        %p1947 = pneg %p1946
      $region58: #{fwd.4} parent=5 // pred_check_branch
        %1949 = sbr.rel (%p1947) target = $region60
      $region59: #{fwd.4} parent=5 // pred_region
        %s1950 = ssub.s32 %s14, 2
        // Predicated region
        $region61: #{fwd.4} parent=59 // pred_check
          %p1951 = pneg %p195
        $region62: #{fwd.4} parent=59 // pred_check_branch
          %1953 = sbr.rel (%p1951) target = $region64
        $region63: #{fwd.4} parent=59 // pred_region
          %s1954 = smul.u32 8, %s20
          %p1955 = scmp.lt.s32.totalorder %s1954, 15
          %s1956 = scalar_select %p1955, %s1954, 15
          %s1957 = smul.addr %s1956, 8
          %s1958 = scalar_lea.vmem %s7, %s1957
        $region64: #{fwd.4} parent=59 // pred_fallthru
          _
      $region60: #{fwd.4} parent=5 // pred_fallthru
        _
    $region6: #{fwd.4} parent=1 // loop_footer
      %s18 = sadd.s32 1, %s14
    $region7: #{fwd.4} parent=1 // loop_footer_branch
      %13 = sbr.rel target = $region3
    $region8: #{fwd.4} parent=1 // loop_exit
      _
    %1959 = vsyncpa [#allocation3], 1
    %s1960 = scalar_lea.sflag [#allocation3], 1
    %1961 = vsyncpa %s1960, 1

// kernel: fwd.6
$region0: #{fwd.6}
  #allocation0 [shape = 'u32[]', space=smem, size = 0x4, offset = 0x4, fixed_abs, tag = 'smem constant byte address 0x4 - core index']
  #allocation1 [shape = 'u32[72,128]{1,0:T(1,128)}', space=vmem, size = 0x9000, scoped, tag = 'internal scratch']
  %s0 = inlined_call_operand.vmem [shape: f32[8,16,32], index: 0, kind: input, shape index: {}]
  %s1 = inlined_call_operand.vmem [shape: f32[32,96], index: 1, kind: input, shape index: {}]
  %s2 = inlined_call_operand.vmem [shape: f32[1,96], index: 2, kind: input, shape index: {}]
  %s3 = inlined_call_operand.vmem [shape: f32[2], index: 3, kind: input, shape index: {}]
  %s4 = inlined_call_operand.vmem [shape: f32[2,16,16], index: 4, kind: input, shape index: {}]
  %s5 = inlined_call_operand.vmem [shape: f32[4,16,16], index: 5, kind: input, shape index: {}]
  %s6 = inlined_call_operand.vmem [shape: f32[32,32], index: 6, kind: input, shape index: {}]
  %s7 = inlined_call_operand.vmem [shape: f32[1,32], index: 7, kind: input, shape index: {}]
  %s8 = inlined_call_operand.vmem [shape: f32[128,32], index: 8, kind: output, shape index: {}]
  %s9 = sld [smem:[#allocation0]]
  $region69: #{fwd.6} parent=0
    _
  %s11 = ssub.s32 1, %s9
  %s12 = scalar_select 0, %s11, %s9
  $region1: #{fwd.6} parent=0
    #allocation2 [shape = 'u8[512]{0}', space=smem, size = 0x200, scoped, tag = 'input window, operand 3, single buffered']
    #allocation3 [shape = 's32[2]{0}', space=sflag, size = 0x8, scoped, tag = 'scoped memory for fwd.6']
    %13 = vsyncpa [#allocation3], 0
    loop: start=0, step=1, limit=4
    $region2: #{fwd.6} parent=1 // loop_pre_header
      _
    $region3: #{fwd.6} parent=1 // loop_header
      %s15 = sphi 0, %s19
      %p16 = scmp.ge.s32.totalorder %s15, 4
      %s25 = sphi 0, %s27
      %s28 = sphi 0, %s25
      %s29 = sphi 0, %s28
      %s45 = sphi 0, %s29
      %s49 = sphi 0, %s49
      %s51 = sphi 0, %s49
      %s52 = sphi 0, %s51
      %s66 = sphi 0, %s52
      %s70 = sphi 0, %s70
      %s72 = sphi 0, %s70
      %s73 = sphi 0, %s72
      %s87 = sphi 0, %s73
      %s91 = sphi 0, %s91
      %s93 = sphi 0, %s91
      %s94 = sphi 0, %s93
      %s108 = sphi 0, %s94
      %s112 = sphi 0, %s112
      %s114 = sphi 0, %s112
      %s115 = sphi 0, %s114
      %s129 = sphi 0, %s115
      %s133 = sphi 0, %s133
      %s135 = sphi 0, %s133
      %s136 = sphi 0, %s135
      %s150 = sphi 0, %s136
      %s154 = sphi 0, %s154
      %s156 = sphi 0, %s154
      %s157 = sphi 0, %s156
      %s171 = sphi 0, %s157
      %s175 = sphi 0, %s175
      %s177 = sphi 0, %s175
      %s178 = sphi 0, %s177
      %s192 = sphi 0, %s178
      %s198 = sphi 0, %s200
      %s201 = sphi 0, %s198
      %s202 = sphi 0, %s201
      %s218 = sphi 0, %s202
    $region4: #{fwd.6} parent=1 // loop_header_branch
      %18 = sbr.rel (%p16) target = $region8
    $region5: #{fwd.6} parent=1 // loop_body
      %s20 = ssub.s32 %s15, 1
      %s21 = ssub.s32 %s15, 2
      %s22 = sadd.s32 %s15, 1
      %s23 = ssub.s32 %s15, %s22
      %p24 = scmp.eq.s32.totalorder %s23, 0
      %s26 = sadd.s32 %s25, 1
      %s27 = scalar_select %p24, %s25, %s26
      %p30 = pneg %p24
      %p31 = scmp.eq.s32.totalorder %s15, 1
      %p32 = por %p30, %p31
      %p33 = scmp.ne.s32.totalorder %s25, %s28
      %p34 = scmp.eq.s32.totalorder %s15, 0
      %p35 = por %p33, %p34
      %p36 = scmp.ne.s32.totalorder %s25, %s28
      %p37 = scmp.eq.s32.totalorder %s20, 1
      %p38 = por %p36, %p37
      %p39 = scmp.ne.s32.totalorder %s28, %s29
      %p40 = scmp.eq.s32.totalorder %s20, 0
      %p41 = por %p39, %p40
      %p42 = scmp.ne.s32.totalorder %s28, %s29
      %p43 = scmp.eq.s32.totalorder %s21, 1
      %p44 = por %p42, %p43
      %p46 = scmp.ne.s32.totalorder %s29, %s45
      %p47 = scmp.eq.s32.totalorder %s21, 0
      %p48 = por %p46, %p47
      %s50 = sadd.s32 %s49, 1
      %p53 = scmp.eq.s32.totalorder %s15, 1
      %p54 = scmp.ne.s32.totalorder %s49, %s51
      %p55 = scmp.eq.s32.totalorder %s15, 0
      %p56 = por %p54, %p55
      %p57 = scmp.ne.s32.totalorder %s49, %s51
      %p58 = scmp.eq.s32.totalorder %s20, 1
      %p59 = por %p57, %p58
      %p60 = scmp.ne.s32.totalorder %s51, %s52
      %p61 = scmp.eq.s32.totalorder %s20, 0
      %p62 = por %p60, %p61
      %p63 = scmp.ne.s32.totalorder %s51, %s52
      %p64 = scmp.eq.s32.totalorder %s21, 1
      %p65 = por %p63, %p64
      %p67 = scmp.ne.s32.totalorder %s52, %s66
      %p68 = scmp.eq.s32.totalorder %s21, 0
      %p69 = por %p67, %p68
      %s71 = sadd.s32 %s70, 1
      %p74 = scmp.eq.s32.totalorder %s15, 1
      %p75 = scmp.ne.s32.totalorder %s70, %s72
      %p76 = scmp.eq.s32.totalorder %s15, 0
      %p77 = por %p75, %p76
      %p78 = scmp.ne.s32.totalorder %s70, %s72
      %p79 = scmp.eq.s32.totalorder %s20, 1
      %p80 = por %p78, %p79
      %p81 = scmp.ne.s32.totalorder %s72, %s73
      %p82 = scmp.eq.s32.totalorder %s20, 0
      %p83 = por %p81, %p82
      %p84 = scmp.ne.s32.totalorder %s72, %s73
      %p85 = scmp.eq.s32.totalorder %s21, 1
      %p86 = por %p84, %p85
      %p88 = scmp.ne.s32.totalorder %s73, %s87
      %p89 = scmp.eq.s32.totalorder %s21, 0
      %p90 = por %p88, %p89
      %s92 = sadd.s32 %s91, 1
      %p95 = scmp.eq.s32.totalorder %s15, 1
      %p96 = scmp.ne.s32.totalorder %s91, %s93
      %p97 = scmp.eq.s32.totalorder %s15, 0
      %p98 = por %p96, %p97
      %p99 = scmp.ne.s32.totalorder %s91, %s93
      %p100 = scmp.eq.s32.totalorder %s20, 1
      %p101 = por %p99, %p100
      %p102 = scmp.ne.s32.totalorder %s93, %s94
      %p103 = scmp.eq.s32.totalorder %s20, 0
      %p104 = por %p102, %p103
      %p105 = scmp.ne.s32.totalorder %s93, %s94
      %p106 = scmp.eq.s32.totalorder %s21, 1
      %p107 = por %p105, %p106
      %p109 = scmp.ne.s32.totalorder %s94, %s108
      %p110 = scmp.eq.s32.totalorder %s21, 0
      %p111 = por %p109, %p110
      %s113 = sadd.s32 %s112, 1
      %p116 = scmp.eq.s32.totalorder %s15, 1
      %p117 = scmp.ne.s32.totalorder %s112, %s114
      %p118 = scmp.eq.s32.totalorder %s15, 0
      %p119 = por %p117, %p118
      %p120 = scmp.ne.s32.totalorder %s112, %s114
      %p121 = scmp.eq.s32.totalorder %s20, 1
      %p122 = por %p120, %p121
      %p123 = scmp.ne.s32.totalorder %s114, %s115
      %p124 = scmp.eq.s32.totalorder %s20, 0
      %p125 = por %p123, %p124
      %p126 = scmp.ne.s32.totalorder %s114, %s115
      %p127 = scmp.eq.s32.totalorder %s21, 1
      %p128 = por %p126, %p127
      %p130 = scmp.ne.s32.totalorder %s115, %s129
      %p131 = scmp.eq.s32.totalorder %s21, 0
      %p132 = por %p130, %p131
      %s134 = sadd.s32 %s133, 1
      %p137 = scmp.eq.s32.totalorder %s15, 1
      %p138 = scmp.ne.s32.totalorder %s133, %s135
      %p139 = scmp.eq.s32.totalorder %s15, 0
      %p140 = por %p138, %p139
      %p141 = scmp.ne.s32.totalorder %s133, %s135
      %p142 = scmp.eq.s32.totalorder %s20, 1
      %p143 = por %p141, %p142
      %p144 = scmp.ne.s32.totalorder %s135, %s136
      %p145 = scmp.eq.s32.totalorder %s20, 0
      %p146 = por %p144, %p145
      %p147 = scmp.ne.s32.totalorder %s135, %s136
      %p148 = scmp.eq.s32.totalorder %s21, 1
      %p149 = por %p147, %p148
      %p151 = scmp.ne.s32.totalorder %s136, %s150
      %p152 = scmp.eq.s32.totalorder %s21, 0
      %p153 = por %p151, %p152
      %s155 = sadd.s32 %s154, 1
      %p158 = scmp.eq.s32.totalorder %s15, 1
      %p159 = scmp.ne.s32.totalorder %s154, %s156
      %p160 = scmp.eq.s32.totalorder %s15, 0
      %p161 = por %p159, %p160
      %p162 = scmp.ne.s32.totalorder %s154, %s156
      %p163 = scmp.eq.s32.totalorder %s20, 1
      %p164 = por %p162, %p163
      %p165 = scmp.ne.s32.totalorder %s156, %s157
      %p166 = scmp.eq.s32.totalorder %s20, 0
      %p167 = por %p165, %p166
      %p168 = scmp.ne.s32.totalorder %s156, %s157
      %p169 = scmp.eq.s32.totalorder %s21, 1
      %p170 = por %p168, %p169
      %p172 = scmp.ne.s32.totalorder %s157, %s171
      %p173 = scmp.eq.s32.totalorder %s21, 0
      %p174 = por %p172, %p173
      %s176 = sadd.s32 %s175, 1
      %p179 = scmp.eq.s32.totalorder %s15, 1
      %p180 = scmp.ne.s32.totalorder %s175, %s177
      %p181 = scmp.eq.s32.totalorder %s15, 0
      %p182 = por %p180, %p181
      %p183 = scmp.ne.s32.totalorder %s175, %s177
      %p184 = scmp.eq.s32.totalorder %s20, 1
      %p185 = por %p183, %p184
      %p186 = scmp.ne.s32.totalorder %s177, %s178
      %p187 = scmp.eq.s32.totalorder %s20, 0
      %p188 = por %p186, %p187
      %p189 = scmp.ne.s32.totalorder %s177, %s178
      %p190 = scmp.eq.s32.totalorder %s21, 1
      %p191 = por %p189, %p190
      %p193 = scmp.ne.s32.totalorder %s178, %s192
      %p194 = scmp.eq.s32.totalorder %s21, 0
      %p195 = por %p193, %p194
      %s196 = ssub.s32 %s15, %s22
      %p197 = scmp.eq.s32.totalorder %s196, 0
      %s199 = sadd.s32 %s198, 1
      %s200 = scalar_select %p197, %s198, %s199
      %p203 = pneg %p197
      %p204 = scmp.eq.s32.totalorder %s15, 1
      %p205 = por %p203, %p204
      %p206 = scmp.ne.s32.totalorder %s198, %s201
      %p207 = scmp.eq.s32.totalorder %s15, 0
      %p208 = por %p206, %p207
      %p209 = scmp.ne.s32.totalorder %s198, %s201
      %p210 = scmp.eq.s32.totalorder %s20, 1
      %p211 = por %p209, %p210
      %p212 = scmp.ne.s32.totalorder %s201, %s202
      %p213 = scmp.eq.s32.totalorder %s20, 0
      %p214 = por %p212, %p213
      %p215 = scmp.ne.s32.totalorder %s201, %s202
      %p216 = scmp.eq.s32.totalorder %s21, 1
      %p217 = por %p215, %p216
      %p219 = scmp.ne.s32.totalorder %s202, %s218
      %p220 = scmp.eq.s32.totalorder %s21, 0
      %p221 = por %p219, %p220
      %p222 = scmp.le.s32.totalorder 1, %s15
      %p223 = scmp.lt.s32.totalorder %s15, 3
      %p224 = pnand %p222, %p223
      %p225 = pneg %p224
      // Predicated region
      $region9: #{fwd.6} parent=5 // pred_check
        _
      $region10: #{fwd.6} parent=5 // pred_check_branch
        %227 = sbr.rel (%p224) target = $region12
      $region11: #{fwd.6} parent=5 // pred_region
        %s228 = ssub.s32 %s15, 1
        // Predicated region
        $region13: #{fwd.6} parent=11 // pred_check
          %p229 = pneg %p62
        $region14: #{fwd.6} parent=11 // pred_check_branch
          %231 = sbr.rel (%p229) target = $region16
        $region15: #{fwd.6} parent=11 // pred_region
          _
        $region16: #{fwd.6} parent=11 // pred_fallthru
          _
        // Predicated region
        $region17: #{fwd.6} parent=11 // pred_check
          %p232 = pneg %p83
        $region18: #{fwd.6} parent=11 // pred_check_branch
          %234 = sbr.rel (%p232) target = $region20
        $region19: #{fwd.6} parent=11 // pred_region
          _
        $region20: #{fwd.6} parent=11 // pred_fallthru
          _
        // Predicated region
        $region21: #{fwd.6} parent=11 // pred_check
          %p235 = pneg %p104
        $region22: #{fwd.6} parent=11 // pred_check_branch
          %237 = sbr.rel (%p235) target = $region24
        $region23: #{fwd.6} parent=11 // pred_region
          %239 = vsyncadd [#allocation3], 0
          %s241 = sshll.u32 %s3, 4
          %s242 = int_to_ptr.vmem [resolvable:$true] %s241
          %244 = dma.vmem_to_smem %s242, 16, [#allocation2], [#allocation3]
        $region24: #{fwd.6} parent=11 // pred_fallthru
          _
        // Predicated region
        $region25: #{fwd.6} parent=11 // pred_check
          %p245 = pneg %p125
        $region26: #{fwd.6} parent=11 // pred_check_branch
          %247 = sbr.rel (%p245) target = $region28
        $region27: #{fwd.6} parent=11 // pred_region
          _
        $region28: #{fwd.6} parent=11 // pred_fallthru
          _
        // Predicated region
        $region29: #{fwd.6} parent=11 // pred_check
          %p248 = pneg %p146
        $region30: #{fwd.6} parent=11 // pred_check_branch
          %250 = sbr.rel (%p248) target = $region32
        $region31: #{fwd.6} parent=11 // pred_region
          _
        $region32: #{fwd.6} parent=11 // pred_fallthru
          _
        // Predicated region
        $region33: #{fwd.6} parent=11 // pred_check
          %p251 = pneg %p167
        $region34: #{fwd.6} parent=11 // pred_check_branch
          %253 = sbr.rel (%p251) target = $region36
        $region35: #{fwd.6} parent=11 // pred_region
          _
        $region36: #{fwd.6} parent=11 // pred_fallthru
          _
        // Predicated region
        $region37: #{fwd.6} parent=11 // pred_check
          %p254 = pneg %p188
        $region38: #{fwd.6} parent=11 // pred_check_branch
          %256 = sbr.rel (%p254) target = $region40
        $region39: #{fwd.6} parent=11 // pred_region
          _
        $region40: #{fwd.6} parent=11 // pred_fallthru
          _
      $region12: #{fwd.6} parent=5 // pred_fallthru
        _
      %p257 = scmp.lt.s32.totalorder %s15, 2
      // Predicated region
      $region41: #{fwd.6} parent=5 // pred_check
        %p258 = pneg %p257
      $region42: #{fwd.6} parent=5 // pred_check_branch
        %260 = sbr.rel (%p258) target = $region44
      $region43: #{fwd.6} parent=5 // pred_region
        // Predicated region
        $region45: #{fwd.6} parent=43 // pred_check
          %p261 = pneg %p35
        $region46: #{fwd.6} parent=43 // pred_check_branch
          %263 = sbr.rel (%p261) target = $region48
        $region47: #{fwd.6} parent=43 // pred_region
          %s264 = smul.u32 4, %s15
          %p265 = scmp.lt.s32.totalorder %s264, 7
          %s266 = scalar_select %p265, %s264, 7
          %s267 = smul.addr %s266, 2
          %s268 = smul.addr %s267, 8
          %s269 = scalar_lea.vmem %s0, %s268
          %s270 = smul.u32 4, %s15
        $region48: #{fwd.6} parent=43 // pred_fallthru
          _
      $region44: #{fwd.6} parent=5 // pred_fallthru
        _
      %p271 = scmp.le.s32.totalorder 1, %s15
      %p272 = scmp.lt.s32.totalorder %s15, 3
      %p273 = pnand %p271, %p272
      %p274 = pneg %p273
      // Predicated region
      $region49: #{fwd.6} parent=5 // pred_check
        _
      $region50: #{fwd.6} parent=5 // pred_check_branch
        %276 = sbr.rel (%p273) target = $region52
      $region51: #{fwd.6} parent=5 // pred_region
        %s277 = ssub.s32 %s15, 1
        // Predicated region
        $region53: #{fwd.6} parent=51 // pred_check
          %p278 = pneg %p104
        $region54: #{fwd.6} parent=51 // pred_check_branch
          %280 = sbr.rel (%p278) target = $region56
        $region55: #{fwd.6} parent=51 // pred_region
          %282 = dma.done [#allocation3], 16
        $region56: #{fwd.6} parent=51 // pred_fallthru
          _
        %283 = sfence
        %s284 = smul.u32 4, %s20
        %p285 = scmp.lt.s32.totalorder %s284, 7
        %s286 = scalar_select %p285, %s284, 7
        %s287 = smul.addr %s286, 2
        %s288 = smul.addr %s287, 8
        %s289 = scalar_lea.vmem %s0, %s288
        %p290 = pneg %p41
        %p291 = pneg %p38
        %p292 = pneg %p62
        %p293 = pneg %p59
        %p294 = pneg %p83
        %p295 = pneg %p80
        %p296 = pneg %p104
        %p297 = pneg %p101
        %p298 = pneg %p125
        %p299 = pneg %p122
        %p300 = pneg %p146
        %p301 = pneg %p143
        %p302 = pneg %p167
        %p303 = pneg %p164
        %p304 = pneg %p188
        %p305 = pneg %p185
        %p306 = pneg %p214
        %p307 = pneg %p211
        %s308 = smul.u32 8, %s20
        %p309 = scmp.lt.s32.totalorder %s308, 15
        %s310 = scalar_select %p309, %s308, 15
        %s311 = smul.addr %s310, 8
        %s312 = scalar_lea.vmem %s8, %s311
        %s313 = smul.u32 4, %s20
        %p314 = scmp.lt.s32.totalorder %s313, 7
        %s315 = scalar_select %p314, %s313, 7
        %s316 = smul.addr %s315, 2
        %s317 = smul.addr %s316, 8
        %s318 = scalar_lea.vmem %s0, %s317
        %s319 = smul.u32 4, %s20
        %s320 = smul.u32 8, %s20
        %p321 = scmp.lt.s32.totalorder %s320, 15
        %s322 = scalar_select %p321, %s320, 15
        %s323 = smul.addr %s322, 8
        %s324 = scalar_lea.vmem %s8, %s323
        %s325 = smul.u32 8, %s20
        %v326 = vld [vmem:[%s318] sm:$0xff]
        %v327 = vld [vmem:[%s318 + $0x8] sm:$0xff]
        %v328 = vld [vmem:[%s318 + $0x10] sm:$0xff]
        %v329 = vld [vmem:[%s318 + $0x18] sm:$0xff]
        %v330 = vld [vmem:[%s318 + $0x20] sm:$0xff]
        %v331 = vld [vmem:[%s318 + $0x28] sm:$0xff]
        %v332 = vld [vmem:[%s318 + $0x30] sm:$0xff]
        %v333 = vld [vmem:[%s318 + $0x38] sm:$0xff]
        %v334 = vld [vmem:[%s1] sm:$0xff]
        %v335 = vld [vmem:[%s1 + $0x8] sm:$0xff]
        %v336 = vld [vmem:[%s1 + $0x10] sm:$0xff]
        %v337 = vld [vmem:[%s1 + $0x18] sm:$0xff]
        %v338 = vld [vmem:[%s2] sm:$0x1]
        %v340 = vperm.slane %v338, 0
        %vm342 = vcmask 261120
        %v344 = vsel %vm342, %v326, 0
        %v347 = vsel %vm342, %v327, 0
        %v350 = vsel %vm342, %v328, 0
        %v353 = vsel %vm342, %v329, 0
        %v356 = vsel %vm342, %v330, 0
        %v359 = vsel %vm342, %v331, 0
        %v362 = vsel %vm342, %v332, 0
        %v365 = vsel %vm342, %v333, 0
        %367 = vmatpush.msra.mxu0 0.0
        %368 = vmatpush.msra.mxu0 0.0
        %369 = vmatpush.msra.mxu0 0.0
        %370 = vmatpush.msra.mxu0 0.0
        %371 = vmatpush.msra.mxu0 0.0
        %372 = vmatpush.msra.mxu0 0.0
        %373 = vmatpush.msra.mxu0 0.0
        %374 = vmatpush.msra.mxu0 0.0
        %375 = vmatpush.msra.mxu0 0.0
        %376 = vmatpush.msra.mxu0 0.0
        %377 = vmatpush.msra.mxu0 0.0
        %378 = vmatpush.msra.mxu0 0.0
        %379 = vmatpush.msra.mxu0 %v337
        %380 = vmatpush.msra.mxu0 %v336
        %381 = vmatpush.msra.mxu0 %v335
        %382 = vmatpush.msra.mxu0 %v334
        %383 = vmatmul.f32.gmra.mxu0 %v344
        %v384 = vpop.f32.mrf.mxu0
        %v385 = vadd.f32 %v340, %v384
        %386 = vmatmul.f32.gmra.mxu0 %v347
        %v387 = vpop.f32.mrf.mxu0
        %v388 = vadd.f32 %v340, %v387
        %389 = vmatmul.f32.gmra.mxu0 %v350
        %v390 = vpop.f32.mrf.mxu0
        %v391 = vadd.f32 %v340, %v390
        %392 = vmatmul.f32.gmra.mxu0 %v353
        %v393 = vpop.f32.mrf.mxu0
        %v394 = vadd.f32 %v340, %v393
        %395 = vmatmul.f32.gmra.mxu0 %v356
        %v396 = vpop.f32.mrf.mxu0
        %v397 = vadd.f32 %v340, %v396
        %398 = vmatmul.f32.gmra.mxu0 %v359
        %v399 = vpop.f32.mrf.mxu0
        %v400 = vadd.f32 %v340, %v399
        %401 = vmatmul.f32.gmra.mxu0 %v362
        %v402 = vpop.f32.mrf.mxu0
        %v403 = vadd.f32 %v340, %v402
        %404 = vmatmul.f32.gmra.mxu0 %v365
        %v405 = vpop.f32.mrf.mxu0
        %v406 = vadd.f32 %v340, %v405
        %407 = vdwg.mxu0
        %v408 = vld [vmem:[%s5] sm:$0xff]
        %v409 = vld [vmem:[%s5 + $0x8] sm:$0xff]
        %v410 = vld [vmem:[%s5 + $0x10] sm:$0xff]
        %v411 = vld [vmem:[%s5 + $0x18] sm:$0xff]
        %v412 = vld [vmem:[%s5 + $0x20] sm:$0xff]
        %v413 = vld [vmem:[%s5 + $0x28] sm:$0xff]
        %v414 = vld [vmem:[%s5 + $0x30] sm:$0xff]
        %v415 = vld [vmem:[%s5 + $0x38] sm:$0xff]
        %v416 = vld [vmem:[%s6] sm:$0xff]
        %v417 = vld [vmem:[%s6 + $0x8] sm:$0xff]
        %v418 = vld [vmem:[%s6 + $0x10] sm:$0xff]
        %v419 = vld [vmem:[%s6 + $0x18] sm:$0xff]
        %v420 = vmul.f32 %v385, %v385
        %v421 = vmul.f32 %v388, %v388
        %v422 = vmul.f32 %v391, %v391
        %v423 = vmul.f32 %v394, %v394
        %v424 = vmul.f32 %v397, %v397
        %v425 = vmul.f32 %v400, %v400
        %v426 = vmul.f32 %v403, %v403
        %v427 = vmul.f32 %v406, %v406
        %vm428 = vcmask 130048
        %v429 = vsel %vm428, %v420, 0.0
        %430 = vadd.xlane.f32.xlu0 %v429
        %v431 = vpop.xlane.xlu0 %430
        %v432 = vsel %vm428, %v421, 0.0
        %433 = vadd.xlane.f32.xlu0 %v432
        %v434 = vpop.xlane.xlu0 %433
        %v435 = vsel %vm428, %v422, 0.0
        %436 = vadd.xlane.f32.xlu0 %v435
        %v437 = vpop.xlane.xlu0 %436
        %v438 = vsel %vm428, %v423, 0.0
        %439 = vadd.xlane.f32.xlu0 %v438
        %v440 = vpop.xlane.xlu0 %439
        %v441 = vsel %vm428, %v424, 0.0
        %442 = vadd.xlane.f32.xlu0 %v441
        %v443 = vpop.xlane.xlu0 %442
        %v444 = vsel %vm428, %v425, 0.0
        %445 = vadd.xlane.f32.xlu0 %v444
        %v446 = vpop.xlane.xlu0 %445
        %v447 = vsel %vm428, %v426, 0.0
        %448 = vadd.xlane.f32.xlu0 %v447
        %v449 = vpop.xlane.xlu0 %448
        %v450 = vsel %vm428, %v427, 0.0
        %451 = vadd.xlane.f32.xlu0 %v450
        %v452 = vpop.xlane.xlu0 %451
        %v453 = vmax.f32 %v431, 1e-24
        %v454 = vmax.f32 %v434, 1e-24
        %v455 = vmax.f32 %v437, 1e-24
        %v456 = vmax.f32 %v440, 1e-24
        %v457 = vmax.f32 %v443, 1e-24
        %v458 = vmax.f32 %v446, 1e-24
        %v459 = vmax.f32 %v449, 1e-24
        %v460 = vmax.f32 %v452, 1e-24
        %v461 = vrsqrt.pop %v453
        %v462 = vmul.f32 %v461, %v453
        %v463 = vmul.f32 %v462, %v461
        %v464 = vmul.f32 0.5, %v463
        %v465 = vsub.f32 1.5, %v464
        %v466 = vmul.f32 %v461, %v465
        %vm467 = vweird.f32 %v453
        %vm468 = vweird.f32 %v461
        %vm469 = vmor %vm467, %vm468
        %v470 = vsel %vm469, %v461, %v466
        %v471 = vrsqrt.pop %v454
        %v472 = vmul.f32 %v471, %v454
        %v473 = vmul.f32 %v472, %v471
        %v474 = vmul.f32 0.5, %v473
        %v475 = vsub.f32 1.5, %v474
        %v476 = vmul.f32 %v471, %v475
        %vm477 = vweird.f32 %v454
        %vm478 = vweird.f32 %v471
        %vm479 = vmor %vm477, %vm478
        %v480 = vsel %vm479, %v471, %v476
        %v481 = vrsqrt.pop %v455
        %v482 = vmul.f32 %v481, %v455
        %v483 = vmul.f32 %v482, %v481
        %v484 = vmul.f32 0.5, %v483
        %v485 = vsub.f32 1.5, %v484
        %v486 = vmul.f32 %v481, %v485
        %vm487 = vweird.f32 %v455
        %vm488 = vweird.f32 %v481
        %vm489 = vmor %vm487, %vm488
        %v490 = vsel %vm489, %v481, %v486
        %v491 = vrsqrt.pop %v456
        %v492 = vmul.f32 %v491, %v456
        %v493 = vmul.f32 %v492, %v491
        %v494 = vmul.f32 0.5, %v493
        %v495 = vsub.f32 1.5, %v494
        %v496 = vmul.f32 %v491, %v495
        %vm497 = vweird.f32 %v456
        %vm498 = vweird.f32 %v491
        %vm499 = vmor %vm497, %vm498
        %v500 = vsel %vm499, %v491, %v496
        %v501 = vrsqrt.pop %v457
        %v502 = vmul.f32 %v501, %v457
        %v503 = vmul.f32 %v502, %v501
        %v504 = vmul.f32 0.5, %v503
        %v505 = vsub.f32 1.5, %v504
        %v506 = vmul.f32 %v501, %v505
        %vm507 = vweird.f32 %v457
        %vm508 = vweird.f32 %v501
        %vm509 = vmor %vm507, %vm508
        %v510 = vsel %vm509, %v501, %v506
        %v511 = vrsqrt.pop %v458
        %v512 = vmul.f32 %v511, %v458
        %v513 = vmul.f32 %v512, %v511
        %v514 = vmul.f32 0.5, %v513
        %v515 = vsub.f32 1.5, %v514
        %v516 = vmul.f32 %v511, %v515
        %vm517 = vweird.f32 %v458
        %vm518 = vweird.f32 %v511
        %vm519 = vmor %vm517, %vm518
        %v520 = vsel %vm519, %v511, %v516
        %v521 = vrsqrt.pop %v459
        %v522 = vmul.f32 %v521, %v459
        %v523 = vmul.f32 %v522, %v521
        %v524 = vmul.f32 0.5, %v523
        %v525 = vsub.f32 1.5, %v524
        %v526 = vmul.f32 %v521, %v525
        %vm527 = vweird.f32 %v459
        %vm528 = vweird.f32 %v521
        %vm529 = vmor %vm527, %vm528
        %v530 = vsel %vm529, %v521, %v526
        %v531 = vrsqrt.pop %v460
        %v532 = vmul.f32 %v531, %v460
        %v533 = vmul.f32 %v532, %v531
        %v534 = vmul.f32 0.5, %v533
        %v535 = vsub.f32 1.5, %v534
        %v536 = vmul.f32 %v531, %v535
        %vm537 = vweird.f32 %v460
        %vm538 = vweird.f32 %v531
        %vm539 = vmor %vm537, %vm538
        %v540 = vsel %vm539, %v531, %v536
        %v541 = vmul.f32 %v385, %v470
        %v542 = vmul.f32 %v388, %v480
        %v543 = vmul.f32 %v391, %v490
        %v544 = vmul.f32 %v394, %v500
        %v545 = vmul.f32 %v397, %v510
        %v546 = vmul.f32 %v400, %v520
        %v547 = vmul.f32 %v403, %v530
        %v548 = vmul.f32 %v406, %v540
        %557 = vrot.lane.b32.xlu0 %v420, 96
        %v558 = vpop.permute.xlu0 %557
        %559 = vrot.lane.b32.xlu0 %v421, 96
        %v560 = vpop.permute.xlu0 %559
        %561 = vrot.lane.b32.xlu0 %v422, 96
        %v562 = vpop.permute.xlu0 %561
        %563 = vrot.lane.b32.xlu0 %v423, 96
        %v564 = vpop.permute.xlu0 %563
        %565 = vrot.lane.b32.xlu0 %v424, 96
        %v566 = vpop.permute.xlu0 %565
        %567 = vrot.lane.b32.xlu0 %v425, 96
        %v568 = vpop.permute.xlu0 %567
        %569 = vrot.lane.b32.xlu0 %v426, 96
        %v570 = vpop.permute.xlu0 %569
        %571 = vrot.lane.b32.xlu0 %v427, 96
        %v572 = vpop.permute.xlu0 %571
        %v581 = vsel %vm428, %v558, 0.0
        %582 = vadd.xlane.f32.xlu0 %v581
        %v583 = vpop.xlane.xlu0 %582
        %v584 = vsel %vm428, %v560, 0.0
        %585 = vadd.xlane.f32.xlu0 %v584
        %v586 = vpop.xlane.xlu0 %585
        %v587 = vsel %vm428, %v562, 0.0
        %588 = vadd.xlane.f32.xlu0 %v587
        %v589 = vpop.xlane.xlu0 %588
        %v590 = vsel %vm428, %v564, 0.0
        %591 = vadd.xlane.f32.xlu0 %v590
        %v592 = vpop.xlane.xlu0 %591
        %v593 = vsel %vm428, %v566, 0.0
        %594 = vadd.xlane.f32.xlu0 %v593
        %v595 = vpop.xlane.xlu0 %594
        %v596 = vsel %vm428, %v568, 0.0
        %597 = vadd.xlane.f32.xlu0 %v596
        %v598 = vpop.xlane.xlu0 %597
        %v599 = vsel %vm428, %v570, 0.0
        %600 = vadd.xlane.f32.xlu0 %v599
        %v601 = vpop.xlane.xlu0 %600
        %v602 = vsel %vm428, %v572, 0.0
        %603 = vadd.xlane.f32.xlu0 %v602
        %v604 = vpop.xlane.xlu0 %603
        %v605 = vmax.f32 %v583, 1e-24
        %v606 = vmax.f32 %v586, 1e-24
        %v607 = vmax.f32 %v589, 1e-24
        %v608 = vmax.f32 %v592, 1e-24
        %v609 = vmax.f32 %v595, 1e-24
        %v610 = vmax.f32 %v598, 1e-24
        %v611 = vmax.f32 %v601, 1e-24
        %v612 = vmax.f32 %v604, 1e-24
        %v613 = vrsqrt.pop %v605
        %v614 = vmul.f32 %v613, %v605
        %v615 = vmul.f32 %v614, %v613
        %v616 = vmul.f32 0.5, %v615
        %v617 = vsub.f32 1.5, %v616
        %v618 = vmul.f32 %v613, %v617
        %vm619 = vweird.f32 %v605
        %vm620 = vweird.f32 %v613
        %vm621 = vmor %vm619, %vm620
        %v622 = vsel %vm621, %v613, %v618
        %v623 = vrsqrt.pop %v606
        %v624 = vmul.f32 %v623, %v606
        %v625 = vmul.f32 %v624, %v623
        %v626 = vmul.f32 0.5, %v625
        %v627 = vsub.f32 1.5, %v626
        %v628 = vmul.f32 %v623, %v627
        %vm629 = vweird.f32 %v606
        %vm630 = vweird.f32 %v623
        %vm631 = vmor %vm629, %vm630
        %v632 = vsel %vm631, %v623, %v628
        %v633 = vrsqrt.pop %v607
        %v634 = vmul.f32 %v633, %v607
        %v635 = vmul.f32 %v634, %v633
        %v636 = vmul.f32 0.5, %v635
        %v637 = vsub.f32 1.5, %v636
        %v638 = vmul.f32 %v633, %v637
        %vm639 = vweird.f32 %v607
        %vm640 = vweird.f32 %v633
        %vm641 = vmor %vm639, %vm640
        %v642 = vsel %vm641, %v633, %v638
        %v643 = vrsqrt.pop %v608
        %v644 = vmul.f32 %v643, %v608
        %v645 = vmul.f32 %v644, %v643
        %v646 = vmul.f32 0.5, %v645
        %v647 = vsub.f32 1.5, %v646
        %v648 = vmul.f32 %v643, %v647
        %vm649 = vweird.f32 %v608
        %vm650 = vweird.f32 %v643
        %vm651 = vmor %vm649, %vm650
        %v652 = vsel %vm651, %v643, %v648
        %v653 = vrsqrt.pop %v609
        %v654 = vmul.f32 %v653, %v609
        %v655 = vmul.f32 %v654, %v653
        %v656 = vmul.f32 0.5, %v655
        %v657 = vsub.f32 1.5, %v656
        %v658 = vmul.f32 %v653, %v657
        %vm659 = vweird.f32 %v609
        %vm660 = vweird.f32 %v653
        %vm661 = vmor %vm659, %vm660
        %v662 = vsel %vm661, %v653, %v658
        %v663 = vrsqrt.pop %v610
        %v664 = vmul.f32 %v663, %v610
        %v665 = vmul.f32 %v664, %v663
        %v666 = vmul.f32 0.5, %v665
        %v667 = vsub.f32 1.5, %v666
        %v668 = vmul.f32 %v663, %v667
        %vm669 = vweird.f32 %v610
        %vm670 = vweird.f32 %v663
        %vm671 = vmor %vm669, %vm670
        %v672 = vsel %vm671, %v663, %v668
        %v673 = vrsqrt.pop %v611
        %v674 = vmul.f32 %v673, %v611
        %v675 = vmul.f32 %v674, %v673
        %v676 = vmul.f32 0.5, %v675
        %v677 = vsub.f32 1.5, %v676
        %v678 = vmul.f32 %v673, %v677
        %vm679 = vweird.f32 %v611
        %vm680 = vweird.f32 %v673
        %vm681 = vmor %vm679, %vm680
        %v682 = vsel %vm681, %v673, %v678
        %v683 = vrsqrt.pop %v612
        %v684 = vmul.f32 %v683, %v612
        %v685 = vmul.f32 %v684, %v683
        %v686 = vmul.f32 0.5, %v685
        %v687 = vsub.f32 1.5, %v686
        %v688 = vmul.f32 %v683, %v687
        %vm689 = vweird.f32 %v612
        %vm690 = vweird.f32 %v683
        %vm691 = vmor %vm689, %vm690
        %v692 = vsel %vm691, %v683, %v688
        %v693 = vmul.f32 %v385, %v622
        %v694 = vmul.f32 %v388, %v632
        %v695 = vmul.f32 %v391, %v642
        %v696 = vmul.f32 %v394, %v652
        %v697 = vmul.f32 %v397, %v662
        %v698 = vmul.f32 %v400, %v672
        %v699 = vmul.f32 %v403, %v682
        %v700 = vmul.f32 %v406, %v692
        %703 = vrot.lane.b32.xlu0 %v693, 96
        %v704 = vpop.permute.xlu0 %703
        %705 = vrot.lane.b32.xlu0 %v694, 96
        %v706 = vpop.permute.xlu0 %705
        %v708 = vsel %vm428, %v541, 0
        %v711 = vsel %vm428, %v542, 0
        %v713 = vsel %vm428, %v704, 0
        %v715 = vsel %vm428, %v706, 0
        %717 = vmatpush.xpose.msra.mxu0 0.0
        %718 = vmatpush.xpose.msra.mxu0 0.0
        %719 = vmatpush.xpose.msra.mxu0 0.0
        %720 = vmatpush.xpose.msra.mxu0 0.0
        %721 = vmatpush.xpose.msra.mxu0 0.0
        %722 = vmatpush.xpose.msra.mxu0 0.0
        %723 = vmatpush.xpose.msra.mxu0 0.0
        %724 = vmatpush.xpose.msra.mxu0 0.0
        %725 = vmatpush.xpose.msra.mxu0 0.0
        %726 = vmatpush.xpose.msra.mxu0 0.0
        %727 = vmatpush.xpose.msra.mxu0 0.0
        %728 = vmatpush.xpose.msra.mxu0 0.0
        %729 = vmatpush.xpose.msra.mxu0 0.0
        %730 = vmatpush.xpose.msra.mxu0 0.0
        %731 = vmatpush.xpose.msra.mxu0 %v715
        %732 = vmatpush.xpose.msra.mxu0 %v713
        %733 = vmatmul.f32.gmra.mxu0 %v708
        %v734 = vpop.f32.mrf.mxu0
        %v735 = vadd.f32 0.0, %v734
        %736 = vmatmul.f32.gmra.mxu0 %v711
        %v737 = vpop.f32.mrf.mxu0
        %v738 = vadd.f32 0.0, %v737
        %739 = vdwg.mxu0
        %742 = vrot.lane.b32.xlu0 %v695, 96
        %v743 = vpop.permute.xlu0 %742
        %744 = vrot.lane.b32.xlu0 %v696, 96
        %v745 = vpop.permute.xlu0 %744
        %v747 = vsel %vm428, %v543, 0
        %v750 = vsel %vm428, %v544, 0
        %v752 = vsel %vm428, %v743, 0
        %v754 = vsel %vm428, %v745, 0
        %756 = vmatpush.xpose.msra.mxu0 0.0
        %757 = vmatpush.xpose.msra.mxu0 0.0
        %758 = vmatpush.xpose.msra.mxu0 0.0
        %759 = vmatpush.xpose.msra.mxu0 0.0
        %760 = vmatpush.xpose.msra.mxu0 0.0
        %761 = vmatpush.xpose.msra.mxu0 0.0
        %762 = vmatpush.xpose.msra.mxu0 0.0
        %763 = vmatpush.xpose.msra.mxu0 0.0
        %764 = vmatpush.xpose.msra.mxu0 0.0
        %765 = vmatpush.xpose.msra.mxu0 0.0
        %766 = vmatpush.xpose.msra.mxu0 0.0
        %767 = vmatpush.xpose.msra.mxu0 0.0
        %768 = vmatpush.xpose.msra.mxu0 0.0
        %769 = vmatpush.xpose.msra.mxu0 0.0
        %770 = vmatpush.xpose.msra.mxu0 %v754
        %771 = vmatpush.xpose.msra.mxu0 %v752
        %772 = vmatmul.f32.gmra.mxu0 %v747
        %v773 = vpop.f32.mrf.mxu0
        %v774 = vadd.f32 0.0, %v773
        %775 = vmatmul.f32.gmra.mxu0 %v750
        %v776 = vpop.f32.mrf.mxu0
        %v777 = vadd.f32 0.0, %v776
        %778 = vdwg.mxu0
        %781 = vrot.lane.b32.xlu0 %v697, 96
        %v782 = vpop.permute.xlu0 %781
        %783 = vrot.lane.b32.xlu0 %v698, 96
        %v784 = vpop.permute.xlu0 %783
        %v786 = vsel %vm428, %v545, 0
        %v789 = vsel %vm428, %v546, 0
        %v791 = vsel %vm428, %v782, 0
        %v793 = vsel %vm428, %v784, 0
        %795 = vmatpush.xpose.msra.mxu0 0.0
        %796 = vmatpush.xpose.msra.mxu0 0.0
        %797 = vmatpush.xpose.msra.mxu0 0.0
        %798 = vmatpush.xpose.msra.mxu0 0.0
        %799 = vmatpush.xpose.msra.mxu0 0.0
        %800 = vmatpush.xpose.msra.mxu0 0.0
        %801 = vmatpush.xpose.msra.mxu0 0.0
        %802 = vmatpush.xpose.msra.mxu0 0.0
        %803 = vmatpush.xpose.msra.mxu0 0.0
        %804 = vmatpush.xpose.msra.mxu0 0.0
        %805 = vmatpush.xpose.msra.mxu0 0.0
        %806 = vmatpush.xpose.msra.mxu0 0.0
        %807 = vmatpush.xpose.msra.mxu0 0.0
        %808 = vmatpush.xpose.msra.mxu0 0.0
        %809 = vmatpush.xpose.msra.mxu0 %v793
        %810 = vmatpush.xpose.msra.mxu0 %v791
        %811 = vmatmul.f32.gmra.mxu0 %v786
        %v812 = vpop.f32.mrf.mxu0
        %v813 = vadd.f32 0.0, %v812
        %814 = vmatmul.f32.gmra.mxu0 %v789
        %v815 = vpop.f32.mrf.mxu0
        %v816 = vadd.f32 0.0, %v815
        %817 = vdwg.mxu0
        %820 = vrot.lane.b32.xlu0 %v699, 96
        %v821 = vpop.permute.xlu0 %820
        %822 = vrot.lane.b32.xlu0 %v700, 96
        %v823 = vpop.permute.xlu0 %822
        %v825 = vsel %vm428, %v547, 0
        %v828 = vsel %vm428, %v548, 0
        %v830 = vsel %vm428, %v821, 0
        %v832 = vsel %vm428, %v823, 0
        %834 = vmatpush.xpose.msra.mxu0 0.0
        %835 = vmatpush.xpose.msra.mxu0 0.0
        %836 = vmatpush.xpose.msra.mxu0 0.0
        %837 = vmatpush.xpose.msra.mxu0 0.0
        %838 = vmatpush.xpose.msra.mxu0 0.0
        %839 = vmatpush.xpose.msra.mxu0 0.0
        %840 = vmatpush.xpose.msra.mxu0 0.0
        %841 = vmatpush.xpose.msra.mxu0 0.0
        %842 = vmatpush.xpose.msra.mxu0 0.0
        %843 = vmatpush.xpose.msra.mxu0 0.0
        %844 = vmatpush.xpose.msra.mxu0 0.0
        %845 = vmatpush.xpose.msra.mxu0 0.0
        %846 = vmatpush.xpose.msra.mxu0 0.0
        %847 = vmatpush.xpose.msra.mxu0 0.0
        %848 = vmatpush.xpose.msra.mxu0 %v832
        %849 = vmatpush.xpose.msra.mxu0 %v830
        %850 = vmatmul.f32.gmra.mxu0 %v825
        %v851 = vpop.f32.mrf.mxu0
        %v852 = vadd.f32 0.0, %v851
        %853 = vmatmul.f32.gmra.mxu0 %v828
        %v854 = vpop.f32.mrf.mxu0
        %v855 = vadd.f32 0.0, %v854
        %856 = vdwg.mxu0
        %s857 = sld [smem:[#allocation2]]
        %v858 = vstv %s857
        %v859 = vmul.f32 %v735, %v858
        %v860 = vmul.f32 %v738, %v858
        %v861 = vmul.f32 %v774, %v858
        %v862 = vmul.f32 %v777, %v858
        %v863 = vmul.f32 %v813, %v858
        %v864 = vmul.f32 %v816, %v858
        %v865 = vmul.f32 %v852, %v858
        %v866 = vmul.f32 %v855, %v858
        %v867 = vld [vmem:[%s4] sm:$0xff]
        %v868 = vld [vmem:[%s4 + $0x8] sm:$0xff]
        %v869 = vadd.f32 %v859, %v867
        %v870 = vadd.f32 %v860, %v868
        %v871 = vadd.f32 %v861, %v867
        %v872 = vadd.f32 %v862, %v868
        %v873 = vadd.f32 %v863, %v867
        %v874 = vadd.f32 %v864, %v868
        %v875 = vadd.f32 %v865, %v867
        %v876 = vadd.f32 %v866, %v868
        %v877 = vadd.f32 %v869, %v408
        %v878 = vadd.f32 %v870, %v409
        %v879 = vadd.f32 %v871, %v410
        %v880 = vadd.f32 %v872, %v411
        %v881 = vadd.f32 %v873, %v412
        %v882 = vadd.f32 %v874, %v413
        %v883 = vadd.f32 %v875, %v414
        %v884 = vadd.f32 %v876, %v415
        %v885 = vsel %vm428, %v877, -inf
        %886 = vmax.xlane.f32.xlu0 %v885
        %v887 = vpop.xlane.xlu0 %886
        %v888 = vsel %vm428, %v878, -inf
        %889 = vmax.xlane.f32.xlu0 %v888
        %v890 = vpop.xlane.xlu0 %889
        %v891 = vsel %vm428, %v879, -inf
        %892 = vmax.xlane.f32.xlu0 %v891
        %v893 = vpop.xlane.xlu0 %892
        %v894 = vsel %vm428, %v880, -inf
        %895 = vmax.xlane.f32.xlu0 %v894
        %v896 = vpop.xlane.xlu0 %895
        %v897 = vsel %vm428, %v881, -inf
        %898 = vmax.xlane.f32.xlu0 %v897
        %v899 = vpop.xlane.xlu0 %898
        %v900 = vsel %vm428, %v882, -inf
        %901 = vmax.xlane.f32.xlu0 %v900
        %v902 = vpop.xlane.xlu0 %901
        %v903 = vsel %vm428, %v883, -inf
        %904 = vmax.xlane.f32.xlu0 %v903
        %v905 = vpop.xlane.xlu0 %904
        %v906 = vsel %vm428, %v884, -inf
        %907 = vmax.xlane.f32.xlu0 %v906
        %v908 = vpop.xlane.xlu0 %907
        %v909 = vsub.f32 %v877, %v887
        %v910 = vsub.f32 %v878, %v890
        %v911 = vsub.f32 %v879, %v893
        %v912 = vsub.f32 %v880, %v896
        %v913 = vsub.f32 %v881, %v899
        %v914 = vsub.f32 %v882, %v902
        %v915 = vsub.f32 %v883, %v905
        %v916 = vsub.f32 %v884, %v908
        %v917 = vmul.f32 %v909, 1.442695
        %v918 = vpow.pop %v917
        %v919 = vmul.f32 %v910, 1.442695
        %v920 = vpow.pop %v919
        %v921 = vmul.f32 %v911, 1.442695
        %v922 = vpow.pop %v921
        %v923 = vmul.f32 %v912, 1.442695
        %v924 = vpow.pop %v923
        %v925 = vmul.f32 %v913, 1.442695
        %v926 = vpow.pop %v925
        %v927 = vmul.f32 %v914, 1.442695
        %v928 = vpow.pop %v927
        %v929 = vmul.f32 %v915, 1.442695
        %v930 = vpow.pop %v929
        %v931 = vmul.f32 %v916, 1.442695
        %v932 = vpow.pop %v931
        %v933 = vsel %vm428, %v918, 0.0
        %934 = vadd.xlane.f32.xlu0 %v933
        %v935 = vpop.xlane.xlu0 %934
        %v936 = vsel %vm428, %v920, 0.0
        %937 = vadd.xlane.f32.xlu0 %v936
        %v938 = vpop.xlane.xlu0 %937
        %v939 = vsel %vm428, %v922, 0.0
        %940 = vadd.xlane.f32.xlu0 %v939
        %v941 = vpop.xlane.xlu0 %940
        %v942 = vsel %vm428, %v924, 0.0
        %943 = vadd.xlane.f32.xlu0 %v942
        %v944 = vpop.xlane.xlu0 %943
        %v945 = vsel %vm428, %v926, 0.0
        %946 = vadd.xlane.f32.xlu0 %v945
        %v947 = vpop.xlane.xlu0 %946
        %v948 = vsel %vm428, %v928, 0.0
        %949 = vadd.xlane.f32.xlu0 %v948
        %v950 = vpop.xlane.xlu0 %949
        %v951 = vsel %vm428, %v930, 0.0
        %952 = vadd.xlane.f32.xlu0 %v951
        %v953 = vpop.xlane.xlu0 %952
        %v954 = vsel %vm428, %v932, 0.0
        %955 = vadd.xlane.f32.xlu0 %v954
        %v956 = vpop.xlane.xlu0 %955
        %v957 = vrcp.pop %v935
        %v958 = vrcp.pop %v938
        %v959 = vrcp.pop %v941
        %v960 = vrcp.pop %v944
        %v961 = vrcp.pop %v947
        %v962 = vrcp.pop %v950
        %v963 = vrcp.pop %v953
        %v964 = vrcp.pop %v956
        %v965 = vmul.f32 %v918, %v957
        %v966 = vmul.f32 %v920, %v958
        %v967 = vmul.f32 %v922, %v959
        %v968 = vmul.f32 %v924, %v960
        %v969 = vmul.f32 %v926, %v961
        %v970 = vmul.f32 %v928, %v962
        %v971 = vmul.f32 %v930, %v963
        %v972 = vmul.f32 %v932, %v964
        %975 = vrot.lane.b32.xlu0 %v385, 64
        %v976 = vpop.permute.xlu0 %975
        %977 = vrot.lane.b32.xlu0 %v388, 64
        %v978 = vpop.permute.xlu0 %977
        %v982 = vsel %vm428, %v965, 0
        %v985 = vsel %vm428, %v966, 0
        %987 = vmatpush.msra.mxu0 0.0
        %988 = vmatpush.msra.mxu0 0.0
        %989 = vmatpush.msra.mxu0 0.0
        %990 = vmatpush.msra.mxu0 0.0
        %991 = vmatpush.msra.mxu0 0.0
        %992 = vmatpush.msra.mxu0 0.0
        %993 = vmatpush.msra.mxu0 0.0
        %994 = vmatpush.msra.mxu0 0.0
        %995 = vmatpush.msra.mxu0 0.0
        %996 = vmatpush.msra.mxu0 0.0
        %997 = vmatpush.msra.mxu0 0.0
        %998 = vmatpush.msra.mxu0 0.0
        %999 = vmatpush.msra.mxu0 0.0
        %1000 = vmatpush.msra.mxu0 0.0
        %1001 = vmatpush.msra.mxu0 %v978
        %1002 = vmatpush.msra.mxu0 %v976
        %1003 = vmatmul.f32.gmra.mxu0 %v982
        %v1004 = vpop.f32.mrf.mxu0
        %v1005 = vadd.f32 0.0, %v1004
        %1006 = vmatmul.f32.gmra.mxu0 %v985
        %v1007 = vpop.f32.mrf.mxu0
        %v1008 = vadd.f32 0.0, %v1007
        %1009 = vdwg.mxu0
        %1012 = vrot.lane.b32.xlu0 %v391, 64
        %v1013 = vpop.permute.xlu0 %1012
        %1014 = vrot.lane.b32.xlu0 %v394, 64
        %v1015 = vpop.permute.xlu0 %1014
        %v1019 = vsel %vm428, %v967, 0
        %v1022 = vsel %vm428, %v968, 0
        %1024 = vmatpush.msra.mxu0 0.0
        %1025 = vmatpush.msra.mxu0 0.0
        %1026 = vmatpush.msra.mxu0 0.0
        %1027 = vmatpush.msra.mxu0 0.0
        %1028 = vmatpush.msra.mxu0 0.0
        %1029 = vmatpush.msra.mxu0 0.0
        %1030 = vmatpush.msra.mxu0 0.0
        %1031 = vmatpush.msra.mxu0 0.0
        %1032 = vmatpush.msra.mxu0 0.0
        %1033 = vmatpush.msra.mxu0 0.0
        %1034 = vmatpush.msra.mxu0 0.0
        %1035 = vmatpush.msra.mxu0 0.0
        %1036 = vmatpush.msra.mxu0 0.0
        %1037 = vmatpush.msra.mxu0 0.0
        %1038 = vmatpush.msra.mxu0 %v1015
        %1039 = vmatpush.msra.mxu0 %v1013
        %1040 = vmatmul.f32.gmra.mxu0 %v1019
        %v1041 = vpop.f32.mrf.mxu0
        %v1042 = vadd.f32 0.0, %v1041
        %1043 = vmatmul.f32.gmra.mxu0 %v1022
        %v1044 = vpop.f32.mrf.mxu0
        %v1045 = vadd.f32 0.0, %v1044
        %1046 = vdwg.mxu0
        %1049 = vrot.lane.b32.xlu0 %v397, 64
        %v1050 = vpop.permute.xlu0 %1049
        %1051 = vrot.lane.b32.xlu0 %v400, 64
        %v1052 = vpop.permute.xlu0 %1051
        %v1056 = vsel %vm428, %v969, 0
        %v1059 = vsel %vm428, %v970, 0
        %1061 = vmatpush.msra.mxu0 0.0
        %1062 = vmatpush.msra.mxu0 0.0
        %1063 = vmatpush.msra.mxu0 0.0
        %1064 = vmatpush.msra.mxu0 0.0
        %1065 = vmatpush.msra.mxu0 0.0
        %1066 = vmatpush.msra.mxu0 0.0
        %1067 = vmatpush.msra.mxu0 0.0
        %1068 = vmatpush.msra.mxu0 0.0
        %1069 = vmatpush.msra.mxu0 0.0
        %1070 = vmatpush.msra.mxu0 0.0
        %1071 = vmatpush.msra.mxu0 0.0
        %1072 = vmatpush.msra.mxu0 0.0
        %1073 = vmatpush.msra.mxu0 0.0
        %1074 = vmatpush.msra.mxu0 0.0
        %1075 = vmatpush.msra.mxu0 %v1052
        %1076 = vmatpush.msra.mxu0 %v1050
        %1077 = vmatmul.f32.gmra.mxu0 %v1056
        %v1078 = vpop.f32.mrf.mxu0
        %v1079 = vadd.f32 0.0, %v1078
        %1080 = vmatmul.f32.gmra.mxu0 %v1059
        %v1081 = vpop.f32.mrf.mxu0
        %v1082 = vadd.f32 0.0, %v1081
        %1083 = vdwg.mxu0
        %1086 = vrot.lane.b32.xlu0 %v403, 64
        %v1087 = vpop.permute.xlu0 %1086
        %1088 = vrot.lane.b32.xlu0 %v406, 64
        %v1089 = vpop.permute.xlu0 %1088
        %v1093 = vsel %vm428, %v971, 0
        %v1096 = vsel %vm428, %v972, 0
        %1098 = vmatpush.msra.mxu0 0.0
        %1099 = vmatpush.msra.mxu0 0.0
        %1100 = vmatpush.msra.mxu0 0.0
        %1101 = vmatpush.msra.mxu0 0.0
        %1102 = vmatpush.msra.mxu0 0.0
        %1103 = vmatpush.msra.mxu0 0.0
        %1104 = vmatpush.msra.mxu0 0.0
        %1105 = vmatpush.msra.mxu0 0.0
        %1106 = vmatpush.msra.mxu0 0.0
        %1107 = vmatpush.msra.mxu0 0.0
        %1108 = vmatpush.msra.mxu0 0.0
        %1109 = vmatpush.msra.mxu0 0.0
        %1110 = vmatpush.msra.mxu0 0.0
        %1111 = vmatpush.msra.mxu0 0.0
        %1112 = vmatpush.msra.mxu0 %v1089
        %1113 = vmatpush.msra.mxu0 %v1087
        %1114 = vmatmul.f32.gmra.mxu0 %v1093
        %v1115 = vpop.f32.mrf.mxu0
        %v1116 = vadd.f32 0.0, %v1115
        %1117 = vmatmul.f32.gmra.mxu0 %v1096
        %v1118 = vpop.f32.mrf.mxu0
        %v1119 = vadd.f32 0.0, %v1118
        %1120 = vdwg.mxu0
        %1121 = vrot.lane.b32.xlu0 %v420, 112
        %v1122 = vpop.permute.xlu0 %1121
        %1123 = vrot.lane.b32.xlu0 %v421, 112
        %v1124 = vpop.permute.xlu0 %1123
        %1125 = vrot.lane.b32.xlu0 %v422, 112
        %v1126 = vpop.permute.xlu0 %1125
        %1127 = vrot.lane.b32.xlu0 %v423, 112
        %v1128 = vpop.permute.xlu0 %1127
        %1129 = vrot.lane.b32.xlu0 %v424, 112
        %v1130 = vpop.permute.xlu0 %1129
        %1131 = vrot.lane.b32.xlu0 %v425, 112
        %v1132 = vpop.permute.xlu0 %1131
        %1133 = vrot.lane.b32.xlu0 %v426, 112
        %v1134 = vpop.permute.xlu0 %1133
        %1135 = vrot.lane.b32.xlu0 %v427, 112
        %v1136 = vpop.permute.xlu0 %1135
        %v1145 = vsel %vm428, %v1122, 0.0
        %1146 = vadd.xlane.f32.xlu0 %v1145
        %v1147 = vpop.xlane.xlu0 %1146
        %v1148 = vsel %vm428, %v1124, 0.0
        %1149 = vadd.xlane.f32.xlu0 %v1148
        %v1150 = vpop.xlane.xlu0 %1149
        %v1151 = vsel %vm428, %v1126, 0.0
        %1152 = vadd.xlane.f32.xlu0 %v1151
        %v1153 = vpop.xlane.xlu0 %1152
        %v1154 = vsel %vm428, %v1128, 0.0
        %1155 = vadd.xlane.f32.xlu0 %v1154
        %v1156 = vpop.xlane.xlu0 %1155
        %v1157 = vsel %vm428, %v1130, 0.0
        %1158 = vadd.xlane.f32.xlu0 %v1157
        %v1159 = vpop.xlane.xlu0 %1158
        %v1160 = vsel %vm428, %v1132, 0.0
        %1161 = vadd.xlane.f32.xlu0 %v1160
        %v1162 = vpop.xlane.xlu0 %1161
        %v1163 = vsel %vm428, %v1134, 0.0
        %1164 = vadd.xlane.f32.xlu0 %v1163
        %v1165 = vpop.xlane.xlu0 %1164
        %v1166 = vsel %vm428, %v1136, 0.0
        %1167 = vadd.xlane.f32.xlu0 %v1166
        %v1168 = vpop.xlane.xlu0 %1167
        %v1169 = vmax.f32 %v1147, 1e-24
        %v1170 = vmax.f32 %v1150, 1e-24
        %v1171 = vmax.f32 %v1153, 1e-24
        %v1172 = vmax.f32 %v1156, 1e-24
        %v1173 = vmax.f32 %v1159, 1e-24
        %v1174 = vmax.f32 %v1162, 1e-24
        %v1175 = vmax.f32 %v1165, 1e-24
        %v1176 = vmax.f32 %v1168, 1e-24
        %v1177 = vrsqrt.pop %v1169
        %v1178 = vmul.f32 %v1177, %v1169
        %v1179 = vmul.f32 %v1178, %v1177
        %v1180 = vmul.f32 0.5, %v1179
        %v1181 = vsub.f32 1.5, %v1180
        %v1182 = vmul.f32 %v1177, %v1181
        %vm1183 = vweird.f32 %v1169
        %vm1184 = vweird.f32 %v1177
        %vm1185 = vmor %vm1183, %vm1184
        %v1186 = vsel %vm1185, %v1177, %v1182
        %v1187 = vrsqrt.pop %v1170
        %v1188 = vmul.f32 %v1187, %v1170
        %v1189 = vmul.f32 %v1188, %v1187
        %v1190 = vmul.f32 0.5, %v1189
        %v1191 = vsub.f32 1.5, %v1190
        %v1192 = vmul.f32 %v1187, %v1191
        %vm1193 = vweird.f32 %v1170
        %vm1194 = vweird.f32 %v1187
        %vm1195 = vmor %vm1193, %vm1194
        %v1196 = vsel %vm1195, %v1187, %v1192
        %v1197 = vrsqrt.pop %v1171
        %v1198 = vmul.f32 %v1197, %v1171
        %v1199 = vmul.f32 %v1198, %v1197
        %v1200 = vmul.f32 0.5, %v1199
        %v1201 = vsub.f32 1.5, %v1200
        %v1202 = vmul.f32 %v1197, %v1201
        %vm1203 = vweird.f32 %v1171
        %vm1204 = vweird.f32 %v1197
        %vm1205 = vmor %vm1203, %vm1204
        %v1206 = vsel %vm1205, %v1197, %v1202
        %v1207 = vrsqrt.pop %v1172
        %v1208 = vmul.f32 %v1207, %v1172
        %v1209 = vmul.f32 %v1208, %v1207
        %v1210 = vmul.f32 0.5, %v1209
        %v1211 = vsub.f32 1.5, %v1210
        %v1212 = vmul.f32 %v1207, %v1211
        %vm1213 = vweird.f32 %v1172
        %vm1214 = vweird.f32 %v1207
        %vm1215 = vmor %vm1213, %vm1214
        %v1216 = vsel %vm1215, %v1207, %v1212
        %v1217 = vrsqrt.pop %v1173
        %v1218 = vmul.f32 %v1217, %v1173
        %v1219 = vmul.f32 %v1218, %v1217
        %v1220 = vmul.f32 0.5, %v1219
        %v1221 = vsub.f32 1.5, %v1220
        %v1222 = vmul.f32 %v1217, %v1221
        %vm1223 = vweird.f32 %v1173
        %vm1224 = vweird.f32 %v1217
        %vm1225 = vmor %vm1223, %vm1224
        %v1226 = vsel %vm1225, %v1217, %v1222
        %v1227 = vrsqrt.pop %v1174
        %v1228 = vmul.f32 %v1227, %v1174
        %v1229 = vmul.f32 %v1228, %v1227
        %v1230 = vmul.f32 0.5, %v1229
        %v1231 = vsub.f32 1.5, %v1230
        %v1232 = vmul.f32 %v1227, %v1231
        %vm1233 = vweird.f32 %v1174
        %vm1234 = vweird.f32 %v1227
        %vm1235 = vmor %vm1233, %vm1234
        %v1236 = vsel %vm1235, %v1227, %v1232
        %v1237 = vrsqrt.pop %v1175
        %v1238 = vmul.f32 %v1237, %v1175
        %v1239 = vmul.f32 %v1238, %v1237
        %v1240 = vmul.f32 0.5, %v1239
        %v1241 = vsub.f32 1.5, %v1240
        %v1242 = vmul.f32 %v1237, %v1241
        %vm1243 = vweird.f32 %v1175
        %vm1244 = vweird.f32 %v1237
        %vm1245 = vmor %vm1243, %vm1244
        %v1246 = vsel %vm1245, %v1237, %v1242
        %v1247 = vrsqrt.pop %v1176
        %v1248 = vmul.f32 %v1247, %v1176
        %v1249 = vmul.f32 %v1248, %v1247
        %v1250 = vmul.f32 0.5, %v1249
        %v1251 = vsub.f32 1.5, %v1250
        %v1252 = vmul.f32 %v1247, %v1251
        %vm1253 = vweird.f32 %v1176
        %vm1254 = vweird.f32 %v1247
        %vm1255 = vmor %vm1253, %vm1254
        %v1256 = vsel %vm1255, %v1247, %v1252
        %v1257 = vmul.f32 %v385, %v1186
        %v1258 = vmul.f32 %v388, %v1196
        %v1259 = vmul.f32 %v391, %v1206
        %v1260 = vmul.f32 %v394, %v1216
        %v1261 = vmul.f32 %v397, %v1226
        %v1262 = vmul.f32 %v400, %v1236
        %v1263 = vmul.f32 %v403, %v1246
        %v1264 = vmul.f32 %v406, %v1256
        %1265 = vrot.lane.b32.xlu0 %v420, 80
        %v1266 = vpop.permute.xlu0 %1265
        %1267 = vrot.lane.b32.xlu0 %v421, 80
        %v1268 = vpop.permute.xlu0 %1267
        %1269 = vrot.lane.b32.xlu0 %v422, 80
        %v1270 = vpop.permute.xlu0 %1269
        %1271 = vrot.lane.b32.xlu0 %v423, 80
        %v1272 = vpop.permute.xlu0 %1271
        %1273 = vrot.lane.b32.xlu0 %v424, 80
        %v1274 = vpop.permute.xlu0 %1273
        %1275 = vrot.lane.b32.xlu0 %v425, 80
        %v1276 = vpop.permute.xlu0 %1275
        %1277 = vrot.lane.b32.xlu0 %v426, 80
        %v1278 = vpop.permute.xlu0 %1277
        %1279 = vrot.lane.b32.xlu0 %v427, 80
        %v1280 = vpop.permute.xlu0 %1279
        %v1289 = vsel %vm428, %v1266, 0.0
        %1290 = vadd.xlane.f32.xlu0 %v1289
        %v1291 = vpop.xlane.xlu0 %1290
        %v1292 = vsel %vm428, %v1268, 0.0
        %1293 = vadd.xlane.f32.xlu0 %v1292
        %v1294 = vpop.xlane.xlu0 %1293
        %v1295 = vsel %vm428, %v1270, 0.0
        %1296 = vadd.xlane.f32.xlu0 %v1295
        %v1297 = vpop.xlane.xlu0 %1296
        %v1298 = vsel %vm428, %v1272, 0.0
        %1299 = vadd.xlane.f32.xlu0 %v1298
        %v1300 = vpop.xlane.xlu0 %1299
        %v1301 = vsel %vm428, %v1274, 0.0
        %1302 = vadd.xlane.f32.xlu0 %v1301
        %v1303 = vpop.xlane.xlu0 %1302
        %v1304 = vsel %vm428, %v1276, 0.0
        %1305 = vadd.xlane.f32.xlu0 %v1304
        %v1306 = vpop.xlane.xlu0 %1305
        %v1307 = vsel %vm428, %v1278, 0.0
        %1308 = vadd.xlane.f32.xlu0 %v1307
        %v1309 = vpop.xlane.xlu0 %1308
        %v1310 = vsel %vm428, %v1280, 0.0
        %1311 = vadd.xlane.f32.xlu0 %v1310
        %v1312 = vpop.xlane.xlu0 %1311
        %v1313 = vmax.f32 %v1291, 1e-24
        %v1314 = vmax.f32 %v1294, 1e-24
        %v1315 = vmax.f32 %v1297, 1e-24
        %v1316 = vmax.f32 %v1300, 1e-24
        %v1317 = vmax.f32 %v1303, 1e-24
        %v1318 = vmax.f32 %v1306, 1e-24
        %v1319 = vmax.f32 %v1309, 1e-24
        %v1320 = vmax.f32 %v1312, 1e-24
        %v1321 = vrsqrt.pop %v1313
        %v1322 = vmul.f32 %v1321, %v1313
        %v1323 = vmul.f32 %v1322, %v1321
        %v1324 = vmul.f32 0.5, %v1323
        %v1325 = vsub.f32 1.5, %v1324
        %v1326 = vmul.f32 %v1321, %v1325
        %vm1327 = vweird.f32 %v1313
        %vm1328 = vweird.f32 %v1321
        %vm1329 = vmor %vm1327, %vm1328
        %v1330 = vsel %vm1329, %v1321, %v1326
        %v1331 = vrsqrt.pop %v1314
        %v1332 = vmul.f32 %v1331, %v1314
        %v1333 = vmul.f32 %v1332, %v1331
        %v1334 = vmul.f32 0.5, %v1333
        %v1335 = vsub.f32 1.5, %v1334
        %v1336 = vmul.f32 %v1331, %v1335
        %vm1337 = vweird.f32 %v1314
        %vm1338 = vweird.f32 %v1331
        %vm1339 = vmor %vm1337, %vm1338
        %v1340 = vsel %vm1339, %v1331, %v1336
        %v1341 = vrsqrt.pop %v1315
        %v1342 = vmul.f32 %v1341, %v1315
        %v1343 = vmul.f32 %v1342, %v1341
        %v1344 = vmul.f32 0.5, %v1343
        %v1345 = vsub.f32 1.5, %v1344
        %v1346 = vmul.f32 %v1341, %v1345
        %vm1347 = vweird.f32 %v1315
        %vm1348 = vweird.f32 %v1341
        %vm1349 = vmor %vm1347, %vm1348
        %v1350 = vsel %vm1349, %v1341, %v1346
        %v1351 = vrsqrt.pop %v1316
        %v1352 = vmul.f32 %v1351, %v1316
        %v1353 = vmul.f32 %v1352, %v1351
        %v1354 = vmul.f32 0.5, %v1353
        %v1355 = vsub.f32 1.5, %v1354
        %v1356 = vmul.f32 %v1351, %v1355
        %vm1357 = vweird.f32 %v1316
        %vm1358 = vweird.f32 %v1351
        %vm1359 = vmor %vm1357, %vm1358
        %v1360 = vsel %vm1359, %v1351, %v1356
        %v1361 = vrsqrt.pop %v1317
        %v1362 = vmul.f32 %v1361, %v1317
        %v1363 = vmul.f32 %v1362, %v1361
        %v1364 = vmul.f32 0.5, %v1363
        %v1365 = vsub.f32 1.5, %v1364
        %v1366 = vmul.f32 %v1361, %v1365
        %vm1367 = vweird.f32 %v1317
        %vm1368 = vweird.f32 %v1361
        %vm1369 = vmor %vm1367, %vm1368
        %v1370 = vsel %vm1369, %v1361, %v1366
        %v1371 = vrsqrt.pop %v1318
        %v1372 = vmul.f32 %v1371, %v1318
        %v1373 = vmul.f32 %v1372, %v1371
        %v1374 = vmul.f32 0.5, %v1373
        %v1375 = vsub.f32 1.5, %v1374
        %v1376 = vmul.f32 %v1371, %v1375
        %vm1377 = vweird.f32 %v1318
        %vm1378 = vweird.f32 %v1371
        %vm1379 = vmor %vm1377, %vm1378
        %v1380 = vsel %vm1379, %v1371, %v1376
        %v1381 = vrsqrt.pop %v1319
        %v1382 = vmul.f32 %v1381, %v1319
        %v1383 = vmul.f32 %v1382, %v1381
        %v1384 = vmul.f32 0.5, %v1383
        %v1385 = vsub.f32 1.5, %v1384
        %v1386 = vmul.f32 %v1381, %v1385
        %vm1387 = vweird.f32 %v1319
        %vm1388 = vweird.f32 %v1381
        %vm1389 = vmor %vm1387, %vm1388
        %v1390 = vsel %vm1389, %v1381, %v1386
        %v1391 = vrsqrt.pop %v1320
        %v1392 = vmul.f32 %v1391, %v1320
        %v1393 = vmul.f32 %v1392, %v1391
        %v1394 = vmul.f32 0.5, %v1393
        %v1395 = vsub.f32 1.5, %v1394
        %v1396 = vmul.f32 %v1391, %v1395
        %vm1397 = vweird.f32 %v1320
        %vm1398 = vweird.f32 %v1391
        %vm1399 = vmor %vm1397, %vm1398
        %v1400 = vsel %vm1399, %v1391, %v1396
        %v1401 = vmul.f32 %v385, %v1330
        %v1402 = vmul.f32 %v388, %v1340
        %v1403 = vmul.f32 %v391, %v1350
        %v1404 = vmul.f32 %v394, %v1360
        %v1405 = vmul.f32 %v397, %v1370
        %v1406 = vmul.f32 %v400, %v1380
        %v1407 = vmul.f32 %v403, %v1390
        %v1408 = vmul.f32 %v406, %v1400
        %1411 = vrot.lane.b32.xlu0 %v1257, 112
        %v1412 = vpop.permute.xlu0 %1411
        %1413 = vrot.lane.b32.xlu0 %v1258, 112
        %v1414 = vpop.permute.xlu0 %1413
        %1417 = vrot.lane.b32.xlu0 %v1401, 80
        %v1418 = vpop.permute.xlu0 %1417
        %1419 = vrot.lane.b32.xlu0 %v1402, 80
        %v1420 = vpop.permute.xlu0 %1419
        %v1421 = vsel %vm428, %v1412, 0
        %v1423 = vsel %vm428, %v1414, 0
        %v1425 = vsel %vm428, %v1418, 0
        %v1427 = vsel %vm428, %v1420, 0
        %1429 = vmatpush.xpose.msra.mxu0 0.0
        %1430 = vmatpush.xpose.msra.mxu0 0.0
        %1431 = vmatpush.xpose.msra.mxu0 0.0
        %1432 = vmatpush.xpose.msra.mxu0 0.0
        %1433 = vmatpush.xpose.msra.mxu0 0.0
        %1434 = vmatpush.xpose.msra.mxu0 0.0
        %1435 = vmatpush.xpose.msra.mxu0 0.0
        %1436 = vmatpush.xpose.msra.mxu0 0.0
        %1437 = vmatpush.xpose.msra.mxu0 0.0
        %1438 = vmatpush.xpose.msra.mxu0 0.0
        %1439 = vmatpush.xpose.msra.mxu0 0.0
        %1440 = vmatpush.xpose.msra.mxu0 0.0
        %1441 = vmatpush.xpose.msra.mxu0 0.0
        %1442 = vmatpush.xpose.msra.mxu0 0.0
        %1443 = vmatpush.xpose.msra.mxu0 %v1427
        %1444 = vmatpush.xpose.msra.mxu0 %v1425
        %1445 = vmatmul.f32.gmra.mxu0 %v1421
        %v1446 = vpop.f32.mrf.mxu0
        %v1447 = vadd.f32 0.0, %v1446
        %1448 = vmatmul.f32.gmra.mxu0 %v1423
        %v1449 = vpop.f32.mrf.mxu0
        %v1450 = vadd.f32 0.0, %v1449
        %1451 = vdwg.mxu0
        %1454 = vrot.lane.b32.xlu0 %v1259, 112
        %v1455 = vpop.permute.xlu0 %1454
        %1456 = vrot.lane.b32.xlu0 %v1260, 112
        %v1457 = vpop.permute.xlu0 %1456
        %1460 = vrot.lane.b32.xlu0 %v1403, 80
        %v1461 = vpop.permute.xlu0 %1460
        %1462 = vrot.lane.b32.xlu0 %v1404, 80
        %v1463 = vpop.permute.xlu0 %1462
        %v1464 = vsel %vm428, %v1455, 0
        %v1466 = vsel %vm428, %v1457, 0
        %v1468 = vsel %vm428, %v1461, 0
        %v1470 = vsel %vm428, %v1463, 0
        %1472 = vmatpush.xpose.msra.mxu0 0.0
        %1473 = vmatpush.xpose.msra.mxu0 0.0
        %1474 = vmatpush.xpose.msra.mxu0 0.0
        %1475 = vmatpush.xpose.msra.mxu0 0.0
        %1476 = vmatpush.xpose.msra.mxu0 0.0
        %1477 = vmatpush.xpose.msra.mxu0 0.0
        %1478 = vmatpush.xpose.msra.mxu0 0.0
        %1479 = vmatpush.xpose.msra.mxu0 0.0
        %1480 = vmatpush.xpose.msra.mxu0 0.0
        %1481 = vmatpush.xpose.msra.mxu0 0.0
        %1482 = vmatpush.xpose.msra.mxu0 0.0
        %1483 = vmatpush.xpose.msra.mxu0 0.0
        %1484 = vmatpush.xpose.msra.mxu0 0.0
        %1485 = vmatpush.xpose.msra.mxu0 0.0
        %1486 = vmatpush.xpose.msra.mxu0 %v1470
        %1487 = vmatpush.xpose.msra.mxu0 %v1468
        %1488 = vmatmul.f32.gmra.mxu0 %v1464
        %v1489 = vpop.f32.mrf.mxu0
        %v1490 = vadd.f32 0.0, %v1489
        %1491 = vmatmul.f32.gmra.mxu0 %v1466
        %v1492 = vpop.f32.mrf.mxu0
        %v1493 = vadd.f32 0.0, %v1492
        %1494 = vdwg.mxu0
        %1497 = vrot.lane.b32.xlu0 %v1261, 112
        %v1498 = vpop.permute.xlu0 %1497
        %1499 = vrot.lane.b32.xlu0 %v1262, 112
        %v1500 = vpop.permute.xlu0 %1499
        %1503 = vrot.lane.b32.xlu0 %v1405, 80
        %v1504 = vpop.permute.xlu0 %1503
        %1505 = vrot.lane.b32.xlu0 %v1406, 80
        %v1506 = vpop.permute.xlu0 %1505
        %v1507 = vsel %vm428, %v1498, 0
        %v1509 = vsel %vm428, %v1500, 0
        %v1511 = vsel %vm428, %v1504, 0
        %v1513 = vsel %vm428, %v1506, 0
        %1515 = vmatpush.xpose.msra.mxu0 0.0
        %1516 = vmatpush.xpose.msra.mxu0 0.0
        %1517 = vmatpush.xpose.msra.mxu0 0.0
        %1518 = vmatpush.xpose.msra.mxu0 0.0
        %1519 = vmatpush.xpose.msra.mxu0 0.0
        %1520 = vmatpush.xpose.msra.mxu0 0.0
        %1521 = vmatpush.xpose.msra.mxu0 0.0
        %1522 = vmatpush.xpose.msra.mxu0 0.0
        %1523 = vmatpush.xpose.msra.mxu0 0.0
        %1524 = vmatpush.xpose.msra.mxu0 0.0
        %1525 = vmatpush.xpose.msra.mxu0 0.0
        %1526 = vmatpush.xpose.msra.mxu0 0.0
        %1527 = vmatpush.xpose.msra.mxu0 0.0
        %1528 = vmatpush.xpose.msra.mxu0 0.0
        %1529 = vmatpush.xpose.msra.mxu0 %v1513
        %1530 = vmatpush.xpose.msra.mxu0 %v1511
        %1531 = vmatmul.f32.gmra.mxu0 %v1507
        %v1532 = vpop.f32.mrf.mxu0
        %v1533 = vadd.f32 0.0, %v1532
        %1534 = vmatmul.f32.gmra.mxu0 %v1509
        %v1535 = vpop.f32.mrf.mxu0
        %v1536 = vadd.f32 0.0, %v1535
        %1537 = vdwg.mxu0
        %1540 = vrot.lane.b32.xlu0 %v1263, 112
        %v1541 = vpop.permute.xlu0 %1540
        %1542 = vrot.lane.b32.xlu0 %v1264, 112
        %v1543 = vpop.permute.xlu0 %1542
        %1546 = vrot.lane.b32.xlu0 %v1407, 80
        %v1547 = vpop.permute.xlu0 %1546
        %1548 = vrot.lane.b32.xlu0 %v1408, 80
        %v1549 = vpop.permute.xlu0 %1548
        %v1550 = vsel %vm428, %v1541, 0
        %v1552 = vsel %vm428, %v1543, 0
        %v1554 = vsel %vm428, %v1547, 0
        %v1556 = vsel %vm428, %v1549, 0
        %1558 = vmatpush.xpose.msra.mxu0 0.0
        %1559 = vmatpush.xpose.msra.mxu0 0.0
        %1560 = vmatpush.xpose.msra.mxu0 0.0
        %1561 = vmatpush.xpose.msra.mxu0 0.0
        %1562 = vmatpush.xpose.msra.mxu0 0.0
        %1563 = vmatpush.xpose.msra.mxu0 0.0
        %1564 = vmatpush.xpose.msra.mxu0 0.0
        %1565 = vmatpush.xpose.msra.mxu0 0.0
        %1566 = vmatpush.xpose.msra.mxu0 0.0
        %1567 = vmatpush.xpose.msra.mxu0 0.0
        %1568 = vmatpush.xpose.msra.mxu0 0.0
        %1569 = vmatpush.xpose.msra.mxu0 0.0
        %1570 = vmatpush.xpose.msra.mxu0 0.0
        %1571 = vmatpush.xpose.msra.mxu0 0.0
        %1572 = vmatpush.xpose.msra.mxu0 %v1556
        %1573 = vmatpush.xpose.msra.mxu0 %v1554
        %1574 = vmatmul.f32.gmra.mxu0 %v1550
        %v1575 = vpop.f32.mrf.mxu0
        %v1576 = vadd.f32 0.0, %v1575
        %1577 = vmatmul.f32.gmra.mxu0 %v1552
        %v1578 = vpop.f32.mrf.mxu0
        %v1579 = vadd.f32 0.0, %v1578
        %1580 = vdwg.mxu0
        %s1581 = sld [smem:[#allocation2 + $0x1]]
        %v1582 = vstv %s1581
        %v1583 = vmul.f32 %v1447, %v1582
        %v1584 = vmul.f32 %v1450, %v1582
        %v1585 = vmul.f32 %v1490, %v1582
        %v1586 = vmul.f32 %v1493, %v1582
        %v1587 = vmul.f32 %v1533, %v1582
        %v1588 = vmul.f32 %v1536, %v1582
        %v1589 = vmul.f32 %v1576, %v1582
        %v1590 = vmul.f32 %v1579, %v1582
        %s1591 = scalar_lea.vmem %s4, 16
        %v1592 = vld [vmem:[%s1591] sm:$0xff]
        %v1593 = vld [vmem:[%s1591 + $0x8] sm:$0xff]
        %v1594 = vadd.f32 %v1583, %v1592
        %v1595 = vadd.f32 %v1584, %v1593
        %v1596 = vadd.f32 %v1585, %v1592
        %v1597 = vadd.f32 %v1586, %v1593
        %v1598 = vadd.f32 %v1587, %v1592
        %v1599 = vadd.f32 %v1588, %v1593
        %v1600 = vadd.f32 %v1589, %v1592
        %v1601 = vadd.f32 %v1590, %v1593
        %v1602 = vadd.f32 %v1594, %v408
        %v1603 = vadd.f32 %v1595, %v409
        %v1604 = vadd.f32 %v1596, %v410
        %v1605 = vadd.f32 %v1597, %v411
        %v1606 = vadd.f32 %v1598, %v412
        %v1607 = vadd.f32 %v1599, %v413
        %v1608 = vadd.f32 %v1600, %v414
        %v1609 = vadd.f32 %v1601, %v415
        %v1610 = vsel %vm428, %v1602, -inf
        %1611 = vmax.xlane.f32.xlu0 %v1610
        %v1612 = vpop.xlane.xlu0 %1611
        %v1613 = vsel %vm428, %v1603, -inf
        %1614 = vmax.xlane.f32.xlu0 %v1613
        %v1615 = vpop.xlane.xlu0 %1614
        %v1616 = vsel %vm428, %v1604, -inf
        %1617 = vmax.xlane.f32.xlu0 %v1616
        %v1618 = vpop.xlane.xlu0 %1617
        %v1619 = vsel %vm428, %v1605, -inf
        %1620 = vmax.xlane.f32.xlu0 %v1619
        %v1621 = vpop.xlane.xlu0 %1620
        %v1622 = vsel %vm428, %v1606, -inf
        %1623 = vmax.xlane.f32.xlu0 %v1622
        %v1624 = vpop.xlane.xlu0 %1623
        %v1625 = vsel %vm428, %v1607, -inf
        %1626 = vmax.xlane.f32.xlu0 %v1625
        %v1627 = vpop.xlane.xlu0 %1626
        %v1628 = vsel %vm428, %v1608, -inf
        %1629 = vmax.xlane.f32.xlu0 %v1628
        %v1630 = vpop.xlane.xlu0 %1629
        %v1631 = vsel %vm428, %v1609, -inf
        %1632 = vmax.xlane.f32.xlu0 %v1631
        %v1633 = vpop.xlane.xlu0 %1632
        %v1634 = vsub.f32 %v1602, %v1612
        %v1635 = vsub.f32 %v1603, %v1615
        %v1636 = vsub.f32 %v1604, %v1618
        %v1637 = vsub.f32 %v1605, %v1621
        %v1638 = vsub.f32 %v1606, %v1624
        %v1639 = vsub.f32 %v1607, %v1627
        %v1640 = vsub.f32 %v1608, %v1630
        %v1641 = vsub.f32 %v1609, %v1633
        %v1642 = vmul.f32 %v1634, 1.442695
        %v1643 = vpow.pop %v1642
        %v1644 = vmul.f32 %v1635, 1.442695
        %v1645 = vpow.pop %v1644
        %v1646 = vmul.f32 %v1636, 1.442695
        %v1647 = vpow.pop %v1646
        %v1648 = vmul.f32 %v1637, 1.442695
        %v1649 = vpow.pop %v1648
        %v1650 = vmul.f32 %v1638, 1.442695
        %v1651 = vpow.pop %v1650
        %v1652 = vmul.f32 %v1639, 1.442695
        %v1653 = vpow.pop %v1652
        %v1654 = vmul.f32 %v1640, 1.442695
        %v1655 = vpow.pop %v1654
        %v1656 = vmul.f32 %v1641, 1.442695
        %v1657 = vpow.pop %v1656
        %v1658 = vsel %vm428, %v1643, 0.0
        %1659 = vadd.xlane.f32.xlu0 %v1658
        %v1660 = vpop.xlane.xlu0 %1659
        %v1661 = vsel %vm428, %v1645, 0.0
        %1662 = vadd.xlane.f32.xlu0 %v1661
        %v1663 = vpop.xlane.xlu0 %1662
        %v1664 = vsel %vm428, %v1647, 0.0
        %1665 = vadd.xlane.f32.xlu0 %v1664
        %v1666 = vpop.xlane.xlu0 %1665
        %v1667 = vsel %vm428, %v1649, 0.0
        %1668 = vadd.xlane.f32.xlu0 %v1667
        %v1669 = vpop.xlane.xlu0 %1668
        %v1670 = vsel %vm428, %v1651, 0.0
        %1671 = vadd.xlane.f32.xlu0 %v1670
        %v1672 = vpop.xlane.xlu0 %1671
        %v1673 = vsel %vm428, %v1653, 0.0
        %1674 = vadd.xlane.f32.xlu0 %v1673
        %v1675 = vpop.xlane.xlu0 %1674
        %v1676 = vsel %vm428, %v1655, 0.0
        %1677 = vadd.xlane.f32.xlu0 %v1676
        %v1678 = vpop.xlane.xlu0 %1677
        %v1679 = vsel %vm428, %v1657, 0.0
        %1680 = vadd.xlane.f32.xlu0 %v1679
        %v1681 = vpop.xlane.xlu0 %1680
        %v1682 = vrcp.pop %v1660
        %v1683 = vrcp.pop %v1663
        %v1684 = vrcp.pop %v1666
        %v1685 = vrcp.pop %v1669
        %v1686 = vrcp.pop %v1672
        %v1687 = vrcp.pop %v1675
        %v1688 = vrcp.pop %v1678
        %v1689 = vrcp.pop %v1681
        %v1690 = vmul.f32 %v1643, %v1682
        %v1691 = vmul.f32 %v1645, %v1683
        %v1692 = vmul.f32 %v1647, %v1684
        %v1693 = vmul.f32 %v1649, %v1685
        %v1694 = vmul.f32 %v1651, %v1686
        %v1695 = vmul.f32 %v1653, %v1687
        %v1696 = vmul.f32 %v1655, %v1688
        %v1697 = vmul.f32 %v1657, %v1689
        %1698 = vrot.lane.b32.xlu0 %v385, 48
        %v1699 = vpop.permute.xlu0 %1698
        %1700 = vrot.lane.b32.xlu0 %v388, 48
        %v1701 = vpop.permute.xlu0 %1700
        %v1705 = vsel %vm428, %v1690, 0
        %v1708 = vsel %vm428, %v1691, 0
        %1710 = vmatpush.msra.mxu0 0.0
        %1711 = vmatpush.msra.mxu0 0.0
        %1712 = vmatpush.msra.mxu0 0.0
        %1713 = vmatpush.msra.mxu0 0.0
        %1714 = vmatpush.msra.mxu0 0.0
        %1715 = vmatpush.msra.mxu0 0.0
        %1716 = vmatpush.msra.mxu0 0.0
        %1717 = vmatpush.msra.mxu0 0.0
        %1718 = vmatpush.msra.mxu0 0.0
        %1719 = vmatpush.msra.mxu0 0.0
        %1720 = vmatpush.msra.mxu0 0.0
        %1721 = vmatpush.msra.mxu0 0.0
        %1722 = vmatpush.msra.mxu0 0.0
        %1723 = vmatpush.msra.mxu0 0.0
        %1724 = vmatpush.msra.mxu0 %v1701
        %1725 = vmatpush.msra.mxu0 %v1699
        %1726 = vmatmul.f32.gmra.mxu0 %v1705
        %v1727 = vpop.f32.mrf.mxu0
        %v1728 = vadd.f32 0.0, %v1727
        %1729 = vmatmul.f32.gmra.mxu0 %v1708
        %v1730 = vpop.f32.mrf.mxu0
        %v1731 = vadd.f32 0.0, %v1730
        %1732 = vdwg.mxu0
        %1733 = vrot.lane.b32.xlu0 %v391, 48
        %v1734 = vpop.permute.xlu0 %1733
        %1735 = vrot.lane.b32.xlu0 %v394, 48
        %v1736 = vpop.permute.xlu0 %1735
        %v1740 = vsel %vm428, %v1692, 0
        %v1743 = vsel %vm428, %v1693, 0
        %1745 = vmatpush.msra.mxu0 0.0
        %1746 = vmatpush.msra.mxu0 0.0
        %1747 = vmatpush.msra.mxu0 0.0
        %1748 = vmatpush.msra.mxu0 0.0
        %1749 = vmatpush.msra.mxu0 0.0
        %1750 = vmatpush.msra.mxu0 0.0
        %1751 = vmatpush.msra.mxu0 0.0
        %1752 = vmatpush.msra.mxu0 0.0
        %1753 = vmatpush.msra.mxu0 0.0
        %1754 = vmatpush.msra.mxu0 0.0
        %1755 = vmatpush.msra.mxu0 0.0
        %1756 = vmatpush.msra.mxu0 0.0
        %1757 = vmatpush.msra.mxu0 0.0
        %1758 = vmatpush.msra.mxu0 0.0
        %1759 = vmatpush.msra.mxu0 %v1736
        %1760 = vmatpush.msra.mxu0 %v1734
        %1761 = vmatmul.f32.gmra.mxu0 %v1740
        %v1762 = vpop.f32.mrf.mxu0
        %v1763 = vadd.f32 0.0, %v1762
        %1764 = vmatmul.f32.gmra.mxu0 %v1743
        %v1765 = vpop.f32.mrf.mxu0
        %v1766 = vadd.f32 0.0, %v1765
        %1767 = vdwg.mxu0
        %1768 = vrot.lane.b32.xlu0 %v397, 48
        %v1769 = vpop.permute.xlu0 %1768
        %1770 = vrot.lane.b32.xlu0 %v400, 48
        %v1771 = vpop.permute.xlu0 %1770
        %v1775 = vsel %vm428, %v1694, 0
        %v1778 = vsel %vm428, %v1695, 0
        %1780 = vmatpush.msra.mxu0 0.0
        %1781 = vmatpush.msra.mxu0 0.0
        %1782 = vmatpush.msra.mxu0 0.0
        %1783 = vmatpush.msra.mxu0 0.0
        %1784 = vmatpush.msra.mxu0 0.0
        %1785 = vmatpush.msra.mxu0 0.0
        %1786 = vmatpush.msra.mxu0 0.0
        %1787 = vmatpush.msra.mxu0 0.0
        %1788 = vmatpush.msra.mxu0 0.0
        %1789 = vmatpush.msra.mxu0 0.0
        %1790 = vmatpush.msra.mxu0 0.0
        %1791 = vmatpush.msra.mxu0 0.0
        %1792 = vmatpush.msra.mxu0 0.0
        %1793 = vmatpush.msra.mxu0 0.0
        %1794 = vmatpush.msra.mxu0 %v1771
        %1795 = vmatpush.msra.mxu0 %v1769
        %1796 = vmatmul.f32.gmra.mxu0 %v1775
        %v1797 = vpop.f32.mrf.mxu0
        %v1798 = vadd.f32 0.0, %v1797
        %1799 = vmatmul.f32.gmra.mxu0 %v1778
        %v1800 = vpop.f32.mrf.mxu0
        %v1801 = vadd.f32 0.0, %v1800
        %1802 = vdwg.mxu0
        %1803 = vrot.lane.b32.xlu0 %v403, 48
        %v1804 = vpop.permute.xlu0 %1803
        %1805 = vrot.lane.b32.xlu0 %v406, 48
        %v1806 = vpop.permute.xlu0 %1805
        %v1810 = vsel %vm428, %v1696, 0
        %v1813 = vsel %vm428, %v1697, 0
        %1815 = vmatpush.msra.mxu0 0.0
        %1816 = vmatpush.msra.mxu0 0.0
        %1817 = vmatpush.msra.mxu0 0.0
        %1818 = vmatpush.msra.mxu0 0.0
        %1819 = vmatpush.msra.mxu0 0.0
        %1820 = vmatpush.msra.mxu0 0.0
        %1821 = vmatpush.msra.mxu0 0.0
        %1822 = vmatpush.msra.mxu0 0.0
        %1823 = vmatpush.msra.mxu0 0.0
        %1824 = vmatpush.msra.mxu0 0.0
        %1825 = vmatpush.msra.mxu0 0.0
        %1826 = vmatpush.msra.mxu0 0.0
        %1827 = vmatpush.msra.mxu0 0.0
        %1828 = vmatpush.msra.mxu0 0.0
        %1829 = vmatpush.msra.mxu0 %v1806
        %1830 = vmatpush.msra.mxu0 %v1804
        %1831 = vmatmul.f32.gmra.mxu0 %v1810
        %v1832 = vpop.f32.mrf.mxu0
        %v1833 = vadd.f32 0.0, %v1832
        %1834 = vmatmul.f32.gmra.mxu0 %v1813
        %v1835 = vpop.f32.mrf.mxu0
        %v1836 = vadd.f32 0.0, %v1835
        %1837 = vdwg.mxu0
        %v1839 = vsel %vm428, %v1728, 0
        %v1842 = vsel %vm428, %v1731, 0
        %v1845 = vsel %vm428, %v1763, 0
        %v1848 = vsel %vm428, %v1766, 0
        %v1851 = vsel %vm428, %v1798, 0
        %v1854 = vsel %vm428, %v1801, 0
        %v1857 = vsel %vm428, %v1833, 0
        %v1860 = vsel %vm428, %v1836, 0
        %1862 = vmatpush.msra.mxu0 0.0
        %1863 = vmatpush.msra.mxu0 0.0
        %1864 = vmatpush.msra.mxu0 0.0
        %1865 = vmatpush.msra.mxu0 0.0
        %1866 = vmatpush.msra.mxu0 0.0
        %1867 = vmatpush.msra.mxu0 0.0
        %1868 = vmatpush.msra.mxu0 0.0
        %1869 = vmatpush.msra.mxu0 0.0
        %1870 = vmatpush.msra.mxu0 0.0
        %1871 = vmatpush.msra.mxu0 0.0
        %1872 = vmatpush.msra.mxu0 0.0
        %1873 = vmatpush.msra.mxu0 0.0
        %1874 = vmatpush.msra.mxu0 0.0
        %1875 = vmatpush.msra.mxu0 0.0
        %1876 = vmatpush.msra.mxu0 %v419
        %1877 = vmatpush.msra.mxu0 %v418
        %1878 = vmatmul.f32.gmra.mxu0 %v1839
        %v1879 = vpop.f32.mrf.mxu0
        %v1880 = vadd.f32 0.0, %v1879
        %1881 = vmatmul.f32.gmra.mxu0 %v1842
        %v1882 = vpop.f32.mrf.mxu0
        %v1883 = vadd.f32 0.0, %v1882
        %1884 = vmatmul.f32.gmra.mxu0 %v1845
        %v1885 = vpop.f32.mrf.mxu0
        %v1886 = vadd.f32 0.0, %v1885
        %1887 = vmatmul.f32.gmra.mxu0 %v1848
        %v1888 = vpop.f32.mrf.mxu0
        %v1889 = vadd.f32 0.0, %v1888
        %1890 = vmatmul.f32.gmra.mxu0 %v1851
        %v1891 = vpop.f32.mrf.mxu0
        %v1892 = vadd.f32 0.0, %v1891
        %1893 = vmatmul.f32.gmra.mxu0 %v1854
        %v1894 = vpop.f32.mrf.mxu0
        %v1895 = vadd.f32 0.0, %v1894
        %1896 = vmatmul.f32.gmra.mxu0 %v1857
        %v1897 = vpop.f32.mrf.mxu0
        %v1898 = vadd.f32 0.0, %v1897
        %1899 = vmatmul.f32.gmra.mxu0 %v1860
        %v1900 = vpop.f32.mrf.mxu0
        %v1901 = vadd.f32 0.0, %v1900
        %1902 = vdwg.mxu0
        %v1904 = vsel %vm428, %v1005, 0
        %v1907 = vsel %vm428, %v1008, 0
        %v1910 = vsel %vm428, %v1042, 0
        %v1913 = vsel %vm428, %v1045, 0
        %v1916 = vsel %vm428, %v1079, 0
        %v1919 = vsel %vm428, %v1082, 0
        %v1922 = vsel %vm428, %v1116, 0
        %v1925 = vsel %vm428, %v1119, 0
        %1927 = vmatpush.msra.mxu0 0.0
        %1928 = vmatpush.msra.mxu0 0.0
        %1929 = vmatpush.msra.mxu0 0.0
        %1930 = vmatpush.msra.mxu0 0.0
        %1931 = vmatpush.msra.mxu0 0.0
        %1932 = vmatpush.msra.mxu0 0.0
        %1933 = vmatpush.msra.mxu0 0.0
        %1934 = vmatpush.msra.mxu0 0.0
        %1935 = vmatpush.msra.mxu0 0.0
        %1936 = vmatpush.msra.mxu0 0.0
        %1937 = vmatpush.msra.mxu0 0.0
        %1938 = vmatpush.msra.mxu0 0.0
        %1939 = vmatpush.msra.mxu0 0.0
        %1940 = vmatpush.msra.mxu0 0.0
        %1941 = vmatpush.msra.mxu0 %v417
        %1942 = vmatpush.msra.mxu0 %v416
        %1943 = vmatmul.f32.gmra.mxu0 %v1904
        %v1944 = vpop.f32.mrf.mxu0
        %v1945 = vadd.f32 %v1880, %v1944
        %1946 = vmatmul.f32.gmra.mxu0 %v1907
        %v1947 = vpop.f32.mrf.mxu0
        %v1948 = vadd.f32 %v1883, %v1947
        %1949 = vmatmul.f32.gmra.mxu0 %v1910
        %v1950 = vpop.f32.mrf.mxu0
        %v1951 = vadd.f32 %v1886, %v1950
        %1952 = vmatmul.f32.gmra.mxu0 %v1913
        %v1953 = vpop.f32.mrf.mxu0
        %v1954 = vadd.f32 %v1889, %v1953
        %1955 = vmatmul.f32.gmra.mxu0 %v1916
        %v1956 = vpop.f32.mrf.mxu0
        %v1957 = vadd.f32 %v1892, %v1956
        %1958 = vmatmul.f32.gmra.mxu0 %v1919
        %v1959 = vpop.f32.mrf.mxu0
        %v1960 = vadd.f32 %v1895, %v1959
        %1961 = vmatmul.f32.gmra.mxu0 %v1922
        %v1962 = vpop.f32.mrf.mxu0
        %v1963 = vadd.f32 %v1898, %v1962
        %1964 = vmatmul.f32.gmra.mxu0 %v1925
        %v1965 = vpop.f32.mrf.mxu0
        %v1966 = vadd.f32 %v1901, %v1965
        %1967 = vdwg.mxu0
        %v1968 = vld [vmem:[%s7] sm:$0x1]
        %v1970 = vperm.slane %v1968, 0
        %v1972 = vadd.f32 %v1945, %v1970
        %v1973 = vadd.f32 %v1948, %v1970
        %v1974 = vadd.f32 %v1951, %v1970
        %v1975 = vadd.f32 %v1954, %v1970
        %v1976 = vadd.f32 %v1957, %v1970
        %v1977 = vadd.f32 %v1960, %v1970
        %v1978 = vadd.f32 %v1963, %v1970
        %v1979 = vadd.f32 %v1966, %v1970
        %1980 = vst.msk [vmem:[%s324] sm:$0xff] %vm342, %v1972
        %1981 = vst.msk [vmem:[%s324 + $0x8] sm:$0xff] %vm342, %v1973
        %1982 = vst.msk [vmem:[%s324 + $0x10] sm:$0xff] %vm342, %v1974
        %1983 = vst.msk [vmem:[%s324 + $0x18] sm:$0xff] %vm342, %v1975
        %1984 = vst.msk [vmem:[%s324 + $0x20] sm:$0xff] %vm342, %v1976
        %1985 = vst.msk [vmem:[%s324 + $0x28] sm:$0xff] %vm342, %v1977
        %1986 = vst.msk [vmem:[%s324 + $0x30] sm:$0xff] %vm342, %v1978
        %1987 = vst.msk [vmem:[%s324 + $0x38] sm:$0xff] %vm342, %v1979
        %s1988 = smul.u32 8, %s20
        %p1989 = scmp.lt.s32.totalorder %s1988, 15
        %s1990 = scalar_select %p1989, %s1988, 15
        %s1991 = smul.addr %s1990, 8
        %s1992 = scalar_lea.vmem %s8, %s1991
        // Predicated region
        $region57: #{fwd.6} parent=51 // pred_check
          %p1993 = pneg %p211
        $region58: #{fwd.6} parent=51 // pred_check_branch
          %1995 = sbr.rel (%p1993) target = $region60
        $region59: #{fwd.6} parent=51 // pred_region
          %s1996 = smul.u32 8, %s20
        $region60: #{fwd.6} parent=51 // pred_fallthru
          _
      $region52: #{fwd.6} parent=5 // pred_fallthru
        _
      %p1997 = scmp.le.s32.totalorder 2, %s15
      // Predicated region
      $region61: #{fwd.6} parent=5 // pred_check
        %p1998 = pneg %p1997
      $region62: #{fwd.6} parent=5 // pred_check_branch
        %2000 = sbr.rel (%p1998) target = $region64
      $region63: #{fwd.6} parent=5 // pred_region
        %s2001 = ssub.s32 %s15, 2
        // Predicated region
        $region65: #{fwd.6} parent=63 // pred_check
          %p2002 = pneg %p217
        $region66: #{fwd.6} parent=63 // pred_check_branch
          %2004 = sbr.rel (%p2002) target = $region68
        $region67: #{fwd.6} parent=63 // pred_region
          %s2005 = smul.u32 8, %s21
          %p2006 = scmp.lt.s32.totalorder %s2005, 15
          %s2007 = scalar_select %p2006, %s2005, 15
          %s2008 = smul.addr %s2007, 8
          %s2009 = scalar_lea.vmem %s8, %s2008
        $region68: #{fwd.6} parent=63 // pred_fallthru
          _
      $region64: #{fwd.6} parent=5 // pred_fallthru
        _
    $region6: #{fwd.6} parent=1 // loop_footer
      %s19 = sadd.s32 1, %s15
    $region7: #{fwd.6} parent=1 // loop_footer_branch
      %14 = sbr.rel target = $region3
    $region8: #{fwd.6} parent=1 // loop_exit
      _
    %2010 = vsyncpa [#allocation3], 1
    %s2011 = scalar_lea.sflag [#allocation3], 1
    %2012 = vsyncpa %s2011, 1

</llo_original>
